<compile_context>
chip_gen: v7x
topology: tpu7x:2x2x1
jax: 0.10.0
libtpu: 0.0.40
codegen_flags: <defaults>
</compile_context>

<pallas_src>
import functools

import numpy as np
import jax
import jax.numpy as jnp
from jax import lax
from jax.experimental import pallas as pl
from jax.experimental.pallas import tpu as pltpu


def _vin_kernel(x_ref, idx_ref, mr_ref, br_ref, mq_ref, mw_ref, fc_ref,
                logits_ref, probs_ref, *, k):
    """One grid step = NB samples. Layout: samples on lanes, flattened maps on sublanes."""
    HW = mr_ref.shape[0]
    l_q = mq_ref.shape[0] // HW
    nb = x_ref.shape[-1]

    x = x_ref[...]                                                        # (l_i*HW, NB)
    # fused h -> r : r = conv3x3(X, sum_o Wr[o]*Wh[o]) + sum_o Wr[o]*bh[o]
    r = jnp.dot(mr_ref[...], x, preferred_element_type=jnp.float32) + br_ref[...]
    # q_r = conv3x3(r, q.weight); rows indexed c*HW + p                    (l_q*HW, NB)
    q_r = jnp.dot(mq_ref[...], r, preferred_element_type=jnp.float32)

    def chan_max(q):
        """max over channels: elementwise max of the l_q aligned (HW, NB) slabs."""
        v = q[0:HW, :]
        for c in range(1, l_q):
            v = jnp.maximum(v, q[c * HW:(c + 1) * HW, :])
        return v                                                          # (HW, NB)

    v = chan_max(q_r)

    def vi_step(_, v):
        q = q_r + jnp.dot(mw_ref[...], v, preferred_element_type=jnp.float32)
        return chan_max(q)

    v = lax.fori_loop(0, k - 1, vi_step, v, unroll=True)
    q = q_r + jnp.dot(mw_ref[...], v, preferred_element_type=jnp.float32)  # (l_q*HW, NB)

    # gather q at (S1, S2): one-hot over the position (sublane) axis, per lane
    pos = lax.broadcasted_iota(jnp.int32, (HW, nb), 0)
    onehot = (pos == idx_ref[...]).astype(jnp.float32)                     # (HW, NB)
    q_out = jnp.concatenate(
        [jnp.sum(q[c * HW:(c + 1) * HW, :] * onehot, axis=0, keepdims=True)
         for c in range(l_q)], axis=0)                                     # (l_q, NB)

    logits = jnp.dot(fc_ref[...], q_out, preferred_element_type=jnp.float32)  # (n_act, NB)
    m = jnp.max(logits, axis=0, keepdims=True)
    e = jnp.exp(logits - m)
    probs = e / jnp.sum(e, axis=0, keepdims=True)

    logits_ref[...] = logits
    probs_ref[...] = probs


def _tap_pattern(H, W):
    """P[p, p', t] = 1 iff output position p reads input position p' at 3x3 tap t."""
    HW = H * W
    P = np.zeros((HW, HW, 9), np.float32)
    for y in range(H):
        for x in range(W):
            for dy in (-1, 0, 1):
                for dx in (-1, 0, 1):
                    yy, xx = y + dy, x + dx
                    if 0 <= yy < H and 0 <= xx < W:
                        P[y * W + x, yy * W + xx, (dy + 1) * 3 + (dx + 1)] = 1.0
    return P


def vin_forward_pallas(X, S1, S2, params, *, k, block_n=128):
    N, l_i, H, W = (int(d) for d in X.shape)
    HW = H * W
    l_h = int(params["Wh"].shape[0])
    l_q = int(params["Wq"].shape[0])
    n_act = int(params["fc"].shape[0])

    # ---- batching: NB samples per grid step (samples on the lane axis) ----
    if N > block_n:
        NB = -(-block_n // 128) * 128        # lane-aligned blocks when grid > 1 step
    else:
        NB = N                               # single block == full array, any N ok
    Npad = -(-N // NB) * NB

    # ---- layout conversion: channel-major flatten, batch last (on lanes) ----
    xt = jnp.transpose(X.astype(jnp.float32), (1, 2, 3, 0)).reshape(l_i * HW, N)
    idx = (S1.astype(jnp.int32) * W + S2.astype(jnp.int32)).reshape(1, N)
    if Npad != N:
        xt = jnp.pad(xt, ((0, 0), (0, Npad - N)))
        idx = jnp.pad(idx, ((0, 0), (0, Npad - N)))

    # ---- weight-derived dense conv operators (built once, input independent) ----
    hi = lax.Precision.HIGHEST
    P = jnp.asarray(_tap_pattern(H, W))                    # (HW, HW, 9), 0/1

    def conv_mat(w):                                       # (cout,cin,3,3) -> (cout*HW, cin*HW)
        cout, cin = int(w.shape[0]), int(w.shape[1])
        wf = w.astype(jnp.float32).reshape(cout, cin, 9)
        M = jnp.einsum("pqt,oit->opiq", P, wf, precision=hi)
        return M.reshape(cout * HW, cin * HW)

    wr_vec = params["Wr"].astype(jnp.float32).reshape(l_h)
    w_comb = jnp.einsum("o,oikl->ikl", wr_vec, params["Wh"].astype(jnp.float32),
                        precision=hi)[None]                # (1, l_i, 3, 3)
    m_r = conv_mat(w_comb)                                 # (HW, l_i*HW)  fused h->r conv
    br = jnp.sum(wr_vec * params["bh"].astype(jnp.float32)).reshape(1, 1)
    m_q = conv_mat(params["Wq"])                           # (l_q*HW, HW)
    m_w = conv_mat(params["Wvin"])                         # (l_q*HW, HW)
    fc = params["fc"].astype(jnp.float32)                  # (n_act, l_q)

    grid = (Npad // NB,)
    rep = lambda shape: pl.BlockSpec(shape, lambda g: (0,) * len(shape))

    grid_spec = pltpu.PrefetchScalarGridSpec(
        num_scalar_prefetch=0,
        grid=grid,
        in_specs=[
            pl.BlockSpec((l_i * HW, NB), lambda g: (0, g)),   # X block (samples on lanes)
            pl.BlockSpec((1, NB), lambda g: (0, g)),          # gather indices S1*W+S2
            rep((HW, l_i * HW)),                              # fused h->r conv matrix
            rep((1, 1)),                                      # fused r bias (scalar)
            rep((l_q * HW, HW)),                              # q.weight conv matrix
            rep((l_q * HW, HW)),                              # self.w conv matrix (VI loop)
            rep((n_act, l_q)),                                # fc weight
        ],
        out_specs=(
            pl.BlockSpec((n_act, NB), lambda g: (0, g)),
            pl.BlockSpec((n_act, NB), lambda g: (0, g)),
        ),
    )

    logits_t, probs_t = pl.pallas_call(
        functools.partial(_vin_kernel, k=k),
        out_shape=(jax.ShapeDtypeStruct((n_act, Npad), jnp.float32),
                   jax.ShapeDtypeStruct((n_act, Npad), jnp.float32)),
        grid_spec=grid_spec,
        compiler_params=pltpu.CompilerParams(dimension_semantics=("parallel",)),
    )(xt, idx, m_r, br, m_q, m_w, fc)

    # back to the PyTorch (N, n_act) layout; drop padded lanes
    return logits_t[:, :N].T, probs_t[:, :N].T


def vin_forward_reference(X, S1, S2, params, *, k):
    """Pure-JAX (XLA) reference mirroring the PyTorch forward exactly."""
    hi = lax.Precision.HIGHEST

    def conv(x, w, p):
        return lax.conv_general_dilated(
            x, w, window_strides=(1, 1), padding=[(p, p), (p, p)],
            dimension_numbers=("NCHW", "OIHW", "NCHW"), precision=hi)

    h = conv(X, params["Wh"], 1) + params["bh"][None, :, None, None]
    r = conv(h, params["Wr"], 0)
    q = conv(r, params["Wq"], 1)
    v = jnp.max(q, axis=1, keepdims=True)
    wcat = jnp.concatenate([params["Wq"], params["Wvin"]], axis=1)
    for _ in range(k - 1):
        q = conv(jnp.concatenate([r, v], axis=1), wcat, 1)
        v = jnp.max(q, axis=1, keepdims=True)
    q = conv(jnp.concatenate([r, v], axis=1), wcat, 1)
    N, l_q = q.shape[0], q.shape[1]
    qo = q[jnp.arange(N)[:, None], jnp.arange(l_q)[None, :], S1[:, None], S2[:, None]]
    logits = jnp.matmul(qo, params["fc"].T, precision=hi)
    probs = jax.nn.softmax(logits, axis=1)
    return logits, probs


if __name__ == "__main__":
    # VIN config (small): l_i input channels, l_h hidden, l_q q-channels, k iters
    l_i, l_h, l_q, imsize, k = 2, 16, 8, 8, 5
    N = 200   # exercises NB=128 lane blocking, a 2-step grid and lane padding

    key = jax.random.PRNGKey(0)
    ks = jax.random.split(key, 8)
    # Deterministic synthetic parameters (shapes from VIN.__init__).
    # NOTE: self.w is zeros in __init__; a random deterministic init is used here
    # so the value-iteration path is exercised numerically.
    params = {
        "Wh":   0.3 * jax.random.normal(ks[0], (l_h, l_i, 3, 3), jnp.float32),
        "bh":   0.1 * jax.random.normal(ks[1], (l_h,), jnp.float32),
        "Wr":   0.3 * jax.random.normal(ks[2], (1, l_h, 1, 1), jnp.float32),
        "Wq":   0.3 * jax.random.normal(ks[3], (l_q, 1, 3, 3), jnp.float32),
        "Wvin": 0.3 * jax.random.normal(ks[4], (l_q, 1, 3, 3), jnp.float32),
        "fc":   0.3 * jax.random.normal(ks[5], (8, l_q), jnp.float32),
    }

    X = jax.random.normal(ks[6], (N, l_i, imsize, imsize), jnp.float32)
    S1 = jax.random.randint(ks[7], (N,), 0, imsize, jnp.int32)
    S2 = jax.random.randint(jax.random.fold_in(key, 99), (N,), 0, imsize, jnp.int32)

    logits, probs = vin_forward_pallas(X, S1, S2, params, k=k)
    jax.block_until_ready((logits, probs))

    ref_logits, ref_probs = vin_forward_reference(X, S1, S2, params, k=k)
    np.testing.assert_allclose(np.asarray(logits), np.asarray(ref_logits), rtol=1e-3, atol=1e-3)
    np.testing.assert_allclose(np.asarray(probs), np.asarray(ref_probs), rtol=1e-3, atol=1e-3)

    print("KERNEL_OK")
</pallas_src>

<mosaic_0001>
module attributes {stable_mosaic.version = 11 : i64} {
  func.func @_vin_kernel(%arg0: i32, %arg1: memref<128x128xf32, #tpu.memory_space<vmem>>, %arg2: memref<1x128xi32, #tpu.memory_space<vmem>>, %arg3: memref<64x128xf32, #tpu.memory_space<vmem>>, %arg4: memref<1x1xf32, #tpu.memory_space<vmem>>, %arg5: memref<512x64xf32, #tpu.memory_space<vmem>>, %arg6: memref<512x64xf32, #tpu.memory_space<vmem>>, %arg7: memref<8x8xf32, #tpu.memory_space<vmem>>, %arg8: memref<8x128xf32, #tpu.memory_space<vmem>>, %arg9: memref<8x128xf32, #tpu.memory_space<vmem>>) attributes {dimension_semantics = [#tpu.dimension_semantics<parallel>], iteration_bounds = array<i64: 2>, scalar_prefetch = 0 : i64, scratch_operands = 0 : i64, tpu.core_type = #tpu.core_type<tc>, window_params = [{transform_indices = @transform_0, window_bounds = array<i64: 128, 128>}, {transform_indices = @transform_1, window_bounds = array<i64: 1, 128>}, {pipeline_mode = #tpu.pipeline_mode<synchronous>, transform_indices = @transform_2, window_bounds = array<i64: 64, 128>}, {pipeline_mode = #tpu.pipeline_mode<synchronous>, transform_indices = @transform_3, window_bounds = array<i64: 1, 1>}, {pipeline_mode = #tpu.pipeline_mode<synchronous>, transform_indices = @transform_4, window_bounds = array<i64: 512, 64>}, {pipeline_mode = #tpu.pipeline_mode<synchronous>, transform_indices = @transform_5, window_bounds = array<i64: 512, 64>}, {pipeline_mode = #tpu.pipeline_mode<synchronous>, transform_indices = @transform_6, window_bounds = array<i64: 8, 8>}, {transform_indices = @transform_7, window_bounds = array<i64: 8, 128>}, {transform_indices = @transform_8, window_bounds = array<i64: 8, 128>}]} {
    %c0 = arith.constant 0 : index
    %c0_0 = arith.constant 0 : index
    %0 = vector.load %arg1[%c0, %c0_0] : memref<128x128xf32, #tpu.memory_space<vmem>>, vector<128x128xf32>
    %c0_1 = arith.constant 0 : index
    %c0_2 = arith.constant 0 : index
    %1 = vector.load %arg3[%c0_1, %c0_2] : memref<64x128xf32, #tpu.memory_space<vmem>>, vector<64x128xf32>
    %cst = arith.constant dense<0.000000e+00> : vector<64x128xf32>
    %2 = tpu.matmul %1, %0, %cst {dimension_numbers = #tpu.dot_dimension_numbers<[1], [0], [0], [1], [0, 0, 1, 1], [], []>} : vector<64x128xf32>, vector<128x128xf32>, vector<64x128xf32> -> vector<64x128xf32>
    %c0_3 = arith.constant 0 : index
    %c0_4 = arith.constant 0 : index
    %3 = vector.load %arg4[%c0_3, %c0_4] : memref<1x1xf32, #tpu.memory_space<vmem>>, vector<1x1xf32>
    %4 = vector.broadcast %3 : vector<1x1xf32> to vector<64x128xf32>
    %5 = arith.addf %2, %4 : vector<64x128xf32>
    %c0_5 = arith.constant 0 : index
    %c0_6 = arith.constant 0 : index
    %6 = vector.load %arg5[%c0_5, %c0_6] : memref<512x64xf32, #tpu.memory_space<vmem>>, vector<512x64xf32>
    %cst_7 = arith.constant dense<0.000000e+00> : vector<512x128xf32>
    %7 = tpu.matmul %6, %5, %cst_7 {dimension_numbers = #tpu.dot_dimension_numbers<[1], [0], [0], [1], [0, 0, 1, 1], [], []>} : vector<512x64xf32>, vector<64x128xf32>, vector<512x128xf32> -> vector<512x128xf32>
    %8 = vector.extract_strided_slice %7 {offsets = [0, 0], sizes = [64, 128], strides = [1, 1]} : vector<512x128xf32> to vector<64x128xf32>
    %9 = vector.extract_strided_slice %7 {offsets = [64, 0], sizes = [64, 128], strides = [1, 1]} : vector<512x128xf32> to vector<64x128xf32>
    %10 = arith.maximumf %8, %9 : vector<64x128xf32>
    %11 = vector.extract_strided_slice %7 {offsets = [128, 0], sizes = [64, 128], strides = [1, 1]} : vector<512x128xf32> to vector<64x128xf32>
    %12 = arith.maximumf %10, %11 : vector<64x128xf32>
    %13 = vector.extract_strided_slice %7 {offsets = [192, 0], sizes = [64, 128], strides = [1, 1]} : vector<512x128xf32> to vector<64x128xf32>
    %14 = arith.maximumf %12, %13 : vector<64x128xf32>
    %15 = vector.extract_strided_slice %7 {offsets = [256, 0], sizes = [64, 128], strides = [1, 1]} : vector<512x128xf32> to vector<64x128xf32>
    %16 = arith.maximumf %14, %15 : vector<64x128xf32>
    %17 = vector.extract_strided_slice %7 {offsets = [320, 0], sizes = [64, 128], strides = [1, 1]} : vector<512x128xf32> to vector<64x128xf32>
    %18 = arith.maximumf %16, %17 : vector<64x128xf32>
    %19 = vector.extract_strided_slice %7 {offsets = [384, 0], sizes = [64, 128], strides = [1, 1]} : vector<512x128xf32> to vector<64x128xf32>
    %20 = arith.maximumf %18, %19 : vector<64x128xf32>
    %21 = vector.extract_strided_slice %7 {offsets = [448, 0], sizes = [64, 128], strides = [1, 1]} : vector<512x128xf32> to vector<64x128xf32>
    %22 = arith.maximumf %20, %21 : vector<64x128xf32>
    %c0_i32 = arith.constant 0 : i32
    %c0_8 = arith.constant 0 : index
    %c0_9 = arith.constant 0 : index
    %23 = vector.load %arg6[%c0_8, %c0_9] : memref<512x64xf32, #tpu.memory_space<vmem>>, vector<512x64xf32>
    %cst_10 = arith.constant dense<0.000000e+00> : vector<512x128xf32>
    %24 = tpu.matmul %23, %22, %cst_10 {dimension_numbers = #tpu.dot_dimension_numbers<[1], [0], [0], [1], [0, 0, 1, 1], [], []>} : vector<512x64xf32>, vector<64x128xf32>, vector<512x128xf32> -> vector<512x128xf32>
    %25 = arith.addf %7, %24 : vector<512x128xf32>
    %26 = vector.extract_strided_slice %25 {offsets = [0, 0], sizes = [64, 128], strides = [1, 1]} : vector<512x128xf32> to vector<64x128xf32>
    %27 = vector.extract_strided_slice %25 {offsets = [64, 0], sizes = [64, 128], strides = [1, 1]} : vector<512x128xf32> to vector<64x128xf32>
    %28 = arith.maximumf %26, %27 : vector<64x128xf32>
    %29 = vector.extract_strided_slice %25 {offsets = [128, 0], sizes = [64, 128], strides = [1, 1]} : vector<512x128xf32> to vector<64x128xf32>
    %30 = arith.maximumf %28, %29 : vector<64x128xf32>
    %31 = vector.extract_strided_slice %25 {offsets = [192, 0], sizes = [64, 128], strides = [1, 1]} : vector<512x128xf32> to vector<64x128xf32>
    %32 = arith.maximumf %30, %31 : vector<64x128xf32>
    %33 = vector.extract_strided_slice %25 {offsets = [256, 0], sizes = [64, 128], strides = [1, 1]} : vector<512x128xf32> to vector<64x128xf32>
    %34 = arith.maximumf %32, %33 : vector<64x128xf32>
    %35 = vector.extract_strided_slice %25 {offsets = [320, 0], sizes = [64, 128], strides = [1, 1]} : vector<512x128xf32> to vector<64x128xf32>
    %36 = arith.maximumf %34, %35 : vector<64x128xf32>
    %37 = vector.extract_strided_slice %25 {offsets = [384, 0], sizes = [64, 128], strides = [1, 1]} : vector<512x128xf32> to vector<64x128xf32>
    %38 = arith.maximumf %36, %37 : vector<64x128xf32>
    %39 = vector.extract_strided_slice %25 {offsets = [448, 0], sizes = [64, 128], strides = [1, 1]} : vector<512x128xf32> to vector<64x128xf32>
    %40 = arith.maximumf %38, %39 : vector<64x128xf32>
    %c1_i32 = arith.constant 1 : i32
    %c0_11 = arith.constant 0 : index
    %c0_12 = arith.constant 0 : index
    %41 = vector.load %arg6[%c0_11, %c0_12] : memref<512x64xf32, #tpu.memory_space<vmem>>, vector<512x64xf32>
    %cst_13 = arith.constant dense<0.000000e+00> : vector<512x128xf32>
    %42 = tpu.matmul %41, %40, %cst_13 {dimension_numbers = #tpu.dot_dimension_numbers<[1], [0], [0], [1], [0, 0, 1, 1], [], []>} : vector<512x64xf32>, vector<64x128xf32>, vector<512x128xf32> -> vector<512x128xf32>
    %43 = arith.addf %7, %42 : vector<512x128xf32>
    %44 = vector.extract_strided_slice %43 {offsets = [0, 0], sizes = [64, 128], strides = [1, 1]} : vector<512x128xf32> to vector<64x128xf32>
    %45 = vector.extract_strided_slice %43 {offsets = [64, 0], sizes = [64, 128], strides = [1, 1]} : vector<512x128xf32> to vector<64x128xf32>
    %46 = arith.maximumf %44, %45 : vector<64x128xf32>
    %47 = vector.extract_strided_slice %43 {offsets = [128, 0], sizes = [64, 128], strides = [1, 1]} : vector<512x128xf32> to vector<64x128xf32>
    %48 = arith.maximumf %46, %47 : vector<64x128xf32>
    %49 = vector.extract_strided_slice %43 {offsets = [192, 0], sizes = [64, 128], strides = [1, 1]} : vector<512x128xf32> to vector<64x128xf32>
    %50 = arith.maximumf %48, %49 : vector<64x128xf32>
    %51 = vector.extract_strided_slice %43 {offsets = [256, 0], sizes = [64, 128], strides = [1, 1]} : vector<512x128xf32> to vector<64x128xf32>
    %52 = arith.maximumf %50, %51 : vector<64x128xf32>
    %53 = vector.extract_strided_slice %43 {offsets = [320, 0], sizes = [64, 128], strides = [1, 1]} : vector<512x128xf32> to vector<64x128xf32>
    %54 = arith.maximumf %52, %53 : vector<64x128xf32>
    %55 = vector.extract_strided_slice %43 {offsets = [384, 0], sizes = [64, 128], strides = [1, 1]} : vector<512x128xf32> to vector<64x128xf32>
    %56 = arith.maximumf %54, %55 : vector<64x128xf32>
    %57 = vector.extract_strided_slice %43 {offsets = [448, 0], sizes = [64, 128], strides = [1, 1]} : vector<512x128xf32> to vector<64x128xf32>
    %58 = arith.maximumf %56, %57 : vector<64x128xf32>
    %c2_i32 = arith.constant 2 : i32
    %c0_14 = arith.constant 0 : index
    %c0_15 = arith.constant 0 : index
    %59 = vector.load %arg6[%c0_14, %c0_15] : memref<512x64xf32, #tpu.memory_space<vmem>>, vector<512x64xf32>
    %cst_16 = arith.constant dense<0.000000e+00> : vector<512x128xf32>
    %60 = tpu.matmul %59, %58, %cst_16 {dimension_numbers = #tpu.dot_dimension_numbers<[1], [0], [0], [1], [0, 0, 1, 1], [], []>} : vector<512x64xf32>, vector<64x128xf32>, vector<512x128xf32> -> vector<512x128xf32>
    %61 = arith.addf %7, %60 : vector<512x128xf32>
    %62 = vector.extract_strided_slice %61 {offsets = [0, 0], sizes = [64, 128], strides = [1, 1]} : vector<512x128xf32> to vector<64x128xf32>
    %63 = vector.extract_strided_slice %61 {offsets = [64, 0], sizes = [64, 128], strides = [1, 1]} : vector<512x128xf32> to vector<64x128xf32>
    %64 = arith.maximumf %62, %63 : vector<64x128xf32>
    %65 = vector.extract_strided_slice %61 {offsets = [128, 0], sizes = [64, 128], strides = [1, 1]} : vector<512x128xf32> to vector<64x128xf32>
    %66 = arith.maximumf %64, %65 : vector<64x128xf32>
    %67 = vector.extract_strided_slice %61 {offsets = [192, 0], sizes = [64, 128], strides = [1, 1]} : vector<512x128xf32> to vector<64x128xf32>
    %68 = arith.maximumf %66, %67 : vector<64x128xf32>
    %69 = vector.extract_strided_slice %61 {offsets = [256, 0], sizes = [64, 128], strides = [1, 1]} : vector<512x128xf32> to vector<64x128xf32>
    %70 = arith.maximumf %68, %69 : vector<64x128xf32>
    %71 = vector.extract_strided_slice %61 {offsets = [320, 0], sizes = [64, 128], strides = [1, 1]} : vector<512x128xf32> to vector<64x128xf32>
    %72 = arith.maximumf %70, %71 : vector<64x128xf32>
    %73 = vector.extract_strided_slice %61 {offsets = [384, 0], sizes = [64, 128], strides = [1, 1]} : vector<512x128xf32> to vector<64x128xf32>
    %74 = arith.maximumf %72, %73 : vector<64x128xf32>
    %75 = vector.extract_strided_slice %61 {offsets = [448, 0], sizes = [64, 128], strides = [1, 1]} : vector<512x128xf32> to vector<64x128xf32>
    %76 = arith.maximumf %74, %75 : vector<64x128xf32>
    %c3_i32 = arith.constant 3 : i32
    %c0_17 = arith.constant 0 : index
    %c0_18 = arith.constant 0 : index
    %77 = vector.load %arg6[%c0_17, %c0_18] : memref<512x64xf32, #tpu.memory_space<vmem>>, vector<512x64xf32>
    %cst_19 = arith.constant dense<0.000000e+00> : vector<512x128xf32>
    %78 = tpu.matmul %77, %76, %cst_19 {dimension_numbers = #tpu.dot_dimension_numbers<[1], [0], [0], [1], [0, 0, 1, 1], [], []>} : vector<512x64xf32>, vector<64x128xf32>, vector<512x128xf32> -> vector<512x128xf32>
    %79 = arith.addf %7, %78 : vector<512x128xf32>
    %80 = vector.extract_strided_slice %79 {offsets = [0, 0], sizes = [64, 128], strides = [1, 1]} : vector<512x128xf32> to vector<64x128xf32>
    %81 = vector.extract_strided_slice %79 {offsets = [64, 0], sizes = [64, 128], strides = [1, 1]} : vector<512x128xf32> to vector<64x128xf32>
    %82 = arith.maximumf %80, %81 : vector<64x128xf32>
    %83 = vector.extract_strided_slice %79 {offsets = [128, 0], sizes = [64, 128], strides = [1, 1]} : vector<512x128xf32> to vector<64x128xf32>
    %84 = arith.maximumf %82, %83 : vector<64x128xf32>
    %85 = vector.extract_strided_slice %79 {offsets = [192, 0], sizes = [64, 128], strides = [1, 1]} : vector<512x128xf32> to vector<64x128xf32>
    %86 = arith.maximumf %84, %85 : vector<64x128xf32>
    %87 = vector.extract_strided_slice %79 {offsets = [256, 0], sizes = [64, 128], strides = [1, 1]} : vector<512x128xf32> to vector<64x128xf32>
    %88 = arith.maximumf %86, %87 : vector<64x128xf32>
    %89 = vector.extract_strided_slice %79 {offsets = [320, 0], sizes = [64, 128], strides = [1, 1]} : vector<512x128xf32> to vector<64x128xf32>
    %90 = arith.maximumf %88, %89 : vector<64x128xf32>
    %91 = vector.extract_strided_slice %79 {offsets = [384, 0], sizes = [64, 128], strides = [1, 1]} : vector<512x128xf32> to vector<64x128xf32>
    %92 = arith.maximumf %90, %91 : vector<64x128xf32>
    %93 = vector.extract_strided_slice %79 {offsets = [448, 0], sizes = [64, 128], strides = [1, 1]} : vector<512x128xf32> to vector<64x128xf32>
    %94 = arith.maximumf %92, %93 : vector<64x128xf32>
    %c0_20 = arith.constant 0 : index
    %c0_21 = arith.constant 0 : index
    %95 = vector.load %arg6[%c0_20, %c0_21] : memref<512x64xf32, #tpu.memory_space<vmem>>, vector<512x64xf32>
    %cst_22 = arith.constant dense<0.000000e+00> : vector<512x128xf32>
    %96 = tpu.matmul %95, %94, %cst_22 {dimension_numbers = #tpu.dot_dimension_numbers<[1], [0], [0], [1], [0, 0, 1, 1], [], []>} : vector<512x64xf32>, vector<64x128xf32>, vector<512x128xf32> -> vector<512x128xf32>
    %97 = arith.addf %7, %96 : vector<512x128xf32>
    %98 = tpu.iota {dimensions = array<i32: 0>} : vector<64x128xi32>
    %c0_23 = arith.constant 0 : index
    %c0_24 = arith.constant 0 : index
    %99 = vector.load %arg2[%c0_23, %c0_24] : memref<1x128xi32, #tpu.memory_space<vmem>>, vector<1x128xi32>
    %100 = vector.broadcast %99 : vector<1x128xi32> to vector<64x128xi32>
    %101 = arith.cmpi eq, %98, %100 : vector<64x128xi32>
    %102 = arith.extui %101 : vector<64x128xi1> to vector<64x128xi32>
    %103 = arith.sitofp %102 : vector<64x128xi32> to vector<64x128xf32>
    %104 = vector.extract_strided_slice %97 {offsets = [0, 0], sizes = [64, 128], strides = [1, 1]} : vector<512x128xf32> to vector<64x128xf32>
    %105 = arith.mulf %104, %103 : vector<64x128xf32>
    %cst_25 = arith.constant dense<0.000000e+00> : vector<128xf32>
    %106 = vector.multi_reduction <add>, %105, %cst_25 [0] : vector<64x128xf32> to vector<128xf32>
    %107 = vector.shape_cast %106 : vector<128xf32> to vector<1x128xf32>
    %108 = vector.extract_strided_slice %97 {offsets = [64, 0], sizes = [64, 128], strides = [1, 1]} : vector<512x128xf32> to vector<64x128xf32>
    %109 = arith.mulf %108, %103 : vector<64x128xf32>
    %cst_26 = arith.constant dense<0.000000e+00> : vector<128xf32>
    %110 = vector.multi_reduction <add>, %109, %cst_26 [0] : vector<64x128xf32> to vector<128xf32>
    %111 = vector.shape_cast %110 : vector<128xf32> to vector<1x128xf32>
    %112 = vector.extract_strided_slice %97 {offsets = [128, 0], sizes = [64, 128], strides = [1, 1]} : vector<512x128xf32> to vector<64x128xf32>
    %113 = arith.mulf %112, %103 : vector<64x128xf32>
    %cst_27 = arith.constant dense<0.000000e+00> : vector<128xf32>
    %114 = vector.multi_reduction <add>, %113, %cst_27 [0] : vector<64x128xf32> to vector<128xf32>
    %115 = vector.shape_cast %114 : vector<128xf32> to vector<1x128xf32>
    %116 = vector.extract_strided_slice %97 {offsets = [192, 0], sizes = [64, 128], strides = [1, 1]} : vector<512x128xf32> to vector<64x128xf32>
    %117 = arith.mulf %116, %103 : vector<64x128xf32>
    %cst_28 = arith.constant dense<0.000000e+00> : vector<128xf32>
    %118 = vector.multi_reduction <add>, %117, %cst_28 [0] : vector<64x128xf32> to vector<128xf32>
    %119 = vector.shape_cast %118 : vector<128xf32> to vector<1x128xf32>
    %120 = vector.extract_strided_slice %97 {offsets = [256, 0], sizes = [64, 128], strides = [1, 1]} : vector<512x128xf32> to vector<64x128xf32>
    %121 = arith.mulf %120, %103 : vector<64x128xf32>
    %cst_29 = arith.constant dense<0.000000e+00> : vector<128xf32>
    %122 = vector.multi_reduction <add>, %121, %cst_29 [0] : vector<64x128xf32> to vector<128xf32>
    %123 = vector.shape_cast %122 : vector<128xf32> to vector<1x128xf32>
    %124 = vector.extract_strided_slice %97 {offsets = [320, 0], sizes = [64, 128], strides = [1, 1]} : vector<512x128xf32> to vector<64x128xf32>
    %125 = arith.mulf %124, %103 : vector<64x128xf32>
    %cst_30 = arith.constant dense<0.000000e+00> : vector<128xf32>
    %126 = vector.multi_reduction <add>, %125, %cst_30 [0] : vector<64x128xf32> to vector<128xf32>
    %127 = vector.shape_cast %126 : vector<128xf32> to vector<1x128xf32>
    %128 = vector.extract_strided_slice %97 {offsets = [384, 0], sizes = [64, 128], strides = [1, 1]} : vector<512x128xf32> to vector<64x128xf32>
    %129 = arith.mulf %128, %103 : vector<64x128xf32>
    %cst_31 = arith.constant dense<0.000000e+00> : vector<128xf32>
    %130 = vector.multi_reduction <add>, %129, %cst_31 [0] : vector<64x128xf32> to vector<128xf32>
    %131 = vector.shape_cast %130 : vector<128xf32> to vector<1x128xf32>
    %132 = vector.extract_strided_slice %97 {offsets = [448, 0], sizes = [64, 128], strides = [1, 1]} : vector<512x128xf32> to vector<64x128xf32>
    %133 = arith.mulf %132, %103 : vector<64x128xf32>
    %cst_32 = arith.constant dense<0.000000e+00> : vector<128xf32>
    %134 = vector.multi_reduction <add>, %133, %cst_32 [0] : vector<64x128xf32> to vector<128xf32>
    %135 = vector.shape_cast %134 : vector<128xf32> to vector<1x128xf32>
    %136 = tpu.concatenate %107, %111, %115, %119, %123, %127, %131, %135 in 0 : vector<1x128xf32>, vector<1x128xf32>, vector<1x128xf32>, vector<1x128xf32>, vector<1x128xf32>, vector<1x128xf32>, vector<1x128xf32>, vector<1x128xf32> -> vector<8x128xf32>
    %c0_33 = arith.constant 0 : index
    %c0_34 = arith.constant 0 : index
    %137 = vector.load %arg7[%c0_33, %c0_34] : memref<8x8xf32, #tpu.memory_space<vmem>>, vector<8x8xf32>
    %cst_35 = arith.constant dense<0.000000e+00> : vector<8x128xf32>
    %138 = tpu.matmul %137, %136, %cst_35 {dimension_numbers = #tpu.dot_dimension_numbers<[1], [0], [0], [1], [0, 0, 1, 1], [], []>} : vector<8x8xf32>, vector<8x128xf32>, vector<8x128xf32> -> vector<8x128xf32>
    %cst_36 = arith.constant dense<0xFF800000> : vector<128xf32>
    %139 = vector.multi_reduction <maximumf>, %138, %cst_36 [0] : vector<8x128xf32> to vector<128xf32>
    %140 = vector.shape_cast %139 : vector<128xf32> to vector<1x128xf32>
    %141 = vector.broadcast %140 : vector<1x128xf32> to vector<8x128xf32>
    %142 = arith.subf %138, %141 : vector<8x128xf32>
    %143 = math.exp %142 : vector<8x128xf32>
    %cst_37 = arith.constant dense<0.000000e+00> : vector<128xf32>
    %144 = vector.multi_reduction <add>, %143, %cst_37 [0] : vector<8x128xf32> to vector<128xf32>
    %145 = vector.shape_cast %144 : vector<128xf32> to vector<1x128xf32>
    %146 = vector.broadcast %145 : vector<1x128xf32> to vector<8x128xf32>
    %147 = arith.divf %143, %146 : vector<8x128xf32>
    %c0_38 = arith.constant 0 : index
    %c0_39 = arith.constant 0 : index
    %148 = vector.load %arg8[%c0_38, %c0_39] : memref<8x128xf32, #tpu.memory_space<vmem>>, vector<8x128xf32>
    tpu.vector_store %arg8[%c0_38, %c0_39], %138 {strides = array<i32>} : memref<8x128xf32, #tpu.memory_space<vmem>>, vector<8x128xf32>,
    %c0_40 = arith.constant 0 : index
    %c0_41 = arith.constant 0 : index
    %149 = vector.load %arg9[%c0_40, %c0_41] : memref<8x128xf32, #tpu.memory_space<vmem>>, vector<8x128xf32>
    tpu.vector_store %arg9[%c0_40, %c0_41], %147 {strides = array<i32>} : memref<8x128xf32, #tpu.memory_space<vmem>>, vector<8x128xf32>,
    return
  }
  func.func @transform_0(%arg0: i32) -> (i32, i32) {
    %c0_i32 = arith.constant 0 : i32
    %c0_i32_0 = arith.constant 0 : i32
    return %c0_i32, %arg0 : i32, i32
  }
  func.func @transform_1(%arg0: i32) -> (i32, i32) {
    %c0_i32 = arith.constant 0 : i32
    %c0_i32_0 = arith.constant 0 : i32
    return %c0_i32, %arg0 : i32, i32
  }
  func.func @transform_2(%arg0: i32) -> (i32, i32) {
    %c0_i32 = arith.constant 0 : i32
    %c0_i32_0 = arith.constant 0 : i32
    %c0_i32_1 = arith.constant 0 : i32
    return %c0_i32, %c0_i32_0 : i32, i32
  }
  func.func @transform_3(%arg0: i32) -> (i32, i32) {
    %c0_i32 = arith.constant 0 : i32
    %c0_i32_0 = arith.constant 0 : i32
    %c0_i32_1 = arith.constant 0 : i32
    return %c0_i32, %c0_i32_0 : i32, i32
  }
  func.func @transform_4(%arg0: i32) -> (i32, i32) {
    %c0_i32 = arith.constant 0 : i32
    %c0_i32_0 = arith.constant 0 : i32
    %c0_i32_1 = arith.constant 0 : i32
    return %c0_i32, %c0_i32_0 : i32, i32
  }
  func.func @transform_5(%arg0: i32) -> (i32, i32) {
    %c0_i32 = arith.constant 0 : i32
    %c0_i32_0 = arith.constant 0 : i32
    %c0_i32_1 = arith.constant 0 : i32
    return %c0_i32, %c0_i32_0 : i32, i32
  }
  func.func @transform_6(%arg0: i32) -> (i32, i32) {
    %c0_i32 = arith.constant 0 : i32
    %c0_i32_0 = arith.constant 0 : i32
    %c0_i32_1 = arith.constant 0 : i32
    return %c0_i32, %c0_i32_0 : i32, i32
  }
  func.func @transform_7(%arg0: i32) -> (i32, i32) {
    %c0_i32 = arith.constant 0 : i32
    %c0_i32_0 = arith.constant 0 : i32
    return %c0_i32, %arg0 : i32, i32
  }
  func.func @transform_8(%arg0: i32) -> (i32, i32) {
    %c0_i32 = arith.constant 0 : i32
    %c0_i32_0 = arith.constant 0 : i32
    return %c0_i32, %arg0 : i32, i32
  }
}

</mosaic_0001>

<llo_original>
// kernel: tpu_custom_call.1
$region0: #{tpu_custom_call.1}
  #allocation0 [shape = 'u32[]', space=smem, size = 0x4, offset = 0x4, fixed_abs, tag = 'smem constant byte address 0x4 - core index']
  #allocation1 [shape = 'u32[144,128]{1,0:T(1,128)}', space=vmem, size = 0x12000, scoped, tag = 'internal scratch']
  #allocation2 [shape = 'f32[1,1]{1,0:T(1,128)S(1)}', space=vmem, size = 0x200, scoped, tag = 'scoped memory for tpu_custom_call.1']
  %s0 = inlined_call_operand.vmem [shape: f32[128,256], index: 0, kind: input, shape index: {}]
  %s1 = inlined_call_operand.vmem [shape: s32[1,256], index: 1, kind: input, shape index: {}]
  %s2 = inlined_call_operand.vmem [shape: f32[64,128], index: 2, kind: input, shape index: {}]
  %s3 = inlined_call_operand.<no memory space> [shape: f32[1,1], index: 3, kind: input, shape index: {}]
  %s4 = inlined_call_operand.vmem [shape: f32[512,64], index: 4, kind: input, shape index: {}]
  %s5 = inlined_call_operand.vmem [shape: f32[512,64], index: 5, kind: input, shape index: {}]
  %s6 = inlined_call_operand.vmem [shape: f32[8,8], index: 6, kind: input, shape index: {}]
  %s7 = inlined_call_operand.hbm [shape: f32[8,256], index: 7, kind: output, shape index: {0}]
  %s8 = inlined_call_operand.hbm [shape: f32[8,256], index: 8, kind: output, shape index: {1}]
  %9 = xla_tuple %s7, %s8
  %s10 = sld [smem:[#allocation0]]
  $region107: #{tpu_custom_call.1} parent=0
    _
  %s12 = ssub.s32 1, %s10
  %s13 = scalar_select 0, %s12, %s10
  %v14 = vstv %s3
  %15 = vst [vmem:[#allocation2] sm:$0x1] %v14
  $region1: #{tpu_custom_call.1} parent=0
    #allocation3 [shape = 'u8[131072]{0}', space=vmem, size = 0x20000, scoped, tag = 'input window, operand 0']
    #allocation4 [shape = 'u8[8192]{0}', space=vmem, size = 0x2000, scoped, tag = 'output window, operand 0']
    #allocation5 [shape = 's32[2]{0}', space=sflag, size = 0x8, scoped, tag = 'scoped memory for tpu_custom_call.1']
    #allocation6 [shape = 'u8[8192]{0}', space=vmem, size = 0x2000, scoped, tag = 'output window, operand 1']
    #allocation7 [shape = 's32[2]{0}', space=sflag, size = 0x8, scoped, tag = 'scoped memory for tpu_custom_call.1']
    %16 = vsyncpa [#allocation5], 0
    %s17 = scalar_lea.sflag [#allocation5], 1
    %18 = vsyncpa %s17, 0
    %19 = vsyncpa [#allocation7], 0
    %s20 = scalar_lea.sflag [#allocation7], 1
    %21 = vsyncpa %s20, 0
    loop: start=0, step=1, limit=4
    $region2: #{tpu_custom_call.1} parent=1 // loop_pre_header
      _
    $region3: #{tpu_custom_call.1} parent=1 // loop_header
      %s23 = sphi 0, %s27
      %p24 = scmp.ge.s32.totalorder %s23, 4
      %s33 = sphi 0, %s35
      %s36 = sphi 0, %s33
      %s37 = sphi 0, %s36
      %s53 = sphi 0, %s37
      %s59 = sphi 0, %s61
      %s62 = sphi 0, %s59
      %s63 = sphi 0, %s62
      %s79 = sphi 0, %s63
      %s83 = sphi 0, %s83
      %s85 = sphi 0, %s83
      %s86 = sphi 0, %s85
      %s100 = sphi 0, %s86
      %s104 = sphi 0, %s104
      %s106 = sphi 0, %s104
      %s107 = sphi 0, %s106
      %s121 = sphi 0, %s107
      %s125 = sphi 0, %s125
      %s127 = sphi 0, %s125
      %s128 = sphi 0, %s127
      %s142 = sphi 0, %s128
      %s146 = sphi 0, %s146
      %s148 = sphi 0, %s146
      %s149 = sphi 0, %s148
      %s163 = sphi 0, %s149
      %s167 = sphi 0, %s167
      %s169 = sphi 0, %s167
      %s170 = sphi 0, %s169
      %s184 = sphi 0, %s170
      %s190 = sphi 0, %s192
      %s193 = sphi 0, %s190
      %s194 = sphi 0, %s193
      %s210 = sphi 0, %s194
      %s216 = sphi 0, %s218
      %s219 = sphi 0, %s216
      %s220 = sphi 0, %s219
      %s236 = sphi 0, %s220
    $region4: #{tpu_custom_call.1} parent=1 // loop_header_branch
      %26 = sbr.rel (%p24) target = $region8
    $region5: #{tpu_custom_call.1} parent=1 // loop_body
      %s28 = ssub.s32 %s23, 1
      %s29 = ssub.s32 %s23, 2
      %s30 = sadd.s32 %s23, 1
      %s31 = ssub.s32 %s23, %s30
      %p32 = scmp.eq.s32.totalorder %s31, 0
      %s34 = sadd.s32 %s33, 1
      %s35 = scalar_select %p32, %s33, %s34
      %p38 = pneg %p32
      %p39 = scmp.eq.s32.totalorder %s23, 1
      %p40 = por %p38, %p39
      %p41 = scmp.ne.s32.totalorder %s33, %s36
      %p42 = scmp.eq.s32.totalorder %s23, 0
      %p43 = por %p41, %p42
      %p44 = scmp.ne.s32.totalorder %s33, %s36
      %p45 = scmp.eq.s32.totalorder %s28, 1
      %p46 = por %p44, %p45
      %p47 = scmp.ne.s32.totalorder %s36, %s37
      %p48 = scmp.eq.s32.totalorder %s28, 0
      %p49 = por %p47, %p48
      %p50 = scmp.ne.s32.totalorder %s36, %s37
      %p51 = scmp.eq.s32.totalorder %s29, 1
      %p52 = por %p50, %p51
      %p54 = scmp.ne.s32.totalorder %s37, %s53
      %p55 = scmp.eq.s32.totalorder %s29, 0
      %p56 = por %p54, %p55
      %s57 = ssub.s32 %s23, %s30
      %p58 = scmp.eq.s32.totalorder %s57, 0
      %s60 = sadd.s32 %s59, 1
      %s61 = scalar_select %p58, %s59, %s60
      %p64 = pneg %p58
      %p65 = scmp.eq.s32.totalorder %s23, 1
      %p66 = por %p64, %p65
      %p67 = scmp.ne.s32.totalorder %s59, %s62
      %p68 = scmp.eq.s32.totalorder %s23, 0
      %p69 = por %p67, %p68
      %p70 = scmp.ne.s32.totalorder %s59, %s62
      %p71 = scmp.eq.s32.totalorder %s28, 1
      %p72 = por %p70, %p71
      %p73 = scmp.ne.s32.totalorder %s62, %s63
      %p74 = scmp.eq.s32.totalorder %s28, 0
      %p75 = por %p73, %p74
      %p76 = scmp.ne.s32.totalorder %s62, %s63
      %p77 = scmp.eq.s32.totalorder %s29, 1
      %p78 = por %p76, %p77
      %p80 = scmp.ne.s32.totalorder %s63, %s79
      %p81 = scmp.eq.s32.totalorder %s29, 0
      %p82 = por %p80, %p81
      %s84 = sadd.s32 %s83, 1
      %p87 = scmp.eq.s32.totalorder %s23, 1
      %p88 = scmp.ne.s32.totalorder %s83, %s85
      %p89 = scmp.eq.s32.totalorder %s23, 0
      %p90 = por %p88, %p89
      %p91 = scmp.ne.s32.totalorder %s83, %s85
      %p92 = scmp.eq.s32.totalorder %s28, 1
      %p93 = por %p91, %p92
      %p94 = scmp.ne.s32.totalorder %s85, %s86
      %p95 = scmp.eq.s32.totalorder %s28, 0
      %p96 = por %p94, %p95
      %p97 = scmp.ne.s32.totalorder %s85, %s86
      %p98 = scmp.eq.s32.totalorder %s29, 1
      %p99 = por %p97, %p98
      %p101 = scmp.ne.s32.totalorder %s86, %s100
      %p102 = scmp.eq.s32.totalorder %s29, 0
      %p103 = por %p101, %p102
      %s105 = sadd.s32 %s104, 1
      %p108 = scmp.eq.s32.totalorder %s23, 1
      %p109 = scmp.ne.s32.totalorder %s104, %s106
      %p110 = scmp.eq.s32.totalorder %s23, 0
      %p111 = por %p109, %p110
      %p112 = scmp.ne.s32.totalorder %s104, %s106
      %p113 = scmp.eq.s32.totalorder %s28, 1
      %p114 = por %p112, %p113
      %p115 = scmp.ne.s32.totalorder %s106, %s107
      %p116 = scmp.eq.s32.totalorder %s28, 0
      %p117 = por %p115, %p116
      %p118 = scmp.ne.s32.totalorder %s106, %s107
      %p119 = scmp.eq.s32.totalorder %s29, 1
      %p120 = por %p118, %p119
      %p122 = scmp.ne.s32.totalorder %s107, %s121
      %p123 = scmp.eq.s32.totalorder %s29, 0
      %p124 = por %p122, %p123
      %s126 = sadd.s32 %s125, 1
      %p129 = scmp.eq.s32.totalorder %s23, 1
      %p130 = scmp.ne.s32.totalorder %s125, %s127
      %p131 = scmp.eq.s32.totalorder %s23, 0
      %p132 = por %p130, %p131
      %p133 = scmp.ne.s32.totalorder %s125, %s127
      %p134 = scmp.eq.s32.totalorder %s28, 1
      %p135 = por %p133, %p134
      %p136 = scmp.ne.s32.totalorder %s127, %s128
      %p137 = scmp.eq.s32.totalorder %s28, 0
      %p138 = por %p136, %p137
      %p139 = scmp.ne.s32.totalorder %s127, %s128
      %p140 = scmp.eq.s32.totalorder %s29, 1
      %p141 = por %p139, %p140
      %p143 = scmp.ne.s32.totalorder %s128, %s142
      %p144 = scmp.eq.s32.totalorder %s29, 0
      %p145 = por %p143, %p144
      %s147 = sadd.s32 %s146, 1
      %p150 = scmp.eq.s32.totalorder %s23, 1
      %p151 = scmp.ne.s32.totalorder %s146, %s148
      %p152 = scmp.eq.s32.totalorder %s23, 0
      %p153 = por %p151, %p152
      %p154 = scmp.ne.s32.totalorder %s146, %s148
      %p155 = scmp.eq.s32.totalorder %s28, 1
      %p156 = por %p154, %p155
      %p157 = scmp.ne.s32.totalorder %s148, %s149
      %p158 = scmp.eq.s32.totalorder %s28, 0
      %p159 = por %p157, %p158
      %p160 = scmp.ne.s32.totalorder %s148, %s149
      %p161 = scmp.eq.s32.totalorder %s29, 1
      %p162 = por %p160, %p161
      %p164 = scmp.ne.s32.totalorder %s149, %s163
      %p165 = scmp.eq.s32.totalorder %s29, 0
      %p166 = por %p164, %p165
      %s168 = sadd.s32 %s167, 1
      %p171 = scmp.eq.s32.totalorder %s23, 1
      %p172 = scmp.ne.s32.totalorder %s167, %s169
      %p173 = scmp.eq.s32.totalorder %s23, 0
      %p174 = por %p172, %p173
      %p175 = scmp.ne.s32.totalorder %s167, %s169
      %p176 = scmp.eq.s32.totalorder %s28, 1
      %p177 = por %p175, %p176
      %p178 = scmp.ne.s32.totalorder %s169, %s170
      %p179 = scmp.eq.s32.totalorder %s28, 0
      %p180 = por %p178, %p179
      %p181 = scmp.ne.s32.totalorder %s169, %s170
      %p182 = scmp.eq.s32.totalorder %s29, 1
      %p183 = por %p181, %p182
      %p185 = scmp.ne.s32.totalorder %s170, %s184
      %p186 = scmp.eq.s32.totalorder %s29, 0
      %p187 = por %p185, %p186
      %s188 = ssub.s32 %s23, %s30
      %p189 = scmp.eq.s32.totalorder %s188, 0
      %s191 = sadd.s32 %s190, 1
      %s192 = scalar_select %p189, %s190, %s191
      %p195 = pneg %p189
      %p196 = scmp.eq.s32.totalorder %s23, 1
      %p197 = por %p195, %p196
      %p198 = scmp.ne.s32.totalorder %s190, %s193
      %p199 = scmp.eq.s32.totalorder %s23, 0
      %p200 = por %p198, %p199
      %p201 = scmp.ne.s32.totalorder %s190, %s193
      %p202 = scmp.eq.s32.totalorder %s28, 1
      %p203 = por %p201, %p202
      %p204 = scmp.ne.s32.totalorder %s193, %s194
      %p205 = scmp.eq.s32.totalorder %s28, 0
      %p206 = por %p204, %p205
      %p207 = scmp.ne.s32.totalorder %s193, %s194
      %p208 = scmp.eq.s32.totalorder %s29, 1
      %p209 = por %p207, %p208
      %p211 = scmp.ne.s32.totalorder %s194, %s210
      %p212 = scmp.eq.s32.totalorder %s29, 0
      %p213 = por %p211, %p212
      %s214 = ssub.s32 %s23, %s30
      %p215 = scmp.eq.s32.totalorder %s214, 0
      %s217 = sadd.s32 %s216, 1
      %s218 = scalar_select %p215, %s216, %s217
      %p221 = pneg %p215
      %p222 = scmp.eq.s32.totalorder %s23, 1
      %p223 = por %p221, %p222
      %p224 = scmp.ne.s32.totalorder %s216, %s219
      %p225 = scmp.eq.s32.totalorder %s23, 0
      %p226 = por %p224, %p225
      %p227 = scmp.ne.s32.totalorder %s216, %s219
      %p228 = scmp.eq.s32.totalorder %s28, 1
      %p229 = por %p227, %p228
      %p230 = scmp.ne.s32.totalorder %s219, %s220
      %p231 = scmp.eq.s32.totalorder %s28, 0
      %p232 = por %p230, %p231
      %p233 = scmp.ne.s32.totalorder %s219, %s220
      %p234 = scmp.eq.s32.totalorder %s29, 1
      %p235 = por %p233, %p234
      %p237 = scmp.ne.s32.totalorder %s220, %s236
      %p238 = scmp.eq.s32.totalorder %s29, 0
      %p239 = por %p237, %p238
      %p240 = scmp.le.s32.totalorder 1, %s23
      %p241 = scmp.lt.s32.totalorder %s23, 3
      %p242 = pnand %p240, %p241
      %p243 = pneg %p242
      // Predicated region
      $region9: #{tpu_custom_call.1} parent=5 // pred_check
        _
      $region10: #{tpu_custom_call.1} parent=5 // pred_check_branch
        %245 = sbr.rel (%p242) target = $region12
      $region11: #{tpu_custom_call.1} parent=5 // pred_region
        %s246 = ssub.s32 %s23, 1
        // Predicated region
        $region13: #{tpu_custom_call.1} parent=11 // pred_check
          %p247 = pneg %p96
        $region14: #{tpu_custom_call.1} parent=11 // pred_check_branch
          %249 = sbr.rel (%p247) target = $region16
        $region15: #{tpu_custom_call.1} parent=11 // pred_region
          _
        $region16: #{tpu_custom_call.1} parent=11 // pred_fallthru
          _
        // Predicated region
        $region17: #{tpu_custom_call.1} parent=11 // pred_check
          %p250 = pneg %p117
        $region18: #{tpu_custom_call.1} parent=11 // pred_check_branch
          %252 = sbr.rel (%p250) target = $region20
        $region19: #{tpu_custom_call.1} parent=11 // pred_region
          _
        $region20: #{tpu_custom_call.1} parent=11 // pred_fallthru
          _
        // Predicated region
        $region21: #{tpu_custom_call.1} parent=11 // pred_check
          %p253 = pneg %p138
        $region22: #{tpu_custom_call.1} parent=11 // pred_check_branch
          %255 = sbr.rel (%p253) target = $region24
        $region23: #{tpu_custom_call.1} parent=11 // pred_region
          _
        $region24: #{tpu_custom_call.1} parent=11 // pred_fallthru
          _
        // Predicated region
        $region25: #{tpu_custom_call.1} parent=11 // pred_check
          %p256 = pneg %p159
        $region26: #{tpu_custom_call.1} parent=11 // pred_check_branch
          %258 = sbr.rel (%p256) target = $region28
        $region27: #{tpu_custom_call.1} parent=11 // pred_region
          _
        $region28: #{tpu_custom_call.1} parent=11 // pred_fallthru
          _
        // Predicated region
        $region29: #{tpu_custom_call.1} parent=11 // pred_check
          %p259 = pneg %p180
        $region30: #{tpu_custom_call.1} parent=11 // pred_check_branch
          %261 = sbr.rel (%p259) target = $region32
        $region31: #{tpu_custom_call.1} parent=11 // pred_region
          _
        $region32: #{tpu_custom_call.1} parent=11 // pred_fallthru
          _
      $region12: #{tpu_custom_call.1} parent=5 // pred_fallthru
        _
      %p262 = scmp.lt.s32.totalorder %s23, 2
      // Predicated region
      $region33: #{tpu_custom_call.1} parent=5 // pred_check
        %p263 = pneg %p262
      $region34: #{tpu_custom_call.1} parent=5 // pred_check_branch
        %265 = sbr.rel (%p263) target = $region36
      $region35: #{tpu_custom_call.1} parent=5 // pred_region
        // Predicated region
        $region37: #{tpu_custom_call.1} parent=35 // pred_check
          %p266 = pneg %p43
        $region38: #{tpu_custom_call.1} parent=35 // pred_check_branch
          %268 = sbr.rel (%p266) target = $region40
        $region39: #{tpu_custom_call.1} parent=35 // pred_region
          %s269 = sand.u32 %s33, 1
          %s270 = sand.u32 %s33, 1
          %s271 = smul.addr %s270, 128
          %s272 = scalar_lea.vmem [#allocation3], %s271
          %s273 = smul.addr %s23, 8
          %s274 = scalar_lea.vmem %s0, %s273
          // Predicated region
          $region41: #{tpu_custom_call.1} parent=39 // pred_check
            _
          $region42: #{tpu_custom_call.1} parent=39 // pred_check_branch
            %276 = sbr.rel (0) target = $region44
          $region43: #{tpu_custom_call.1} parent=39 // pred_region
            // Predicated region
            $region45: #{tpu_custom_call.1} parent=43 // pred_check
              _
            $region46: #{tpu_custom_call.1} parent=43 // pred_check_branch
              %278 = sbr.rel (0) target = $region48
            $region47: #{tpu_custom_call.1} parent=43 // pred_region
              // Predicated region
              $region60: #{tpu_custom_call.1} parent=47 // pred_check
                _
              $region61: #{tpu_custom_call.1} parent=47 // pred_check_branch
                %323 = sbr.rel (0) target = $region63
              $region62: #{tpu_custom_call.1} parent=47 // pred_region
                loop: start=0, step=1, limit=1
                $region64: #{tpu_custom_call.1} parent=62 // loop_pre_header
                  _
                $region65: #{tpu_custom_call.1} parent=62 // loop_header
                  %s325 = sphi 0, %s329
                  %p326 = scmp.ge.s32.totalorder %s325, 1
                  %s330 = sphi %s274, %s274
                  %s331 = sphi %s272, %s272
                $region66: #{tpu_custom_call.1} parent=62 // loop_header_branch
                  %328 = sbr.rel (%p326) target = $region70
                $region67: #{tpu_custom_call.1} parent=62 // loop_body
                  %v332 = vld [vmem:[%s330] sm:$0xff]
                  %333 = vst [vmem:[%s331] sm:$0xff] %v332
                  %v334 = vld [vmem:[%s330 + $0x10] sm:$0xff]
                  %335 = vst [vmem:[%s331 + $0x8] sm:$0xff] %v334
                  %v336 = vld [vmem:[%s330 + $0x20] sm:$0xff]
                  %337 = vst [vmem:[%s331 + $0x10] sm:$0xff] %v336
                  %v338 = vld [vmem:[%s330 + $0x30] sm:$0xff]
                  %339 = vst [vmem:[%s331 + $0x18] sm:$0xff] %v338
                  %v340 = vld [vmem:[%s330 + $0x40] sm:$0xff]
                  %341 = vst [vmem:[%s331 + $0x20] sm:$0xff] %v340
                  %v342 = vld [vmem:[%s330 + $0x50] sm:$0xff]
                  %343 = vst [vmem:[%s331 + $0x28] sm:$0xff] %v342
                  %v344 = vld [vmem:[%s330 + $0x60] sm:$0xff]
                  %345 = vst [vmem:[%s331 + $0x30] sm:$0xff] %v344
                  %v346 = vld [vmem:[%s330 + $0x70] sm:$0xff]
                  %347 = vst [vmem:[%s331 + $0x38] sm:$0xff] %v346
                  %v348 = vld [vmem:[%s330 + $0x80] sm:$0xff]
                  %349 = vst [vmem:[%s331 + $0x40] sm:$0xff] %v348
                  %v350 = vld [vmem:[%s330 + $0x90] sm:$0xff]
                  %351 = vst [vmem:[%s331 + $0x48] sm:$0xff] %v350
                  %v352 = vld [vmem:[%s330 + $0xa0] sm:$0xff]
                  %353 = vst [vmem:[%s331 + $0x50] sm:$0xff] %v352
                  %v354 = vld [vmem:[%s330 + $0xb0] sm:$0xff]
                  %355 = vst [vmem:[%s331 + $0x58] sm:$0xff] %v354
                  %v356 = vld [vmem:[%s330 + $0xc0] sm:$0xff]
                  %357 = vst [vmem:[%s331 + $0x60] sm:$0xff] %v356
                  %v358 = vld [vmem:[%s330 + $0xd0] sm:$0xff]
                  %359 = vst [vmem:[%s331 + $0x68] sm:$0xff] %v358
                  %v360 = vld [vmem:[%s330 + $0xe0] sm:$0xff]
                  %361 = vst [vmem:[%s331 + $0x70] sm:$0xff] %v360
                  %v362 = vld [vmem:[%s330 + $0xf0] sm:$0xff]
                  %363 = vst [vmem:[%s331 + $0x78] sm:$0xff] %v362
                $region68: #{tpu_custom_call.1} parent=62 // loop_footer
                  %s329 = sadd.s32 1, %s325
                $region69: #{tpu_custom_call.1} parent=62 // loop_footer_branch
                  %324 = sbr.rel target = $region65
                $region70: #{tpu_custom_call.1} parent=62 // loop_exit
                  _
              $region63: #{tpu_custom_call.1} parent=47 // pred_fallthru
                _
              // Predicated region
              $region71: #{tpu_custom_call.1} parent=47 // pred_check
                _
              $region72: #{tpu_custom_call.1} parent=47 // pred_check_branch
                %365 = sbr.rel target = $region74
              $region73: #{tpu_custom_call.1} parent=47 // pred_region
                _
              $region74: #{tpu_custom_call.1} parent=47 // pred_fallthru
                _
            $region48: #{tpu_custom_call.1} parent=43 // pred_fallthru
              _
            // Predicated region
            $region49: #{tpu_custom_call.1} parent=43 // pred_check
              _
            $region50: #{tpu_custom_call.1} parent=43 // pred_check_branch
              %280 = sbr.rel target = $region52
            $region51: #{tpu_custom_call.1} parent=43 // pred_region
              loop: start=0, step=1, limit=1
              $region53: #{tpu_custom_call.1} parent=51 // loop_pre_header
                _
              $region54: #{tpu_custom_call.1} parent=51 // loop_header
                %s283 = sphi 0, %s287
                %p284 = scmp.ge.s32.totalorder %s283, 1
                %s288 = sphi %s274, %s274
                %s289 = sphi %s272, %s272
              $region55: #{tpu_custom_call.1} parent=51 // loop_header_branch
                %286 = sbr.rel (%p284) target = $region59
              $region56: #{tpu_custom_call.1} parent=51 // loop_body
                %v290 = vld [vmem:[%s288] sm:$0xff]
                %291 = vst [vmem:[%s289] sm:$0xff] %v290
                %v292 = vld [vmem:[%s288 + $0x10] sm:$0xff]
                %293 = vst [vmem:[%s289 + $0x8] sm:$0xff] %v292
                %v294 = vld [vmem:[%s288 + $0x20] sm:$0xff]
                %295 = vst [vmem:[%s289 + $0x10] sm:$0xff] %v294
                %v296 = vld [vmem:[%s288 + $0x30] sm:$0xff]
                %297 = vst [vmem:[%s289 + $0x18] sm:$0xff] %v296
                %v298 = vld [vmem:[%s288 + $0x40] sm:$0xff]
                %299 = vst [vmem:[%s289 + $0x20] sm:$0xff] %v298
                %v300 = vld [vmem:[%s288 + $0x50] sm:$0xff]
                %301 = vst [vmem:[%s289 + $0x28] sm:$0xff] %v300
                %v302 = vld [vmem:[%s288 + $0x60] sm:$0xff]
                %303 = vst [vmem:[%s289 + $0x30] sm:$0xff] %v302
                %v304 = vld [vmem:[%s288 + $0x70] sm:$0xff]
                %305 = vst [vmem:[%s289 + $0x38] sm:$0xff] %v304
                %v306 = vld [vmem:[%s288 + $0x80] sm:$0xff]
                %307 = vst [vmem:[%s289 + $0x40] sm:$0xff] %v306
                %v308 = vld [vmem:[%s288 + $0x90] sm:$0xff]
                %309 = vst [vmem:[%s289 + $0x48] sm:$0xff] %v308
                %v310 = vld [vmem:[%s288 + $0xa0] sm:$0xff]
                %311 = vst [vmem:[%s289 + $0x50] sm:$0xff] %v310
                %v312 = vld [vmem:[%s288 + $0xb0] sm:$0xff]
                %313 = vst [vmem:[%s289 + $0x58] sm:$0xff] %v312
                %v314 = vld [vmem:[%s288 + $0xc0] sm:$0xff]
                %315 = vst [vmem:[%s289 + $0x60] sm:$0xff] %v314
                %v316 = vld [vmem:[%s288 + $0xd0] sm:$0xff]
                %317 = vst [vmem:[%s289 + $0x68] sm:$0xff] %v316
                %v318 = vld [vmem:[%s288 + $0xe0] sm:$0xff]
                %319 = vst [vmem:[%s289 + $0x70] sm:$0xff] %v318
                %v320 = vld [vmem:[%s288 + $0xf0] sm:$0xff]
                %321 = vst [vmem:[%s289 + $0x78] sm:$0xff] %v320
              $region57: #{tpu_custom_call.1} parent=51 // loop_footer
                %s287 = sadd.s32 1, %s283
              $region58: #{tpu_custom_call.1} parent=51 // loop_footer_branch
                %282 = sbr.rel target = $region54
              $region59: #{tpu_custom_call.1} parent=51 // loop_exit
                _
            $region52: #{tpu_custom_call.1} parent=43 // pred_fallthru
              _
          $region44: #{tpu_custom_call.1} parent=39 // pred_fallthru
            _
          %366 = vnop
        $region40: #{tpu_custom_call.1} parent=35 // pred_fallthru
          _
        // Predicated region
        $region75: #{tpu_custom_call.1} parent=35 // pred_check
          %p367 = pneg %p69
        $region76: #{tpu_custom_call.1} parent=35 // pred_check_branch
          %369 = sbr.rel (%p367) target = $region78
        $region77: #{tpu_custom_call.1} parent=35 // pred_region
          %p370 = scmp.lt.s32.totalorder %s23, 1
          %s371 = scalar_select %p370, %s23, 1
          %s372 = scalar_lea.vmem %s1, %s371
        $region78: #{tpu_custom_call.1} parent=35 // pred_fallthru
          _
      $region36: #{tpu_custom_call.1} parent=5 // pred_fallthru
        _
      %p373 = scmp.le.s32.totalorder 1, %s23
      %p374 = scmp.lt.s32.totalorder %s23, 3
      %p375 = pnand %p373, %p374
      %p376 = pneg %p375
      // Predicated region
      $region79: #{tpu_custom_call.1} parent=5 // pred_check
        _
      $region80: #{tpu_custom_call.1} parent=5 // pred_check_branch
        %378 = sbr.rel (%p375) target = $region82
      $region81: #{tpu_custom_call.1} parent=5 // pred_region
        %s379 = ssub.s32 %s23, 1
        %s380 = sand.u32 %s36, 1
        %s381 = sand.u32 %s36, 1
        %s382 = smul.addr %s381, 128
        %s383 = scalar_lea.vmem [#allocation3], %s382
        // Predicated region
        $region83: #{tpu_custom_call.1} parent=81 // pred_check
          %p384 = pneg %p49
        $region84: #{tpu_custom_call.1} parent=81 // pred_check_branch
          %386 = sbr.rel (%p384) target = $region86
        $region85: #{tpu_custom_call.1} parent=81 // pred_region
          _
        $region86: #{tpu_custom_call.1} parent=81 // pred_fallthru
          _
        %s387 = sand.u32 %s36, 1
        %s388 = sand.u32 %s36, 1
        %s389 = smul.addr %s388, 128
        %s390 = scalar_lea.vmem [#allocation3], %s389
        %p391 = pneg %p49
        %p392 = pneg %p46
        %p393 = scmp.lt.s32.totalorder %s28, 1
        %s394 = scalar_select %p393, %s28, 1
        %s395 = scalar_lea.vmem %s1, %s394
        %p396 = pneg %p75
        %p397 = pneg %p72
        %p398 = pneg %p96
        %p399 = pneg %p93
        %p400 = pneg %p117
        %p401 = pneg %p114
        %p402 = pneg %p138
        %p403 = pneg %p135
        %p404 = pneg %p159
        %p405 = pneg %p156
        %p406 = pneg %p180
        %p407 = pneg %p177
        %p408 = pneg %p206
        %p409 = pneg %p203
        %s410 = sand.u32 %s193, 1
        %s411 = scalar_lea.sflag [#allocation5], %s410
        %s412 = sand.u32 %s193, 1
        %s413 = smul.addr %s412, 8
        %s414 = scalar_lea.vmem [#allocation4], %s413
        %p415 = pneg %p232
        %p416 = pneg %p229
        %s417 = sand.u32 %s219, 1
        %s418 = scalar_lea.sflag [#allocation7], %s417
        %s419 = sand.u32 %s219, 1
        %s420 = smul.addr %s419, 8
        %s421 = scalar_lea.vmem [#allocation6], %s420
        %p422 = scmp.lt.s32.totalorder %s28, 1
        %s423 = scalar_select %p422, %s28, 1
        %s424 = scalar_lea.vmem %s1, %s423
        %v425 = vld [vmem:[%s383] sm:$0xff]
        %v426 = vld [vmem:[%s383 + $0x8] sm:$0xff]
        %v427 = vld [vmem:[%s383 + $0x10] sm:$0xff]
        %v428 = vld [vmem:[%s383 + $0x18] sm:$0xff]
        %v429 = vld [vmem:[%s383 + $0x20] sm:$0xff]
        %v430 = vld [vmem:[%s383 + $0x28] sm:$0xff]
        %v431 = vld [vmem:[%s383 + $0x30] sm:$0xff]
        %v432 = vld [vmem:[%s383 + $0x38] sm:$0xff]
        %v433 = vld [vmem:[%s383 + $0x40] sm:$0xff]
        %v434 = vld [vmem:[%s383 + $0x48] sm:$0xff]
        %v435 = vld [vmem:[%s383 + $0x50] sm:$0xff]
        %v436 = vld [vmem:[%s383 + $0x58] sm:$0xff]
        %v437 = vld [vmem:[%s383 + $0x60] sm:$0xff]
        %v438 = vld [vmem:[%s383 + $0x68] sm:$0xff]
        %v439 = vld [vmem:[%s383 + $0x70] sm:$0xff]
        %v440 = vld [vmem:[%s383 + $0x78] sm:$0xff]
        %v441 = vld [vmem:[%s2] sm:$0xff]
        %v442 = vld [vmem:[%s2 + $0x8] sm:$0xff]
        %v443 = vld [vmem:[%s2 + $0x10] sm:$0xff]
        %v444 = vld [vmem:[%s2 + $0x18] sm:$0xff]
        %v445 = vld [vmem:[%s2 + $0x20] sm:$0xff]
        %v446 = vld [vmem:[%s2 + $0x28] sm:$0xff]
        %v447 = vld [vmem:[%s2 + $0x30] sm:$0xff]
        %v448 = vld [vmem:[%s2 + $0x38] sm:$0xff]
        %v449 = vld [vmem:[#allocation2] sm:$0x1]
        %v451 = vlaneseq
        %v452 = vshrl.u32 %v451, 7
        %v453 = vsub.s32 0, %v452
        %v454 = vrot.slane %v449, %v453
        %455 = vset.pattern.permute.xlu0 0
        %456 = vperm.xlu0 %455, %v454
        %v457 = vpop.permute.xlu0 %456
        %459 = vmatprep.subr.mxu0 0.0
        %460 = vmatpush1.msra.mxu0 %v425
        %461 = vmatprep.subr.mxu0 0.0
        %462 = vmatpush1.msra.mxu0 %v426
        %463 = vmatprep.subr.mxu0 0.0
        %464 = vmatpush1.msra.mxu0 %v427
        %465 = vmatprep.subr.mxu0 0.0
        %466 = vmatpush1.msra.mxu0 %v428
        %467 = vmatprep.subr.mxu0 0.0
        %468 = vmatpush1.msra.mxu0 %v429
        %469 = vmatprep.subr.mxu0 0.0
        %470 = vmatpush1.msra.mxu0 %v430
        %471 = vmatprep.subr.mxu0 0.0
        %472 = vmatpush1.msra.mxu0 %v431
        %473 = vmatprep.subr.mxu0 0.0
        %474 = vmatpush1.msra.mxu0 %v432
        %475 = vmatprep.subr.mxu0 0.0
        %476 = vmatpush1.msra.mxu0 %v433
        %477 = vmatprep.subr.mxu0 0.0
        %478 = vmatpush1.msra.mxu0 %v434
        %479 = vmatprep.subr.mxu0 0.0
        %480 = vmatpush1.msra.mxu0 %v435
        %481 = vmatprep.subr.mxu0 0.0
        %482 = vmatpush1.msra.mxu0 %v436
        %483 = vmatprep.subr.mxu0 0.0
        %484 = vmatpush1.msra.mxu0 %v437
        %485 = vmatprep.subr.mxu0 0.0
        %486 = vmatpush1.msra.mxu0 %v438
        %487 = vmatprep.subr.mxu0 0.0
        %488 = vmatpush1.msra.mxu0 %v439
        %489 = vmatprep.subr.mxu0 0.0
        %490 = vmatpush1.msra.mxu0 %v440
        %491 = vmatprep.subr.mxu0 0.0
        %492 = vmatpush1.msra.mxu0 0.0
        %493 = vmatprep.subr.mxu0 0.0
        %494 = vmatpush1.msra.mxu0 0.0
        %495 = vmatprep.subr.mxu0 0.0
        %496 = vmatpush1.msra.mxu0 0.0
        %497 = vmatprep.subr.mxu0 0.0
        %498 = vmatpush1.msra.mxu0 0.0
        %499 = vmatprep.subr.mxu0 0.0
        %500 = vmatpush1.msra.mxu0 0.0
        %501 = vmatprep.subr.mxu0 0.0
        %502 = vmatpush1.msra.mxu0 0.0
        %503 = vmatprep.subr.mxu0 0.0
        %504 = vmatpush1.msra.mxu0 0.0
        %505 = vmatprep.subr.mxu0 0.0
        %506 = vmatpush1.msra.mxu0 0.0
        %507 = vmatprep.subr.mxu0 0.0
        %508 = vmatpush1.msra.mxu0 0.0
        %509 = vmatprep.subr.mxu0 0.0
        %510 = vmatpush1.msra.mxu0 0.0
        %511 = vmatprep.subr.mxu0 0.0
        %512 = vmatpush1.msra.mxu0 0.0
        %513 = vmatprep.subr.mxu0 0.0
        %514 = vmatpush1.msra.mxu0 0.0
        %515 = vmatprep.subr.mxu0 0.0
        %516 = vmatpush1.msra.mxu0 0.0
        %517 = vmatprep.subr.mxu0 0.0
        %518 = vmatpush1.msra.mxu0 0.0
        %519 = vmatprep.subr.mxu0 0.0
        %520 = vmatpush1.msra.mxu0 0.0
        %521 = vmatprep.subr.mxu0 0.0
        %522 = vmatpush1.msra.mxu0 0.0
        %523 = vmatprep.mubr.f32.mxu0 0.0
        %524 = vmatmul.mubr.f32.gmra.mrb[0].mxu0 %v441
        %v525 = vpop.f32.mrb[0].mxu0
        %v526 = vadd.f32 %v457, %v525
        %v527 = vpop.f32.mrb[0].mxu0
        %528 = vmatprep.mubr.f32.mxu0 0.0
        %529 = vmatmul.mubr.f32.gmra.mrb[0].mxu0 %v442
        %v530 = vpop.f32.mrb[0].mxu0
        %v531 = vadd.f32 %v457, %v530
        %v532 = vpop.f32.mrb[0].mxu0
        %533 = vmatprep.mubr.f32.mxu0 0.0
        %534 = vmatmul.mubr.f32.gmra.mrb[0].mxu0 %v443
        %v535 = vpop.f32.mrb[0].mxu0
        %v536 = vadd.f32 %v457, %v535
        %v537 = vpop.f32.mrb[0].mxu0
        %538 = vmatprep.mubr.f32.mxu0 0.0
        %539 = vmatmul.mubr.f32.gmra.mrb[0].mxu0 %v444
        %v540 = vpop.f32.mrb[0].mxu0
        %v541 = vadd.f32 %v457, %v540
        %v542 = vpop.f32.mrb[0].mxu0
        %543 = vmatprep.mubr.f32.mxu0 0.0
        %544 = vmatmul.mubr.f32.gmra.mrb[0].mxu0 %v445
        %v545 = vpop.f32.mrb[0].mxu0
        %v546 = vadd.f32 %v457, %v545
        %v547 = vpop.f32.mrb[0].mxu0
        %548 = vmatprep.mubr.f32.mxu0 0.0
        %549 = vmatmul.mubr.f32.gmra.mrb[0].mxu0 %v446
        %v550 = vpop.f32.mrb[0].mxu0
        %v551 = vadd.f32 %v457, %v550
        %v552 = vpop.f32.mrb[0].mxu0
        %553 = vmatprep.mubr.f32.mxu0 0.0
        %554 = vmatmul.mubr.f32.gmra.mrb[0].mxu0 %v447
        %v555 = vpop.f32.mrb[0].mxu0
        %v556 = vadd.f32 %v457, %v555
        %v557 = vpop.f32.mrb[0].mxu0
        %558 = vmatprep.mubr.f32.mxu0 0.0
        %559 = vmatmul.mubr.f32.gmra.mrb[0].mxu0 %v448
        %v560 = vpop.f32.mrb[0].mxu0
        %v561 = vadd.f32 %v457, %v560
        %v562 = vpop.f32.mrb[0].mxu0
        %563 = vdwg.mxu0
        %v564 = vld [vmem:[%s4] sm:$0xff]
        %v565 = vld [vmem:[%s4 + $0x8] sm:$0xff]
        %v566 = vld [vmem:[%s4 + $0x10] sm:$0xff]
        %v567 = vld [vmem:[%s4 + $0x18] sm:$0xff]
        %v568 = vld [vmem:[%s4 + $0x20] sm:$0xff]
        %v569 = vld [vmem:[%s4 + $0x28] sm:$0xff]
        %v570 = vld [vmem:[%s4 + $0x30] sm:$0xff]
        %v571 = vld [vmem:[%s4 + $0x38] sm:$0xff]
        %v572 = vld [vmem:[%s4 + $0x40] sm:$0xff]
        %v573 = vld [vmem:[%s4 + $0x48] sm:$0xff]
        %v574 = vld [vmem:[%s4 + $0x50] sm:$0xff]
        %v575 = vld [vmem:[%s4 + $0x58] sm:$0xff]
        %v576 = vld [vmem:[%s4 + $0x60] sm:$0xff]
        %v577 = vld [vmem:[%s4 + $0x68] sm:$0xff]
        %v578 = vld [vmem:[%s4 + $0x70] sm:$0xff]
        %v579 = vld [vmem:[%s4 + $0x78] sm:$0xff]
        %v580 = vld [vmem:[%s4 + $0x80] sm:$0xff]
        %v581 = vld [vmem:[%s4 + $0x88] sm:$0xff]
        %v582 = vld [vmem:[%s4 + $0x90] sm:$0xff]
        %v583 = vld [vmem:[%s4 + $0x98] sm:$0xff]
        %v584 = vld [vmem:[%s4 + $0xa0] sm:$0xff]
        %v585 = vld [vmem:[%s4 + $0xa8] sm:$0xff]
        %v586 = vld [vmem:[%s4 + $0xb0] sm:$0xff]
        %v587 = vld [vmem:[%s4 + $0xb8] sm:$0xff]
        %v588 = vld [vmem:[%s4 + $0xc0] sm:$0xff]
        %v589 = vld [vmem:[%s4 + $0xc8] sm:$0xff]
        %v590 = vld [vmem:[%s4 + $0xd0] sm:$0xff]
        %v591 = vld [vmem:[%s4 + $0xd8] sm:$0xff]
        %v592 = vld [vmem:[%s4 + $0xe0] sm:$0xff]
        %v593 = vld [vmem:[%s4 + $0xe8] sm:$0xff]
        %v594 = vld [vmem:[%s4 + $0xf0] sm:$0xff]
        %v595 = vld [vmem:[%s4 + $0xf8] sm:$0xff]
        %v596 = vld [vmem:[%s4 + $0x100] sm:$0xff]
        %v597 = vld [vmem:[%s4 + $0x108] sm:$0xff]
        %v598 = vld [vmem:[%s4 + $0x110] sm:$0xff]
        %v599 = vld [vmem:[%s4 + $0x118] sm:$0xff]
        %v600 = vld [vmem:[%s4 + $0x120] sm:$0xff]
        %v601 = vld [vmem:[%s4 + $0x128] sm:$0xff]
        %v602 = vld [vmem:[%s4 + $0x130] sm:$0xff]
        %v603 = vld [vmem:[%s4 + $0x138] sm:$0xff]
        %v604 = vld [vmem:[%s4 + $0x140] sm:$0xff]
        %v605 = vld [vmem:[%s4 + $0x148] sm:$0xff]
        %v606 = vld [vmem:[%s4 + $0x150] sm:$0xff]
        %v607 = vld [vmem:[%s4 + $0x158] sm:$0xff]
        %v608 = vld [vmem:[%s4 + $0x160] sm:$0xff]
        %v609 = vld [vmem:[%s4 + $0x168] sm:$0xff]
        %v610 = vld [vmem:[%s4 + $0x170] sm:$0xff]
        %v611 = vld [vmem:[%s4 + $0x178] sm:$0xff]
        %v612 = vld [vmem:[%s4 + $0x180] sm:$0xff]
        %v613 = vld [vmem:[%s4 + $0x188] sm:$0xff]
        %v614 = vld [vmem:[%s4 + $0x190] sm:$0xff]
        %v615 = vld [vmem:[%s4 + $0x198] sm:$0xff]
        %v616 = vld [vmem:[%s4 + $0x1a0] sm:$0xff]
        %v617 = vld [vmem:[%s4 + $0x1a8] sm:$0xff]
        %v618 = vld [vmem:[%s4 + $0x1b0] sm:$0xff]
        %v619 = vld [vmem:[%s4 + $0x1b8] sm:$0xff]
        %v620 = vld [vmem:[%s4 + $0x1c0] sm:$0xff]
        %v621 = vld [vmem:[%s4 + $0x1c8] sm:$0xff]
        %v622 = vld [vmem:[%s4 + $0x1d0] sm:$0xff]
        %v623 = vld [vmem:[%s4 + $0x1d8] sm:$0xff]
        %v624 = vld [vmem:[%s4 + $0x1e0] sm:$0xff]
        %v625 = vld [vmem:[%s4 + $0x1e8] sm:$0xff]
        %v626 = vld [vmem:[%s4 + $0x1f0] sm:$0xff]
        %v627 = vld [vmem:[%s4 + $0x1f8] sm:$0xff]
        %vm628 = vcmask 523264
        %v630 = vsel %vm628, %v564, 0
        %v633 = vsel %vm628, %v565, 0
        %v636 = vsel %vm628, %v566, 0
        %v639 = vsel %vm628, %v567, 0
        %v642 = vsel %vm628, %v568, 0
        %v645 = vsel %vm628, %v569, 0
        %v648 = vsel %vm628, %v570, 0
        %v651 = vsel %vm628, %v571, 0
        %v654 = vsel %vm628, %v572, 0
        %v657 = vsel %vm628, %v573, 0
        %v660 = vsel %vm628, %v574, 0
        %v663 = vsel %vm628, %v575, 0
        %v666 = vsel %vm628, %v576, 0
        %v669 = vsel %vm628, %v577, 0
        %v672 = vsel %vm628, %v578, 0
        %v675 = vsel %vm628, %v579, 0
        %v678 = vsel %vm628, %v580, 0
        %v681 = vsel %vm628, %v581, 0
        %v684 = vsel %vm628, %v582, 0
        %v687 = vsel %vm628, %v583, 0
        %v690 = vsel %vm628, %v584, 0
        %v693 = vsel %vm628, %v585, 0
        %v696 = vsel %vm628, %v586, 0
        %v699 = vsel %vm628, %v587, 0
        %v702 = vsel %vm628, %v588, 0
        %v705 = vsel %vm628, %v589, 0
        %v708 = vsel %vm628, %v590, 0
        %v711 = vsel %vm628, %v591, 0
        %v714 = vsel %vm628, %v592, 0
        %v717 = vsel %vm628, %v593, 0
        %v720 = vsel %vm628, %v594, 0
        %v723 = vsel %vm628, %v595, 0
        %v726 = vsel %vm628, %v596, 0
        %v729 = vsel %vm628, %v597, 0
        %v732 = vsel %vm628, %v598, 0
        %v735 = vsel %vm628, %v599, 0
        %v738 = vsel %vm628, %v600, 0
        %v741 = vsel %vm628, %v601, 0
        %v744 = vsel %vm628, %v602, 0
        %v747 = vsel %vm628, %v603, 0
        %v750 = vsel %vm628, %v604, 0
        %v753 = vsel %vm628, %v605, 0
        %v756 = vsel %vm628, %v606, 0
        %v759 = vsel %vm628, %v607, 0
        %v762 = vsel %vm628, %v608, 0
        %v765 = vsel %vm628, %v609, 0
        %v768 = vsel %vm628, %v610, 0
        %v771 = vsel %vm628, %v611, 0
        %v774 = vsel %vm628, %v612, 0
        %v777 = vsel %vm628, %v613, 0
        %v780 = vsel %vm628, %v614, 0
        %v783 = vsel %vm628, %v615, 0
        %v786 = vsel %vm628, %v616, 0
        %v789 = vsel %vm628, %v617, 0
        %v792 = vsel %vm628, %v618, 0
        %v795 = vsel %vm628, %v619, 0
        %v798 = vsel %vm628, %v620, 0
        %v801 = vsel %vm628, %v621, 0
        %v804 = vsel %vm628, %v622, 0
        %v807 = vsel %vm628, %v623, 0
        %v810 = vsel %vm628, %v624, 0
        %v813 = vsel %vm628, %v625, 0
        %v816 = vsel %vm628, %v626, 0
        %v819 = vsel %vm628, %v627, 0
        %821 = vmatprep.subr.mxu0 0.0
        %822 = vmatpush1.msra.mxu0 %v526
        %823 = vmatprep.subr.mxu0 0.0
        %824 = vmatpush1.msra.mxu0 %v531
        %825 = vmatprep.subr.mxu0 0.0
        %826 = vmatpush1.msra.mxu0 %v536
        %827 = vmatprep.subr.mxu0 0.0
        %828 = vmatpush1.msra.mxu0 %v541
        %829 = vmatprep.subr.mxu0 0.0
        %830 = vmatpush1.msra.mxu0 %v546
        %831 = vmatprep.subr.mxu0 0.0
        %832 = vmatpush1.msra.mxu0 %v551
        %833 = vmatprep.subr.mxu0 0.0
        %834 = vmatpush1.msra.mxu0 %v556
        %835 = vmatprep.subr.mxu0 0.0
        %836 = vmatpush1.msra.mxu0 %v561
        %837 = vmatprep.subr.mxu0 0.0
        %838 = vmatpush1.msra.mxu0 0.0
        %839 = vmatprep.subr.mxu0 0.0
        %840 = vmatpush1.msra.mxu0 0.0
        %841 = vmatprep.subr.mxu0 0.0
        %842 = vmatpush1.msra.mxu0 0.0
        %843 = vmatprep.subr.mxu0 0.0
        %844 = vmatpush1.msra.mxu0 0.0
        %845 = vmatprep.subr.mxu0 0.0
        %846 = vmatpush1.msra.mxu0 0.0
        %847 = vmatprep.subr.mxu0 0.0
        %848 = vmatpush1.msra.mxu0 0.0
        %849 = vmatprep.subr.mxu0 0.0
        %850 = vmatpush1.msra.mxu0 0.0
        %851 = vmatprep.subr.mxu0 0.0
        %852 = vmatpush1.msra.mxu0 0.0
        %853 = vmatprep.subr.mxu0 0.0
        %854 = vmatpush1.msra.mxu0 0.0
        %855 = vmatprep.subr.mxu0 0.0
        %856 = vmatpush1.msra.mxu0 0.0
        %857 = vmatprep.subr.mxu0 0.0
        %858 = vmatpush1.msra.mxu0 0.0
        %859 = vmatprep.subr.mxu0 0.0
        %860 = vmatpush1.msra.mxu0 0.0
        %861 = vmatprep.subr.mxu0 0.0
        %862 = vmatpush1.msra.mxu0 0.0
        %863 = vmatprep.subr.mxu0 0.0
        %864 = vmatpush1.msra.mxu0 0.0
        %865 = vmatprep.subr.mxu0 0.0
        %866 = vmatpush1.msra.mxu0 0.0
        %867 = vmatprep.subr.mxu0 0.0
        %868 = vmatpush1.msra.mxu0 0.0
        %869 = vmatprep.subr.mxu0 0.0
        %870 = vmatpush1.msra.mxu0 0.0
        %871 = vmatprep.subr.mxu0 0.0
        %872 = vmatpush1.msra.mxu0 0.0
        %873 = vmatprep.subr.mxu0 0.0
        %874 = vmatpush1.msra.mxu0 0.0
        %875 = vmatprep.subr.mxu0 0.0
        %876 = vmatpush1.msra.mxu0 0.0
        %877 = vmatprep.subr.mxu0 0.0
        %878 = vmatpush1.msra.mxu0 0.0
        %879 = vmatprep.subr.mxu0 0.0
        %880 = vmatpush1.msra.mxu0 0.0
        %881 = vmatprep.subr.mxu0 0.0
        %882 = vmatpush1.msra.mxu0 0.0
        %883 = vmatprep.subr.mxu0 0.0
        %884 = vmatpush1.msra.mxu0 0.0
        %885 = vmatprep.mubr.f32.mxu0 0.0
        %886 = vmatmul.mubr.f32.gmra.mrb[0].mxu0 %v630
        %v887 = vpop.f32.mrb[0].mxu0
        %v888 = vadd.f32 0.0, %v887
        %v889 = vpop.f32.mrb[0].mxu0
        %890 = vmatprep.mubr.f32.mxu0 0.0
        %891 = vmatmul.mubr.f32.gmra.mrb[0].mxu0 %v633
        %v892 = vpop.f32.mrb[0].mxu0
        %v893 = vadd.f32 0.0, %v892
        %v894 = vpop.f32.mrb[0].mxu0
        %895 = vmatprep.mubr.f32.mxu0 0.0
        %896 = vmatmul.mubr.f32.gmra.mrb[0].mxu0 %v636
        %v897 = vpop.f32.mrb[0].mxu0
        %v898 = vadd.f32 0.0, %v897
        %v899 = vpop.f32.mrb[0].mxu0
        %900 = vmatprep.mubr.f32.mxu0 0.0
        %901 = vmatmul.mubr.f32.gmra.mrb[0].mxu0 %v639
        %v902 = vpop.f32.mrb[0].mxu0
        %v903 = vadd.f32 0.0, %v902
        %v904 = vpop.f32.mrb[0].mxu0
        %905 = vmatprep.mubr.f32.mxu0 0.0
        %906 = vmatmul.mubr.f32.gmra.mrb[0].mxu0 %v642
        %v907 = vpop.f32.mrb[0].mxu0
        %v908 = vadd.f32 0.0, %v907
        %v909 = vpop.f32.mrb[0].mxu0
        %910 = vmatprep.mubr.f32.mxu0 0.0
        %911 = vmatmul.mubr.f32.gmra.mrb[0].mxu0 %v645
        %v912 = vpop.f32.mrb[0].mxu0
        %v913 = vadd.f32 0.0, %v912
        %v914 = vpop.f32.mrb[0].mxu0
        %915 = vmatprep.mubr.f32.mxu0 0.0
        %916 = vmatmul.mubr.f32.gmra.mrb[0].mxu0 %v648
        %v917 = vpop.f32.mrb[0].mxu0
        %v918 = vadd.f32 0.0, %v917
        %v919 = vpop.f32.mrb[0].mxu0
        %920 = vmatprep.mubr.f32.mxu0 0.0
        %921 = vmatmul.mubr.f32.gmra.mrb[0].mxu0 %v651
        %v922 = vpop.f32.mrb[0].mxu0
        %v923 = vadd.f32 0.0, %v922
        %v924 = vpop.f32.mrb[0].mxu0
        %925 = vmatprep.mubr.f32.mxu0 0.0
        %926 = vmatmul.mubr.f32.gmra.mrb[0].mxu0 %v654
        %v927 = vpop.f32.mrb[0].mxu0
        %v928 = vadd.f32 0.0, %v927
        %v929 = vpop.f32.mrb[0].mxu0
        %930 = vmatprep.mubr.f32.mxu0 0.0
        %931 = vmatmul.mubr.f32.gmra.mrb[0].mxu0 %v657
        %v932 = vpop.f32.mrb[0].mxu0
        %v933 = vadd.f32 0.0, %v932
        %v934 = vpop.f32.mrb[0].mxu0
        %935 = vmatprep.mubr.f32.mxu0 0.0
        %936 = vmatmul.mubr.f32.gmra.mrb[0].mxu0 %v660
        %v937 = vpop.f32.mrb[0].mxu0
        %v938 = vadd.f32 0.0, %v937
        %v939 = vpop.f32.mrb[0].mxu0
        %940 = vmatprep.mubr.f32.mxu0 0.0
        %941 = vmatmul.mubr.f32.gmra.mrb[0].mxu0 %v663
        %v942 = vpop.f32.mrb[0].mxu0
        %v943 = vadd.f32 0.0, %v942
        %v944 = vpop.f32.mrb[0].mxu0
        %945 = vmatprep.mubr.f32.mxu0 0.0
        %946 = vmatmul.mubr.f32.gmra.mrb[0].mxu0 %v666
        %v947 = vpop.f32.mrb[0].mxu0
        %v948 = vadd.f32 0.0, %v947
        %v949 = vpop.f32.mrb[0].mxu0
        %950 = vmatprep.mubr.f32.mxu0 0.0
        %951 = vmatmul.mubr.f32.gmra.mrb[0].mxu0 %v669
        %v952 = vpop.f32.mrb[0].mxu0
        %v953 = vadd.f32 0.0, %v952
        %v954 = vpop.f32.mrb[0].mxu0
        %955 = vmatprep.mubr.f32.mxu0 0.0
        %956 = vmatmul.mubr.f32.gmra.mrb[0].mxu0 %v672
        %v957 = vpop.f32.mrb[0].mxu0
        %v958 = vadd.f32 0.0, %v957
        %v959 = vpop.f32.mrb[0].mxu0
        %960 = vmatprep.mubr.f32.mxu0 0.0
        %961 = vmatmul.mubr.f32.gmra.mrb[0].mxu0 %v675
        %v962 = vpop.f32.mrb[0].mxu0
        %v963 = vadd.f32 0.0, %v962
        %v964 = vpop.f32.mrb[0].mxu0
        %965 = vmatprep.mubr.f32.mxu0 0.0
        %966 = vmatmul.mubr.f32.gmra.mrb[0].mxu0 %v678
        %v967 = vpop.f32.mrb[0].mxu0
        %v968 = vadd.f32 0.0, %v967
        %v969 = vpop.f32.mrb[0].mxu0
        %970 = vmatprep.mubr.f32.mxu0 0.0
        %971 = vmatmul.mubr.f32.gmra.mrb[0].mxu0 %v681
        %v972 = vpop.f32.mrb[0].mxu0
        %v973 = vadd.f32 0.0, %v972
        %v974 = vpop.f32.mrb[0].mxu0
        %975 = vmatprep.mubr.f32.mxu0 0.0
        %976 = vmatmul.mubr.f32.gmra.mrb[0].mxu0 %v684
        %v977 = vpop.f32.mrb[0].mxu0
        %v978 = vadd.f32 0.0, %v977
        %v979 = vpop.f32.mrb[0].mxu0
        %980 = vmatprep.mubr.f32.mxu0 0.0
        %981 = vmatmul.mubr.f32.gmra.mrb[0].mxu0 %v687
        %v982 = vpop.f32.mrb[0].mxu0
        %v983 = vadd.f32 0.0, %v982
        %v984 = vpop.f32.mrb[0].mxu0
        %985 = vmatprep.mubr.f32.mxu0 0.0
        %986 = vmatmul.mubr.f32.gmra.mrb[0].mxu0 %v690
        %v987 = vpop.f32.mrb[0].mxu0
        %v988 = vadd.f32 0.0, %v987
        %v989 = vpop.f32.mrb[0].mxu0
        %990 = vmatprep.mubr.f32.mxu0 0.0
        %991 = vmatmul.mubr.f32.gmra.mrb[0].mxu0 %v693
        %v992 = vpop.f32.mrb[0].mxu0
        %v993 = vadd.f32 0.0, %v992
        %v994 = vpop.f32.mrb[0].mxu0
        %995 = vmatprep.mubr.f32.mxu0 0.0
        %996 = vmatmul.mubr.f32.gmra.mrb[0].mxu0 %v696
        %v997 = vpop.f32.mrb[0].mxu0
        %v998 = vadd.f32 0.0, %v997
        %v999 = vpop.f32.mrb[0].mxu0
        %1000 = vmatprep.mubr.f32.mxu0 0.0
        %1001 = vmatmul.mubr.f32.gmra.mrb[0].mxu0 %v699
        %v1002 = vpop.f32.mrb[0].mxu0
        %v1003 = vadd.f32 0.0, %v1002
        %v1004 = vpop.f32.mrb[0].mxu0
        %1005 = vmatprep.mubr.f32.mxu0 0.0
        %1006 = vmatmul.mubr.f32.gmra.mrb[0].mxu0 %v702
        %v1007 = vpop.f32.mrb[0].mxu0
        %v1008 = vadd.f32 0.0, %v1007
        %v1009 = vpop.f32.mrb[0].mxu0
        %1010 = vmatprep.mubr.f32.mxu0 0.0
        %1011 = vmatmul.mubr.f32.gmra.mrb[0].mxu0 %v705
        %v1012 = vpop.f32.mrb[0].mxu0
        %v1013 = vadd.f32 0.0, %v1012
        %v1014 = vpop.f32.mrb[0].mxu0
        %1015 = vmatprep.mubr.f32.mxu0 0.0
        %1016 = vmatmul.mubr.f32.gmra.mrb[0].mxu0 %v708
        %v1017 = vpop.f32.mrb[0].mxu0
        %v1018 = vadd.f32 0.0, %v1017
        %v1019 = vpop.f32.mrb[0].mxu0
        %1020 = vmatprep.mubr.f32.mxu0 0.0
        %1021 = vmatmul.mubr.f32.gmra.mrb[0].mxu0 %v711
        %v1022 = vpop.f32.mrb[0].mxu0
        %v1023 = vadd.f32 0.0, %v1022
        %v1024 = vpop.f32.mrb[0].mxu0
        %1025 = vmatprep.mubr.f32.mxu0 0.0
        %1026 = vmatmul.mubr.f32.gmra.mrb[0].mxu0 %v714
        %v1027 = vpop.f32.mrb[0].mxu0
        %v1028 = vadd.f32 0.0, %v1027
        %v1029 = vpop.f32.mrb[0].mxu0
        %1030 = vmatprep.mubr.f32.mxu0 0.0
        %1031 = vmatmul.mubr.f32.gmra.mrb[0].mxu0 %v717
        %v1032 = vpop.f32.mrb[0].mxu0
        %v1033 = vadd.f32 0.0, %v1032
        %v1034 = vpop.f32.mrb[0].mxu0
        %1035 = vmatprep.mubr.f32.mxu0 0.0
        %1036 = vmatmul.mubr.f32.gmra.mrb[0].mxu0 %v720
        %v1037 = vpop.f32.mrb[0].mxu0
        %v1038 = vadd.f32 0.0, %v1037
        %v1039 = vpop.f32.mrb[0].mxu0
        %1040 = vmatprep.mubr.f32.mxu0 0.0
        %1041 = vmatmul.mubr.f32.gmra.mrb[0].mxu0 %v723
        %v1042 = vpop.f32.mrb[0].mxu0
        %v1043 = vadd.f32 0.0, %v1042
        %v1044 = vpop.f32.mrb[0].mxu0
        %1045 = vmatprep.mubr.f32.mxu0 0.0
        %1046 = vmatmul.mubr.f32.gmra.mrb[0].mxu0 %v726
        %v1047 = vpop.f32.mrb[0].mxu0
        %v1048 = vadd.f32 0.0, %v1047
        %v1049 = vpop.f32.mrb[0].mxu0
        %1050 = vmatprep.mubr.f32.mxu0 0.0
        %1051 = vmatmul.mubr.f32.gmra.mrb[0].mxu0 %v729
        %v1052 = vpop.f32.mrb[0].mxu0
        %v1053 = vadd.f32 0.0, %v1052
        %v1054 = vpop.f32.mrb[0].mxu0
        %1055 = vmatprep.mubr.f32.mxu0 0.0
        %1056 = vmatmul.mubr.f32.gmra.mrb[0].mxu0 %v732
        %v1057 = vpop.f32.mrb[0].mxu0
        %v1058 = vadd.f32 0.0, %v1057
        %v1059 = vpop.f32.mrb[0].mxu0
        %1060 = vmatprep.mubr.f32.mxu0 0.0
        %1061 = vmatmul.mubr.f32.gmra.mrb[0].mxu0 %v735
        %v1062 = vpop.f32.mrb[0].mxu0
        %v1063 = vadd.f32 0.0, %v1062
        %v1064 = vpop.f32.mrb[0].mxu0
        %1065 = vmatprep.mubr.f32.mxu0 0.0
        %1066 = vmatmul.mubr.f32.gmra.mrb[0].mxu0 %v738
        %v1067 = vpop.f32.mrb[0].mxu0
        %v1068 = vadd.f32 0.0, %v1067
        %v1069 = vpop.f32.mrb[0].mxu0
        %1070 = vmatprep.mubr.f32.mxu0 0.0
        %1071 = vmatmul.mubr.f32.gmra.mrb[0].mxu0 %v741
        %v1072 = vpop.f32.mrb[0].mxu0
        %v1073 = vadd.f32 0.0, %v1072
        %v1074 = vpop.f32.mrb[0].mxu0
        %1075 = vmatprep.mubr.f32.mxu0 0.0
        %1076 = vmatmul.mubr.f32.gmra.mrb[0].mxu0 %v744
        %v1077 = vpop.f32.mrb[0].mxu0
        %v1078 = vadd.f32 0.0, %v1077
        %v1079 = vpop.f32.mrb[0].mxu0
        %1080 = vmatprep.mubr.f32.mxu0 0.0
        %1081 = vmatmul.mubr.f32.gmra.mrb[0].mxu0 %v747
        %v1082 = vpop.f32.mrb[0].mxu0
        %v1083 = vadd.f32 0.0, %v1082
        %v1084 = vpop.f32.mrb[0].mxu0
        %1085 = vmatprep.mubr.f32.mxu0 0.0
        %1086 = vmatmul.mubr.f32.gmra.mrb[0].mxu0 %v750
        %v1087 = vpop.f32.mrb[0].mxu0
        %v1088 = vadd.f32 0.0, %v1087
        %v1089 = vpop.f32.mrb[0].mxu0
        %1090 = vmatprep.mubr.f32.mxu0 0.0
        %1091 = vmatmul.mubr.f32.gmra.mrb[0].mxu0 %v753
        %v1092 = vpop.f32.mrb[0].mxu0
        %v1093 = vadd.f32 0.0, %v1092
        %v1094 = vpop.f32.mrb[0].mxu0
        %1095 = vmatprep.mubr.f32.mxu0 0.0
        %1096 = vmatmul.mubr.f32.gmra.mrb[0].mxu0 %v756
        %v1097 = vpop.f32.mrb[0].mxu0
        %v1098 = vadd.f32 0.0, %v1097
        %v1099 = vpop.f32.mrb[0].mxu0
        %1100 = vmatprep.mubr.f32.mxu0 0.0
        %1101 = vmatmul.mubr.f32.gmra.mrb[0].mxu0 %v759
        %v1102 = vpop.f32.mrb[0].mxu0
        %v1103 = vadd.f32 0.0, %v1102
        %v1104 = vpop.f32.mrb[0].mxu0
        %1105 = vmatprep.mubr.f32.mxu0 0.0
        %1106 = vmatmul.mubr.f32.gmra.mrb[0].mxu0 %v762
        %v1107 = vpop.f32.mrb[0].mxu0
        %v1108 = vadd.f32 0.0, %v1107
        %v1109 = vpop.f32.mrb[0].mxu0
        %1110 = vmatprep.mubr.f32.mxu0 0.0
        %1111 = vmatmul.mubr.f32.gmra.mrb[0].mxu0 %v765
        %v1112 = vpop.f32.mrb[0].mxu0
        %v1113 = vadd.f32 0.0, %v1112
        %v1114 = vpop.f32.mrb[0].mxu0
        %1115 = vmatprep.mubr.f32.mxu0 0.0
        %1116 = vmatmul.mubr.f32.gmra.mrb[0].mxu0 %v768
        %v1117 = vpop.f32.mrb[0].mxu0
        %v1118 = vadd.f32 0.0, %v1117
        %v1119 = vpop.f32.mrb[0].mxu0
        %1120 = vmatprep.mubr.f32.mxu0 0.0
        %1121 = vmatmul.mubr.f32.gmra.mrb[0].mxu0 %v771
        %v1122 = vpop.f32.mrb[0].mxu0
        %v1123 = vadd.f32 0.0, %v1122
        %v1124 = vpop.f32.mrb[0].mxu0
        %1125 = vmatprep.mubr.f32.mxu0 0.0
        %1126 = vmatmul.mubr.f32.gmra.mrb[0].mxu0 %v774
        %v1127 = vpop.f32.mrb[0].mxu0
        %v1128 = vadd.f32 0.0, %v1127
        %v1129 = vpop.f32.mrb[0].mxu0
        %1130 = vmatprep.mubr.f32.mxu0 0.0
        %1131 = vmatmul.mubr.f32.gmra.mrb[0].mxu0 %v777
        %v1132 = vpop.f32.mrb[0].mxu0
        %v1133 = vadd.f32 0.0, %v1132
        %v1134 = vpop.f32.mrb[0].mxu0
        %1135 = vmatprep.mubr.f32.mxu0 0.0
        %1136 = vmatmul.mubr.f32.gmra.mrb[0].mxu0 %v780
        %v1137 = vpop.f32.mrb[0].mxu0
        %v1138 = vadd.f32 0.0, %v1137
        %v1139 = vpop.f32.mrb[0].mxu0
        %1140 = vmatprep.mubr.f32.mxu0 0.0
        %1141 = vmatmul.mubr.f32.gmra.mrb[0].mxu0 %v783
        %v1142 = vpop.f32.mrb[0].mxu0
        %v1143 = vadd.f32 0.0, %v1142
        %v1144 = vpop.f32.mrb[0].mxu0
        %1145 = vmatprep.mubr.f32.mxu0 0.0
        %1146 = vmatmul.mubr.f32.gmra.mrb[0].mxu0 %v786
        %v1147 = vpop.f32.mrb[0].mxu0
        %v1148 = vadd.f32 0.0, %v1147
        %v1149 = vpop.f32.mrb[0].mxu0
        %1150 = vmatprep.mubr.f32.mxu0 0.0
        %1151 = vmatmul.mubr.f32.gmra.mrb[0].mxu0 %v789
        %v1152 = vpop.f32.mrb[0].mxu0
        %v1153 = vadd.f32 0.0, %v1152
        %v1154 = vpop.f32.mrb[0].mxu0
        %1155 = vmatprep.mubr.f32.mxu0 0.0
        %1156 = vmatmul.mubr.f32.gmra.mrb[0].mxu0 %v792
        %v1157 = vpop.f32.mrb[0].mxu0
        %v1158 = vadd.f32 0.0, %v1157
        %v1159 = vpop.f32.mrb[0].mxu0
        %1160 = vmatprep.mubr.f32.mxu0 0.0
        %1161 = vmatmul.mubr.f32.gmra.mrb[0].mxu0 %v795
        %v1162 = vpop.f32.mrb[0].mxu0
        %v1163 = vadd.f32 0.0, %v1162
        %v1164 = vpop.f32.mrb[0].mxu0
        %1165 = vmatprep.mubr.f32.mxu0 0.0
        %1166 = vmatmul.mubr.f32.gmra.mrb[0].mxu0 %v798
        %v1167 = vpop.f32.mrb[0].mxu0
        %v1168 = vadd.f32 0.0, %v1167
        %v1169 = vpop.f32.mrb[0].mxu0
        %1170 = vmatprep.mubr.f32.mxu0 0.0
        %1171 = vmatmul.mubr.f32.gmra.mrb[0].mxu0 %v801
        %v1172 = vpop.f32.mrb[0].mxu0
        %v1173 = vadd.f32 0.0, %v1172
        %v1174 = vpop.f32.mrb[0].mxu0
        %1175 = vmatprep.mubr.f32.mxu0 0.0
        %1176 = vmatmul.mubr.f32.gmra.mrb[0].mxu0 %v804
        %v1177 = vpop.f32.mrb[0].mxu0
        %v1178 = vadd.f32 0.0, %v1177
        %v1179 = vpop.f32.mrb[0].mxu0
        %1180 = vmatprep.mubr.f32.mxu0 0.0
        %1181 = vmatmul.mubr.f32.gmra.mrb[0].mxu0 %v807
        %v1182 = vpop.f32.mrb[0].mxu0
        %v1183 = vadd.f32 0.0, %v1182
        %v1184 = vpop.f32.mrb[0].mxu0
        %1185 = vmatprep.mubr.f32.mxu0 0.0
        %1186 = vmatmul.mubr.f32.gmra.mrb[0].mxu0 %v810
        %v1187 = vpop.f32.mrb[0].mxu0
        %v1188 = vadd.f32 0.0, %v1187
        %v1189 = vpop.f32.mrb[0].mxu0
        %1190 = vmatprep.mubr.f32.mxu0 0.0
        %1191 = vmatmul.mubr.f32.gmra.mrb[0].mxu0 %v813
        %v1192 = vpop.f32.mrb[0].mxu0
        %v1193 = vadd.f32 0.0, %v1192
        %v1194 = vpop.f32.mrb[0].mxu0
        %1195 = vmatprep.mubr.f32.mxu0 0.0
        %1196 = vmatmul.mubr.f32.gmra.mrb[0].mxu0 %v816
        %v1197 = vpop.f32.mrb[0].mxu0
        %v1198 = vadd.f32 0.0, %v1197
        %v1199 = vpop.f32.mrb[0].mxu0
        %1200 = vmatprep.mubr.f32.mxu0 0.0
        %1201 = vmatmul.mubr.f32.gmra.mrb[0].mxu0 %v819
        %v1202 = vpop.f32.mrb[0].mxu0
        %v1203 = vadd.f32 0.0, %v1202
        %v1204 = vpop.f32.mrb[0].mxu0
        %1205 = vdwg.mxu0
        %v1206 = vmax.f32 %v888, %v928
        %v1207 = vmax.f32 %v893, %v933
        %v1208 = vmax.f32 %v898, %v938
        %v1209 = vmax.f32 %v903, %v943
        %v1210 = vmax.f32 %v908, %v948
        %v1211 = vmax.f32 %v913, %v953
        %v1212 = vmax.f32 %v918, %v958
        %v1213 = vmax.f32 %v923, %v963
        %v1214 = vmax.f32 %v1206, %v968
        %v1215 = vmax.f32 %v1207, %v973
        %v1216 = vmax.f32 %v1208, %v978
        %v1217 = vmax.f32 %v1209, %v983
        %v1218 = vmax.f32 %v1210, %v988
        %v1219 = vmax.f32 %v1211, %v993
        %v1220 = vmax.f32 %v1212, %v998
        %v1221 = vmax.f32 %v1213, %v1003
        %v1222 = vmax.f32 %v1214, %v1008
        %v1223 = vmax.f32 %v1215, %v1013
        %v1224 = vmax.f32 %v1216, %v1018
        %v1225 = vmax.f32 %v1217, %v1023
        %v1226 = vmax.f32 %v1218, %v1028
        %v1227 = vmax.f32 %v1219, %v1033
        %v1228 = vmax.f32 %v1220, %v1038
        %v1229 = vmax.f32 %v1221, %v1043
        %v1230 = vmax.f32 %v1222, %v1048
        %v1231 = vmax.f32 %v1223, %v1053
        %v1232 = vmax.f32 %v1224, %v1058
        %v1233 = vmax.f32 %v1225, %v1063
        %v1234 = vmax.f32 %v1226, %v1068
        %v1235 = vmax.f32 %v1227, %v1073
        %v1236 = vmax.f32 %v1228, %v1078
        %v1237 = vmax.f32 %v1229, %v1083
        %v1238 = vmax.f32 %v1230, %v1088
        %v1239 = vmax.f32 %v1231, %v1093
        %v1240 = vmax.f32 %v1232, %v1098
        %v1241 = vmax.f32 %v1233, %v1103
        %v1242 = vmax.f32 %v1234, %v1108
        %v1243 = vmax.f32 %v1235, %v1113
        %v1244 = vmax.f32 %v1236, %v1118
        %v1245 = vmax.f32 %v1237, %v1123
        %v1246 = vmax.f32 %v1238, %v1128
        %v1247 = vmax.f32 %v1239, %v1133
        %v1248 = vmax.f32 %v1240, %v1138
        %v1249 = vmax.f32 %v1241, %v1143
        %v1250 = vmax.f32 %v1242, %v1148
        %v1251 = vmax.f32 %v1243, %v1153
        %v1252 = vmax.f32 %v1244, %v1158
        %v1253 = vmax.f32 %v1245, %v1163
        %v1254 = vmax.f32 %v1246, %v1168
        %v1255 = vmax.f32 %v1247, %v1173
        %v1256 = vmax.f32 %v1248, %v1178
        %v1257 = vmax.f32 %v1249, %v1183
        %v1258 = vmax.f32 %v1250, %v1188
        %v1259 = vmax.f32 %v1251, %v1193
        %v1260 = vmax.f32 %v1252, %v1198
        %v1261 = vmax.f32 %v1253, %v1203
        %v1262 = vld [vmem:[%s5] sm:$0xff]
        %v1263 = vld [vmem:[%s5 + $0x8] sm:$0xff]
        %v1264 = vld [vmem:[%s5 + $0x10] sm:$0xff]
        %v1265 = vld [vmem:[%s5 + $0x18] sm:$0xff]
        %v1266 = vld [vmem:[%s5 + $0x20] sm:$0xff]
        %v1267 = vld [vmem:[%s5 + $0x28] sm:$0xff]
        %v1268 = vld [vmem:[%s5 + $0x30] sm:$0xff]
        %v1269 = vld [vmem:[%s5 + $0x38] sm:$0xff]
        %v1270 = vld [vmem:[%s5 + $0x40] sm:$0xff]
        %v1271 = vld [vmem:[%s5 + $0x48] sm:$0xff]
        %v1272 = vld [vmem:[%s5 + $0x50] sm:$0xff]
        %v1273 = vld [vmem:[%s5 + $0x58] sm:$0xff]
        %v1274 = vld [vmem:[%s5 + $0x60] sm:$0xff]
        %v1275 = vld [vmem:[%s5 + $0x68] sm:$0xff]
        %v1276 = vld [vmem:[%s5 + $0x70] sm:$0xff]
        %v1277 = vld [vmem:[%s5 + $0x78] sm:$0xff]
        %v1278 = vld [vmem:[%s5 + $0x80] sm:$0xff]
        %v1279 = vld [vmem:[%s5 + $0x88] sm:$0xff]
        %v1280 = vld [vmem:[%s5 + $0x90] sm:$0xff]
        %v1281 = vld [vmem:[%s5 + $0x98] sm:$0xff]
        %v1282 = vld [vmem:[%s5 + $0xa0] sm:$0xff]
        %v1283 = vld [vmem:[%s5 + $0xa8] sm:$0xff]
        %v1284 = vld [vmem:[%s5 + $0xb0] sm:$0xff]
        %v1285 = vld [vmem:[%s5 + $0xb8] sm:$0xff]
        %v1286 = vld [vmem:[%s5 + $0xc0] sm:$0xff]
        %v1287 = vld [vmem:[%s5 + $0xc8] sm:$0xff]
        %v1288 = vld [vmem:[%s5 + $0xd0] sm:$0xff]
        %v1289 = vld [vmem:[%s5 + $0xd8] sm:$0xff]
        %v1290 = vld [vmem:[%s5 + $0xe0] sm:$0xff]
        %v1291 = vld [vmem:[%s5 + $0xe8] sm:$0xff]
        %v1292 = vld [vmem:[%s5 + $0xf0] sm:$0xff]
        %v1293 = vld [vmem:[%s5 + $0xf8] sm:$0xff]
        %v1294 = vld [vmem:[%s5 + $0x100] sm:$0xff]
        %v1295 = vld [vmem:[%s5 + $0x108] sm:$0xff]
        %v1296 = vld [vmem:[%s5 + $0x110] sm:$0xff]
        %v1297 = vld [vmem:[%s5 + $0x118] sm:$0xff]
        %v1298 = vld [vmem:[%s5 + $0x120] sm:$0xff]
        %v1299 = vld [vmem:[%s5 + $0x128] sm:$0xff]
        %v1300 = vld [vmem:[%s5 + $0x130] sm:$0xff]
        %v1301 = vld [vmem:[%s5 + $0x138] sm:$0xff]
        %v1302 = vld [vmem:[%s5 + $0x140] sm:$0xff]
        %v1303 = vld [vmem:[%s5 + $0x148] sm:$0xff]
        %v1304 = vld [vmem:[%s5 + $0x150] sm:$0xff]
        %v1305 = vld [vmem:[%s5 + $0x158] sm:$0xff]
        %v1306 = vld [vmem:[%s5 + $0x160] sm:$0xff]
        %v1307 = vld [vmem:[%s5 + $0x168] sm:$0xff]
        %v1308 = vld [vmem:[%s5 + $0x170] sm:$0xff]
        %v1309 = vld [vmem:[%s5 + $0x178] sm:$0xff]
        %v1310 = vld [vmem:[%s5 + $0x180] sm:$0xff]
        %v1311 = vld [vmem:[%s5 + $0x188] sm:$0xff]
        %v1312 = vld [vmem:[%s5 + $0x190] sm:$0xff]
        %v1313 = vld [vmem:[%s5 + $0x198] sm:$0xff]
        %v1314 = vld [vmem:[%s5 + $0x1a0] sm:$0xff]
        %v1315 = vld [vmem:[%s5 + $0x1a8] sm:$0xff]
        %v1316 = vld [vmem:[%s5 + $0x1b0] sm:$0xff]
        %v1317 = vld [vmem:[%s5 + $0x1b8] sm:$0xff]
        %v1318 = vld [vmem:[%s5 + $0x1c0] sm:$0xff]
        %v1319 = vld [vmem:[%s5 + $0x1c8] sm:$0xff]
        %v1320 = vld [vmem:[%s5 + $0x1d0] sm:$0xff]
        %v1321 = vld [vmem:[%s5 + $0x1d8] sm:$0xff]
        %v1322 = vld [vmem:[%s5 + $0x1e0] sm:$0xff]
        %v1323 = vld [vmem:[%s5 + $0x1e8] sm:$0xff]
        %v1324 = vld [vmem:[%s5 + $0x1f0] sm:$0xff]
        %v1325 = vld [vmem:[%s5 + $0x1f8] sm:$0xff]
        %v1327 = vsel %vm628, %v1262, 0
        %v1330 = vsel %vm628, %v1263, 0
        %v1333 = vsel %vm628, %v1264, 0
        %v1336 = vsel %vm628, %v1265, 0
        %v1339 = vsel %vm628, %v1266, 0
        %v1342 = vsel %vm628, %v1267, 0
        %v1345 = vsel %vm628, %v1268, 0
        %v1348 = vsel %vm628, %v1269, 0
        %v1351 = vsel %vm628, %v1270, 0
        %v1354 = vsel %vm628, %v1271, 0
        %v1357 = vsel %vm628, %v1272, 0
        %v1360 = vsel %vm628, %v1273, 0
        %v1363 = vsel %vm628, %v1274, 0
        %v1366 = vsel %vm628, %v1275, 0
        %v1369 = vsel %vm628, %v1276, 0
        %v1372 = vsel %vm628, %v1277, 0
        %v1375 = vsel %vm628, %v1278, 0
        %v1378 = vsel %vm628, %v1279, 0
        %v1381 = vsel %vm628, %v1280, 0
        %v1384 = vsel %vm628, %v1281, 0
        %v1387 = vsel %vm628, %v1282, 0
        %v1390 = vsel %vm628, %v1283, 0
        %v1393 = vsel %vm628, %v1284, 0
        %v1396 = vsel %vm628, %v1285, 0
        %v1399 = vsel %vm628, %v1286, 0
        %v1402 = vsel %vm628, %v1287, 0
        %v1405 = vsel %vm628, %v1288, 0
        %v1408 = vsel %vm628, %v1289, 0
        %v1411 = vsel %vm628, %v1290, 0
        %v1414 = vsel %vm628, %v1291, 0
        %v1417 = vsel %vm628, %v1292, 0
        %v1420 = vsel %vm628, %v1293, 0
        %v1423 = vsel %vm628, %v1294, 0
        %v1426 = vsel %vm628, %v1295, 0
        %v1429 = vsel %vm628, %v1296, 0
        %v1432 = vsel %vm628, %v1297, 0
        %v1435 = vsel %vm628, %v1298, 0
        %v1438 = vsel %vm628, %v1299, 0
        %v1441 = vsel %vm628, %v1300, 0
        %v1444 = vsel %vm628, %v1301, 0
        %v1447 = vsel %vm628, %v1302, 0
        %v1450 = vsel %vm628, %v1303, 0
        %v1453 = vsel %vm628, %v1304, 0
        %v1456 = vsel %vm628, %v1305, 0
        %v1459 = vsel %vm628, %v1306, 0
        %v1462 = vsel %vm628, %v1307, 0
        %v1465 = vsel %vm628, %v1308, 0
        %v1468 = vsel %vm628, %v1309, 0
        %v1471 = vsel %vm628, %v1310, 0
        %v1474 = vsel %vm628, %v1311, 0
        %v1477 = vsel %vm628, %v1312, 0
        %v1480 = vsel %vm628, %v1313, 0
        %v1483 = vsel %vm628, %v1314, 0
        %v1486 = vsel %vm628, %v1315, 0
        %v1489 = vsel %vm628, %v1316, 0
        %v1492 = vsel %vm628, %v1317, 0
        %v1495 = vsel %vm628, %v1318, 0
        %v1498 = vsel %vm628, %v1319, 0
        %v1501 = vsel %vm628, %v1320, 0
        %v1504 = vsel %vm628, %v1321, 0
        %v1507 = vsel %vm628, %v1322, 0
        %v1510 = vsel %vm628, %v1323, 0
        %v1513 = vsel %vm628, %v1324, 0
        %v1516 = vsel %vm628, %v1325, 0
        %1518 = vmatprep.subr.mxu0 0.0
        %1519 = vmatpush1.msra.mxu0 %v1254
        %1520 = vmatprep.subr.mxu0 0.0
        %1521 = vmatpush1.msra.mxu0 %v1255
        %1522 = vmatprep.subr.mxu0 0.0
        %1523 = vmatpush1.msra.mxu0 %v1256
        %1524 = vmatprep.subr.mxu0 0.0
        %1525 = vmatpush1.msra.mxu0 %v1257
        %1526 = vmatprep.subr.mxu0 0.0
        %1527 = vmatpush1.msra.mxu0 %v1258
        %1528 = vmatprep.subr.mxu0 0.0
        %1529 = vmatpush1.msra.mxu0 %v1259
        %1530 = vmatprep.subr.mxu0 0.0
        %1531 = vmatpush1.msra.mxu0 %v1260
        %1532 = vmatprep.subr.mxu0 0.0
        %1533 = vmatpush1.msra.mxu0 %v1261
        %1534 = vmatprep.subr.mxu0 0.0
        %1535 = vmatpush1.msra.mxu0 0.0
        %1536 = vmatprep.subr.mxu0 0.0
        %1537 = vmatpush1.msra.mxu0 0.0
        %1538 = vmatprep.subr.mxu0 0.0
        %1539 = vmatpush1.msra.mxu0 0.0
        %1540 = vmatprep.subr.mxu0 0.0
        %1541 = vmatpush1.msra.mxu0 0.0
        %1542 = vmatprep.subr.mxu0 0.0
        %1543 = vmatpush1.msra.mxu0 0.0
        %1544 = vmatprep.subr.mxu0 0.0
        %1545 = vmatpush1.msra.mxu0 0.0
        %1546 = vmatprep.subr.mxu0 0.0
        %1547 = vmatpush1.msra.mxu0 0.0
        %1548 = vmatprep.subr.mxu0 0.0
        %1549 = vmatpush1.msra.mxu0 0.0
        %1550 = vmatprep.subr.mxu0 0.0
        %1551 = vmatpush1.msra.mxu0 0.0
        %1552 = vmatprep.subr.mxu0 0.0
        %1553 = vmatpush1.msra.mxu0 0.0
        %1554 = vmatprep.subr.mxu0 0.0
        %1555 = vmatpush1.msra.mxu0 0.0
        %1556 = vmatprep.subr.mxu0 0.0
        %1557 = vmatpush1.msra.mxu0 0.0
        %1558 = vmatprep.subr.mxu0 0.0
        %1559 = vmatpush1.msra.mxu0 0.0
        %1560 = vmatprep.subr.mxu0 0.0
        %1561 = vmatpush1.msra.mxu0 0.0
        %1562 = vmatprep.subr.mxu0 0.0
        %1563 = vmatpush1.msra.mxu0 0.0
        %1564 = vmatprep.subr.mxu0 0.0
        %1565 = vmatpush1.msra.mxu0 0.0
        %1566 = vmatprep.subr.mxu0 0.0
        %1567 = vmatpush1.msra.mxu0 0.0
        %1568 = vmatprep.subr.mxu0 0.0
        %1569 = vmatpush1.msra.mxu0 0.0
        %1570 = vmatprep.subr.mxu0 0.0
        %1571 = vmatpush1.msra.mxu0 0.0
        %1572 = vmatprep.subr.mxu0 0.0
        %1573 = vmatpush1.msra.mxu0 0.0
        %1574 = vmatprep.subr.mxu0 0.0
        %1575 = vmatpush1.msra.mxu0 0.0
        %1576 = vmatprep.subr.mxu0 0.0
        %1577 = vmatpush1.msra.mxu0 0.0
        %1578 = vmatprep.subr.mxu0 0.0
        %1579 = vmatpush1.msra.mxu0 0.0
        %1580 = vmatprep.subr.mxu0 0.0
        %1581 = vmatpush1.msra.mxu0 0.0
        %1582 = vmatprep.mubr.f32.mxu0 0.0
        %1583 = vmatmul.mubr.f32.gmra.mrb[0].mxu0 %v1327
        %v1584 = vpop.f32.mrb[0].mxu0
        %v1585 = vadd.f32 0.0, %v1584
        %v1586 = vpop.f32.mrb[0].mxu0
        %1587 = vmatprep.mubr.f32.mxu0 0.0
        %1588 = vmatmul.mubr.f32.gmra.mrb[0].mxu0 %v1330
        %v1589 = vpop.f32.mrb[0].mxu0
        %v1590 = vadd.f32 0.0, %v1589
        %v1591 = vpop.f32.mrb[0].mxu0
        %1592 = vmatprep.mubr.f32.mxu0 0.0
        %1593 = vmatmul.mubr.f32.gmra.mrb[0].mxu0 %v1333
        %v1594 = vpop.f32.mrb[0].mxu0
        %v1595 = vadd.f32 0.0, %v1594
        %v1596 = vpop.f32.mrb[0].mxu0
        %1597 = vmatprep.mubr.f32.mxu0 0.0
        %1598 = vmatmul.mubr.f32.gmra.mrb[0].mxu0 %v1336
        %v1599 = vpop.f32.mrb[0].mxu0
        %v1600 = vadd.f32 0.0, %v1599
        %v1601 = vpop.f32.mrb[0].mxu0
        %1602 = vmatprep.mubr.f32.mxu0 0.0
        %1603 = vmatmul.mubr.f32.gmra.mrb[0].mxu0 %v1339
        %v1604 = vpop.f32.mrb[0].mxu0
        %v1605 = vadd.f32 0.0, %v1604
        %v1606 = vpop.f32.mrb[0].mxu0
        %1607 = vmatprep.mubr.f32.mxu0 0.0
        %1608 = vmatmul.mubr.f32.gmra.mrb[0].mxu0 %v1342
        %v1609 = vpop.f32.mrb[0].mxu0
        %v1610 = vadd.f32 0.0, %v1609
        %v1611 = vpop.f32.mrb[0].mxu0
        %1612 = vmatprep.mubr.f32.mxu0 0.0
        %1613 = vmatmul.mubr.f32.gmra.mrb[0].mxu0 %v1345
        %v1614 = vpop.f32.mrb[0].mxu0
        %v1615 = vadd.f32 0.0, %v1614
        %v1616 = vpop.f32.mrb[0].mxu0
        %1617 = vmatprep.mubr.f32.mxu0 0.0
        %1618 = vmatmul.mubr.f32.gmra.mrb[0].mxu0 %v1348
        %v1619 = vpop.f32.mrb[0].mxu0
        %v1620 = vadd.f32 0.0, %v1619
        %v1621 = vpop.f32.mrb[0].mxu0
        %1622 = vmatprep.mubr.f32.mxu0 0.0
        %1623 = vmatmul.mubr.f32.gmra.mrb[0].mxu0 %v1351
        %v1624 = vpop.f32.mrb[0].mxu0
        %v1625 = vadd.f32 0.0, %v1624
        %v1626 = vpop.f32.mrb[0].mxu0
        %1627 = vmatprep.mubr.f32.mxu0 0.0
        %1628 = vmatmul.mubr.f32.gmra.mrb[0].mxu0 %v1354
        %v1629 = vpop.f32.mrb[0].mxu0
        %v1630 = vadd.f32 0.0, %v1629
        %v1631 = vpop.f32.mrb[0].mxu0
        %1632 = vmatprep.mubr.f32.mxu0 0.0
        %1633 = vmatmul.mubr.f32.gmra.mrb[0].mxu0 %v1357
        %v1634 = vpop.f32.mrb[0].mxu0
        %v1635 = vadd.f32 0.0, %v1634
        %v1636 = vpop.f32.mrb[0].mxu0
        %1637 = vmatprep.mubr.f32.mxu0 0.0
        %1638 = vmatmul.mubr.f32.gmra.mrb[0].mxu0 %v1360
        %v1639 = vpop.f32.mrb[0].mxu0
        %v1640 = vadd.f32 0.0, %v1639
        %v1641 = vpop.f32.mrb[0].mxu0
        %1642 = vmatprep.mubr.f32.mxu0 0.0
        %1643 = vmatmul.mubr.f32.gmra.mrb[0].mxu0 %v1363
        %v1644 = vpop.f32.mrb[0].mxu0
        %v1645 = vadd.f32 0.0, %v1644
        %v1646 = vpop.f32.mrb[0].mxu0
        %1647 = vmatprep.mubr.f32.mxu0 0.0
        %1648 = vmatmul.mubr.f32.gmra.mrb[0].mxu0 %v1366
        %v1649 = vpop.f32.mrb[0].mxu0
        %v1650 = vadd.f32 0.0, %v1649
        %v1651 = vpop.f32.mrb[0].mxu0
        %1652 = vmatprep.mubr.f32.mxu0 0.0
        %1653 = vmatmul.mubr.f32.gmra.mrb[0].mxu0 %v1369
        %v1654 = vpop.f32.mrb[0].mxu0
        %v1655 = vadd.f32 0.0, %v1654
        %v1656 = vpop.f32.mrb[0].mxu0
        %1657 = vmatprep.mubr.f32.mxu0 0.0
        %1658 = vmatmul.mubr.f32.gmra.mrb[0].mxu0 %v1372
        %v1659 = vpop.f32.mrb[0].mxu0
        %v1660 = vadd.f32 0.0, %v1659
        %v1661 = vpop.f32.mrb[0].mxu0
        %1662 = vmatprep.mubr.f32.mxu0 0.0
        %1663 = vmatmul.mubr.f32.gmra.mrb[0].mxu0 %v1375
        %v1664 = vpop.f32.mrb[0].mxu0
        %v1665 = vadd.f32 0.0, %v1664
        %v1666 = vpop.f32.mrb[0].mxu0
        %1667 = vmatprep.mubr.f32.mxu0 0.0
        %1668 = vmatmul.mubr.f32.gmra.mrb[0].mxu0 %v1378
        %v1669 = vpop.f32.mrb[0].mxu0
        %v1670 = vadd.f32 0.0, %v1669
        %v1671 = vpop.f32.mrb[0].mxu0
        %1672 = vmatprep.mubr.f32.mxu0 0.0
        %1673 = vmatmul.mubr.f32.gmra.mrb[0].mxu0 %v1381
        %v1674 = vpop.f32.mrb[0].mxu0
        %v1675 = vadd.f32 0.0, %v1674
        %v1676 = vpop.f32.mrb[0].mxu0
        %1677 = vmatprep.mubr.f32.mxu0 0.0
        %1678 = vmatmul.mubr.f32.gmra.mrb[0].mxu0 %v1384
        %v1679 = vpop.f32.mrb[0].mxu0
        %v1680 = vadd.f32 0.0, %v1679
        %v1681 = vpop.f32.mrb[0].mxu0
        %1682 = vmatprep.mubr.f32.mxu0 0.0
        %1683 = vmatmul.mubr.f32.gmra.mrb[0].mxu0 %v1387
        %v1684 = vpop.f32.mrb[0].mxu0
        %v1685 = vadd.f32 0.0, %v1684
        %v1686 = vpop.f32.mrb[0].mxu0
        %1687 = vmatprep.mubr.f32.mxu0 0.0
        %1688 = vmatmul.mubr.f32.gmra.mrb[0].mxu0 %v1390
        %v1689 = vpop.f32.mrb[0].mxu0
        %v1690 = vadd.f32 0.0, %v1689
        %v1691 = vpop.f32.mrb[0].mxu0
        %1692 = vmatprep.mubr.f32.mxu0 0.0
        %1693 = vmatmul.mubr.f32.gmra.mrb[0].mxu0 %v1393
        %v1694 = vpop.f32.mrb[0].mxu0
        %v1695 = vadd.f32 0.0, %v1694
        %v1696 = vpop.f32.mrb[0].mxu0
        %1697 = vmatprep.mubr.f32.mxu0 0.0
        %1698 = vmatmul.mubr.f32.gmra.mrb[0].mxu0 %v1396
        %v1699 = vpop.f32.mrb[0].mxu0
        %v1700 = vadd.f32 0.0, %v1699
        %v1701 = vpop.f32.mrb[0].mxu0
        %1702 = vmatprep.mubr.f32.mxu0 0.0
        %1703 = vmatmul.mubr.f32.gmra.mrb[0].mxu0 %v1399
        %v1704 = vpop.f32.mrb[0].mxu0
        %v1705 = vadd.f32 0.0, %v1704
        %v1706 = vpop.f32.mrb[0].mxu0
        %1707 = vmatprep.mubr.f32.mxu0 0.0
        %1708 = vmatmul.mubr.f32.gmra.mrb[0].mxu0 %v1402
        %v1709 = vpop.f32.mrb[0].mxu0
        %v1710 = vadd.f32 0.0, %v1709
        %v1711 = vpop.f32.mrb[0].mxu0
        %1712 = vmatprep.mubr.f32.mxu0 0.0
        %1713 = vmatmul.mubr.f32.gmra.mrb[0].mxu0 %v1405
        %v1714 = vpop.f32.mrb[0].mxu0
        %v1715 = vadd.f32 0.0, %v1714
        %v1716 = vpop.f32.mrb[0].mxu0
        %1717 = vmatprep.mubr.f32.mxu0 0.0
        %1718 = vmatmul.mubr.f32.gmra.mrb[0].mxu0 %v1408
        %v1719 = vpop.f32.mrb[0].mxu0
        %v1720 = vadd.f32 0.0, %v1719
        %v1721 = vpop.f32.mrb[0].mxu0
        %1722 = vmatprep.mubr.f32.mxu0 0.0
        %1723 = vmatmul.mubr.f32.gmra.mrb[0].mxu0 %v1411
        %v1724 = vpop.f32.mrb[0].mxu0
        %v1725 = vadd.f32 0.0, %v1724
        %v1726 = vpop.f32.mrb[0].mxu0
        %1727 = vmatprep.mubr.f32.mxu0 0.0
        %1728 = vmatmul.mubr.f32.gmra.mrb[0].mxu0 %v1414
        %v1729 = vpop.f32.mrb[0].mxu0
        %v1730 = vadd.f32 0.0, %v1729
        %v1731 = vpop.f32.mrb[0].mxu0
        %1732 = vmatprep.mubr.f32.mxu0 0.0
        %1733 = vmatmul.mubr.f32.gmra.mrb[0].mxu0 %v1417
        %v1734 = vpop.f32.mrb[0].mxu0
        %v1735 = vadd.f32 0.0, %v1734
        %v1736 = vpop.f32.mrb[0].mxu0
        %1737 = vmatprep.mubr.f32.mxu0 0.0
        %1738 = vmatmul.mubr.f32.gmra.mrb[0].mxu0 %v1420
        %v1739 = vpop.f32.mrb[0].mxu0
        %v1740 = vadd.f32 0.0, %v1739
        %v1741 = vpop.f32.mrb[0].mxu0
        %1742 = vmatprep.mubr.f32.mxu0 0.0
        %1743 = vmatmul.mubr.f32.gmra.mrb[0].mxu0 %v1423
        %v1744 = vpop.f32.mrb[0].mxu0
        %v1745 = vadd.f32 0.0, %v1744
        %v1746 = vpop.f32.mrb[0].mxu0
        %1747 = vmatprep.mubr.f32.mxu0 0.0
        %1748 = vmatmul.mubr.f32.gmra.mrb[0].mxu0 %v1426
        %v1749 = vpop.f32.mrb[0].mxu0
        %v1750 = vadd.f32 0.0, %v1749
        %v1751 = vpop.f32.mrb[0].mxu0
        %1752 = vmatprep.mubr.f32.mxu0 0.0
        %1753 = vmatmul.mubr.f32.gmra.mrb[0].mxu0 %v1429
        %v1754 = vpop.f32.mrb[0].mxu0
        %v1755 = vadd.f32 0.0, %v1754
        %v1756 = vpop.f32.mrb[0].mxu0
        %1757 = vmatprep.mubr.f32.mxu0 0.0
        %1758 = vmatmul.mubr.f32.gmra.mrb[0].mxu0 %v1432
        %v1759 = vpop.f32.mrb[0].mxu0
        %v1760 = vadd.f32 0.0, %v1759
        %v1761 = vpop.f32.mrb[0].mxu0
        %1762 = vmatprep.mubr.f32.mxu0 0.0
        %1763 = vmatmul.mubr.f32.gmra.mrb[0].mxu0 %v1435
        %v1764 = vpop.f32.mrb[0].mxu0
        %v1765 = vadd.f32 0.0, %v1764
        %v1766 = vpop.f32.mrb[0].mxu0
        %1767 = vmatprep.mubr.f32.mxu0 0.0
        %1768 = vmatmul.mubr.f32.gmra.mrb[0].mxu0 %v1438
        %v1769 = vpop.f32.mrb[0].mxu0
        %v1770 = vadd.f32 0.0, %v1769
        %v1771 = vpop.f32.mrb[0].mxu0
        %1772 = vmatprep.mubr.f32.mxu0 0.0
        %1773 = vmatmul.mubr.f32.gmra.mrb[0].mxu0 %v1441
        %v1774 = vpop.f32.mrb[0].mxu0
        %v1775 = vadd.f32 0.0, %v1774
        %v1776 = vpop.f32.mrb[0].mxu0
        %1777 = vmatprep.mubr.f32.mxu0 0.0
        %1778 = vmatmul.mubr.f32.gmra.mrb[0].mxu0 %v1444
        %v1779 = vpop.f32.mrb[0].mxu0
        %v1780 = vadd.f32 0.0, %v1779
        %v1781 = vpop.f32.mrb[0].mxu0
        %1782 = vmatprep.mubr.f32.mxu0 0.0
        %1783 = vmatmul.mubr.f32.gmra.mrb[0].mxu0 %v1447
        %v1784 = vpop.f32.mrb[0].mxu0
        %v1785 = vadd.f32 0.0, %v1784
        %v1786 = vpop.f32.mrb[0].mxu0
        %1787 = vmatprep.mubr.f32.mxu0 0.0
        %1788 = vmatmul.mubr.f32.gmra.mrb[0].mxu0 %v1450
        %v1789 = vpop.f32.mrb[0].mxu0
        %v1790 = vadd.f32 0.0, %v1789
        %v1791 = vpop.f32.mrb[0].mxu0
        %1792 = vmatprep.mubr.f32.mxu0 0.0
        %1793 = vmatmul.mubr.f32.gmra.mrb[0].mxu0 %v1453
        %v1794 = vpop.f32.mrb[0].mxu0
        %v1795 = vadd.f32 0.0, %v1794
        %v1796 = vpop.f32.mrb[0].mxu0
        %1797 = vmatprep.mubr.f32.mxu0 0.0
        %1798 = vmatmul.mubr.f32.gmra.mrb[0].mxu0 %v1456
        %v1799 = vpop.f32.mrb[0].mxu0
        %v1800 = vadd.f32 0.0, %v1799
        %v1801 = vpop.f32.mrb[0].mxu0
        %1802 = vmatprep.mubr.f32.mxu0 0.0
        %1803 = vmatmul.mubr.f32.gmra.mrb[0].mxu0 %v1459
        %v1804 = vpop.f32.mrb[0].mxu0
        %v1805 = vadd.f32 0.0, %v1804
        %v1806 = vpop.f32.mrb[0].mxu0
        %1807 = vmatprep.mubr.f32.mxu0 0.0
        %1808 = vmatmul.mubr.f32.gmra.mrb[0].mxu0 %v1462
        %v1809 = vpop.f32.mrb[0].mxu0
        %v1810 = vadd.f32 0.0, %v1809
        %v1811 = vpop.f32.mrb[0].mxu0
        %1812 = vmatprep.mubr.f32.mxu0 0.0
        %1813 = vmatmul.mubr.f32.gmra.mrb[0].mxu0 %v1465
        %v1814 = vpop.f32.mrb[0].mxu0
        %v1815 = vadd.f32 0.0, %v1814
        %v1816 = vpop.f32.mrb[0].mxu0
        %1817 = vmatprep.mubr.f32.mxu0 0.0
        %1818 = vmatmul.mubr.f32.gmra.mrb[0].mxu0 %v1468
        %v1819 = vpop.f32.mrb[0].mxu0
        %v1820 = vadd.f32 0.0, %v1819
        %v1821 = vpop.f32.mrb[0].mxu0
        %1822 = vmatprep.mubr.f32.mxu0 0.0
        %1823 = vmatmul.mubr.f32.gmra.mrb[0].mxu0 %v1471
        %v1824 = vpop.f32.mrb[0].mxu0
        %v1825 = vadd.f32 0.0, %v1824
        %v1826 = vpop.f32.mrb[0].mxu0
        %1827 = vmatprep.mubr.f32.mxu0 0.0
        %1828 = vmatmul.mubr.f32.gmra.mrb[0].mxu0 %v1474
        %v1829 = vpop.f32.mrb[0].mxu0
        %v1830 = vadd.f32 0.0, %v1829
        %v1831 = vpop.f32.mrb[0].mxu0
        %1832 = vmatprep.mubr.f32.mxu0 0.0
        %1833 = vmatmul.mubr.f32.gmra.mrb[0].mxu0 %v1477
        %v1834 = vpop.f32.mrb[0].mxu0
        %v1835 = vadd.f32 0.0, %v1834
        %v1836 = vpop.f32.mrb[0].mxu0
        %1837 = vmatprep.mubr.f32.mxu0 0.0
        %1838 = vmatmul.mubr.f32.gmra.mrb[0].mxu0 %v1480
        %v1839 = vpop.f32.mrb[0].mxu0
        %v1840 = vadd.f32 0.0, %v1839
        %v1841 = vpop.f32.mrb[0].mxu0
        %1842 = vmatprep.mubr.f32.mxu0 0.0
        %1843 = vmatmul.mubr.f32.gmra.mrb[0].mxu0 %v1483
        %v1844 = vpop.f32.mrb[0].mxu0
        %v1845 = vadd.f32 0.0, %v1844
        %v1846 = vpop.f32.mrb[0].mxu0
        %1847 = vmatprep.mubr.f32.mxu0 0.0
        %1848 = vmatmul.mubr.f32.gmra.mrb[0].mxu0 %v1486
        %v1849 = vpop.f32.mrb[0].mxu0
        %v1850 = vadd.f32 0.0, %v1849
        %v1851 = vpop.f32.mrb[0].mxu0
        %1852 = vmatprep.mubr.f32.mxu0 0.0
        %1853 = vmatmul.mubr.f32.gmra.mrb[0].mxu0 %v1489
        %v1854 = vpop.f32.mrb[0].mxu0
        %v1855 = vadd.f32 0.0, %v1854
        %v1856 = vpop.f32.mrb[0].mxu0
        %1857 = vmatprep.mubr.f32.mxu0 0.0
        %1858 = vmatmul.mubr.f32.gmra.mrb[0].mxu0 %v1492
        %v1859 = vpop.f32.mrb[0].mxu0
        %v1860 = vadd.f32 0.0, %v1859
        %v1861 = vpop.f32.mrb[0].mxu0
        %1862 = vmatprep.mubr.f32.mxu0 0.0
        %1863 = vmatmul.mubr.f32.gmra.mrb[0].mxu0 %v1495
        %v1864 = vpop.f32.mrb[0].mxu0
        %v1865 = vadd.f32 0.0, %v1864
        %v1866 = vpop.f32.mrb[0].mxu0
        %1867 = vmatprep.mubr.f32.mxu0 0.0
        %1868 = vmatmul.mubr.f32.gmra.mrb[0].mxu0 %v1498
        %v1869 = vpop.f32.mrb[0].mxu0
        %v1870 = vadd.f32 0.0, %v1869
        %v1871 = vpop.f32.mrb[0].mxu0
        %1872 = vmatprep.mubr.f32.mxu0 0.0
        %1873 = vmatmul.mubr.f32.gmra.mrb[0].mxu0 %v1501
        %v1874 = vpop.f32.mrb[0].mxu0
        %v1875 = vadd.f32 0.0, %v1874
        %v1876 = vpop.f32.mrb[0].mxu0
        %1877 = vmatprep.mubr.f32.mxu0 0.0
        %1878 = vmatmul.mubr.f32.gmra.mrb[0].mxu0 %v1504
        %v1879 = vpop.f32.mrb[0].mxu0
        %v1880 = vadd.f32 0.0, %v1879
        %v1881 = vpop.f32.mrb[0].mxu0
        %1882 = vmatprep.mubr.f32.mxu0 0.0
        %1883 = vmatmul.mubr.f32.gmra.mrb[0].mxu0 %v1507
        %v1884 = vpop.f32.mrb[0].mxu0
        %v1885 = vadd.f32 0.0, %v1884
        %v1886 = vpop.f32.mrb[0].mxu0
        %1887 = vmatprep.mubr.f32.mxu0 0.0
        %1888 = vmatmul.mubr.f32.gmra.mrb[0].mxu0 %v1510
        %v1889 = vpop.f32.mrb[0].mxu0
        %v1890 = vadd.f32 0.0, %v1889
        %v1891 = vpop.f32.mrb[0].mxu0
        %1892 = vmatprep.mubr.f32.mxu0 0.0
        %1893 = vmatmul.mubr.f32.gmra.mrb[0].mxu0 %v1513
        %v1894 = vpop.f32.mrb[0].mxu0
        %v1895 = vadd.f32 0.0, %v1894
        %v1896 = vpop.f32.mrb[0].mxu0
        %1897 = vmatprep.mubr.f32.mxu0 0.0
        %1898 = vmatmul.mubr.f32.gmra.mrb[0].mxu0 %v1516
        %v1899 = vpop.f32.mrb[0].mxu0
        %v1900 = vadd.f32 0.0, %v1899
        %v1901 = vpop.f32.mrb[0].mxu0
        %1902 = vdwg.mxu0
        %v1903 = vadd.f32 %v888, %v1585
        %v1904 = vadd.f32 %v893, %v1590
        %v1905 = vadd.f32 %v898, %v1595
        %v1906 = vadd.f32 %v903, %v1600
        %v1907 = vadd.f32 %v908, %v1605
        %v1908 = vadd.f32 %v913, %v1610
        %v1909 = vadd.f32 %v918, %v1615
        %v1910 = vadd.f32 %v923, %v1620
        %v1911 = vadd.f32 %v928, %v1625
        %v1912 = vadd.f32 %v933, %v1630
        %v1913 = vadd.f32 %v938, %v1635
        %v1914 = vadd.f32 %v943, %v1640
        %v1915 = vadd.f32 %v948, %v1645
        %v1916 = vadd.f32 %v953, %v1650
        %v1917 = vadd.f32 %v958, %v1655
        %v1918 = vadd.f32 %v963, %v1660
        %v1919 = vadd.f32 %v968, %v1665
        %v1920 = vadd.f32 %v973, %v1670
        %v1921 = vadd.f32 %v978, %v1675
        %v1922 = vadd.f32 %v983, %v1680
        %v1923 = vadd.f32 %v988, %v1685
        %v1924 = vadd.f32 %v993, %v1690
        %v1925 = vadd.f32 %v998, %v1695
        %v1926 = vadd.f32 %v1003, %v1700
        %v1927 = vadd.f32 %v1008, %v1705
        %v1928 = vadd.f32 %v1013, %v1710
        %v1929 = vadd.f32 %v1018, %v1715
        %v1930 = vadd.f32 %v1023, %v1720
        %v1931 = vadd.f32 %v1028, %v1725
        %v1932 = vadd.f32 %v1033, %v1730
        %v1933 = vadd.f32 %v1038, %v1735
        %v1934 = vadd.f32 %v1043, %v1740
        %v1935 = vadd.f32 %v1048, %v1745
        %v1936 = vadd.f32 %v1053, %v1750
        %v1937 = vadd.f32 %v1058, %v1755
        %v1938 = vadd.f32 %v1063, %v1760
        %v1939 = vadd.f32 %v1068, %v1765
        %v1940 = vadd.f32 %v1073, %v1770
        %v1941 = vadd.f32 %v1078, %v1775
        %v1942 = vadd.f32 %v1083, %v1780
        %v1943 = vadd.f32 %v1088, %v1785
        %v1944 = vadd.f32 %v1093, %v1790
        %v1945 = vadd.f32 %v1098, %v1795
        %v1946 = vadd.f32 %v1103, %v1800
        %v1947 = vadd.f32 %v1108, %v1805
        %v1948 = vadd.f32 %v1113, %v1810
        %v1949 = vadd.f32 %v1118, %v1815
        %v1950 = vadd.f32 %v1123, %v1820
        %v1951 = vadd.f32 %v1128, %v1825
        %v1952 = vadd.f32 %v1133, %v1830
        %v1953 = vadd.f32 %v1138, %v1835
        %v1954 = vadd.f32 %v1143, %v1840
        %v1955 = vadd.f32 %v1148, %v1845
        %v1956 = vadd.f32 %v1153, %v1850
        %v1957 = vadd.f32 %v1158, %v1855
        %v1958 = vadd.f32 %v1163, %v1860
        %v1959 = vadd.f32 %v1168, %v1865
        %v1960 = vadd.f32 %v1173, %v1870
        %v1961 = vadd.f32 %v1178, %v1875
        %v1962 = vadd.f32 %v1183, %v1880
        %v1963 = vadd.f32 %v1188, %v1885
        %v1964 = vadd.f32 %v1193, %v1890
        %v1965 = vadd.f32 %v1198, %v1895
        %v1966 = vadd.f32 %v1203, %v1900
        %v1967 = vmax.f32 %v1903, %v1911
        %v1968 = vmax.f32 %v1904, %v1912
        %v1969 = vmax.f32 %v1905, %v1913
        %v1970 = vmax.f32 %v1906, %v1914
        %v1971 = vmax.f32 %v1907, %v1915
        %v1972 = vmax.f32 %v1908, %v1916
        %v1973 = vmax.f32 %v1909, %v1917
        %v1974 = vmax.f32 %v1910, %v1918
        %v1975 = vmax.f32 %v1967, %v1919
        %v1976 = vmax.f32 %v1968, %v1920
        %v1977 = vmax.f32 %v1969, %v1921
        %v1978 = vmax.f32 %v1970, %v1922
        %v1979 = vmax.f32 %v1971, %v1923
        %v1980 = vmax.f32 %v1972, %v1924
        %v1981 = vmax.f32 %v1973, %v1925
        %v1982 = vmax.f32 %v1974, %v1926
        %v1983 = vmax.f32 %v1975, %v1927
        %v1984 = vmax.f32 %v1976, %v1928
        %v1985 = vmax.f32 %v1977, %v1929
        %v1986 = vmax.f32 %v1978, %v1930
        %v1987 = vmax.f32 %v1979, %v1931
        %v1988 = vmax.f32 %v1980, %v1932
        %v1989 = vmax.f32 %v1981, %v1933
        %v1990 = vmax.f32 %v1982, %v1934
        %v1991 = vmax.f32 %v1983, %v1935
        %v1992 = vmax.f32 %v1984, %v1936
        %v1993 = vmax.f32 %v1985, %v1937
        %v1994 = vmax.f32 %v1986, %v1938
        %v1995 = vmax.f32 %v1987, %v1939
        %v1996 = vmax.f32 %v1988, %v1940
        %v1997 = vmax.f32 %v1989, %v1941
        %v1998 = vmax.f32 %v1990, %v1942
        %v1999 = vmax.f32 %v1991, %v1943
        %v2000 = vmax.f32 %v1992, %v1944
        %v2001 = vmax.f32 %v1993, %v1945
        %v2002 = vmax.f32 %v1994, %v1946
        %v2003 = vmax.f32 %v1995, %v1947
        %v2004 = vmax.f32 %v1996, %v1948
        %v2005 = vmax.f32 %v1997, %v1949
        %v2006 = vmax.f32 %v1998, %v1950
        %v2007 = vmax.f32 %v1999, %v1951
        %v2008 = vmax.f32 %v2000, %v1952
        %v2009 = vmax.f32 %v2001, %v1953
        %v2010 = vmax.f32 %v2002, %v1954
        %v2011 = vmax.f32 %v2003, %v1955
        %v2012 = vmax.f32 %v2004, %v1956
        %v2013 = vmax.f32 %v2005, %v1957
        %v2014 = vmax.f32 %v2006, %v1958
        %v2015 = vmax.f32 %v2007, %v1959
        %v2016 = vmax.f32 %v2008, %v1960
        %v2017 = vmax.f32 %v2009, %v1961
        %v2018 = vmax.f32 %v2010, %v1962
        %v2019 = vmax.f32 %v2011, %v1963
        %v2020 = vmax.f32 %v2012, %v1964
        %v2021 = vmax.f32 %v2013, %v1965
        %v2022 = vmax.f32 %v2014, %v1966
        %2023 = vmatprep.subr.mxu0 0.0
        %2024 = vmatpush1.msra.mxu0 %v2015
        %2025 = vmatprep.subr.mxu0 0.0
        %2026 = vmatpush1.msra.mxu0 %v2016
        %2027 = vmatprep.subr.mxu0 0.0
        %2028 = vmatpush1.msra.mxu0 %v2017
        %2029 = vmatprep.subr.mxu0 0.0
        %2030 = vmatpush1.msra.mxu0 %v2018
        %2031 = vmatprep.subr.mxu0 0.0
        %2032 = vmatpush1.msra.mxu0 %v2019
        %2033 = vmatprep.subr.mxu0 0.0
        %2034 = vmatpush1.msra.mxu0 %v2020
        %2035 = vmatprep.subr.mxu0 0.0
        %2036 = vmatpush1.msra.mxu0 %v2021
        %2037 = vmatprep.subr.mxu0 0.0
        %2038 = vmatpush1.msra.mxu0 %v2022
        %2039 = vmatprep.subr.mxu0 0.0
        %2040 = vmatpush1.msra.mxu0 0.0
        %2041 = vmatprep.subr.mxu0 0.0
        %2042 = vmatpush1.msra.mxu0 0.0
        %2043 = vmatprep.subr.mxu0 0.0
        %2044 = vmatpush1.msra.mxu0 0.0
        %2045 = vmatprep.subr.mxu0 0.0
        %2046 = vmatpush1.msra.mxu0 0.0
        %2047 = vmatprep.subr.mxu0 0.0
        %2048 = vmatpush1.msra.mxu0 0.0
        %2049 = vmatprep.subr.mxu0 0.0
        %2050 = vmatpush1.msra.mxu0 0.0
        %2051 = vmatprep.subr.mxu0 0.0
        %2052 = vmatpush1.msra.mxu0 0.0
        %2053 = vmatprep.subr.mxu0 0.0
        %2054 = vmatpush1.msra.mxu0 0.0
        %2055 = vmatprep.subr.mxu0 0.0
        %2056 = vmatpush1.msra.mxu0 0.0
        %2057 = vmatprep.subr.mxu0 0.0
        %2058 = vmatpush1.msra.mxu0 0.0
        %2059 = vmatprep.subr.mxu0 0.0
        %2060 = vmatpush1.msra.mxu0 0.0
        %2061 = vmatprep.subr.mxu0 0.0
        %2062 = vmatpush1.msra.mxu0 0.0
        %2063 = vmatprep.subr.mxu0 0.0
        %2064 = vmatpush1.msra.mxu0 0.0
        %2065 = vmatprep.subr.mxu0 0.0
        %2066 = vmatpush1.msra.mxu0 0.0
        %2067 = vmatprep.subr.mxu0 0.0
        %2068 = vmatpush1.msra.mxu0 0.0
        %2069 = vmatprep.subr.mxu0 0.0
        %2070 = vmatpush1.msra.mxu0 0.0
        %2071 = vmatprep.subr.mxu0 0.0
        %2072 = vmatpush1.msra.mxu0 0.0
        %2073 = vmatprep.subr.mxu0 0.0
        %2074 = vmatpush1.msra.mxu0 0.0
        %2075 = vmatprep.subr.mxu0 0.0
        %2076 = vmatpush1.msra.mxu0 0.0
        %2077 = vmatprep.subr.mxu0 0.0
        %2078 = vmatpush1.msra.mxu0 0.0
        %2079 = vmatprep.subr.mxu0 0.0
        %2080 = vmatpush1.msra.mxu0 0.0
        %2081 = vmatprep.subr.mxu0 0.0
        %2082 = vmatpush1.msra.mxu0 0.0
        %2083 = vmatprep.subr.mxu0 0.0
        %2084 = vmatpush1.msra.mxu0 0.0
        %2085 = vmatprep.subr.mxu0 0.0
        %2086 = vmatpush1.msra.mxu0 0.0
        %2087 = vmatprep.mubr.f32.mxu0 0.0
        %2088 = vmatmul.mubr.f32.gmra.mrb[0].mxu0 %v1327
        %v2089 = vpop.f32.mrb[0].mxu0
        %v2090 = vadd.f32 0.0, %v2089
        %v2091 = vpop.f32.mrb[0].mxu0
        %2092 = vmatprep.mubr.f32.mxu0 0.0
        %2093 = vmatmul.mubr.f32.gmra.mrb[0].mxu0 %v1330
        %v2094 = vpop.f32.mrb[0].mxu0
        %v2095 = vadd.f32 0.0, %v2094
        %v2096 = vpop.f32.mrb[0].mxu0
        %2097 = vmatprep.mubr.f32.mxu0 0.0
        %2098 = vmatmul.mubr.f32.gmra.mrb[0].mxu0 %v1333
        %v2099 = vpop.f32.mrb[0].mxu0
        %v2100 = vadd.f32 0.0, %v2099
        %v2101 = vpop.f32.mrb[0].mxu0
        %2102 = vmatprep.mubr.f32.mxu0 0.0
        %2103 = vmatmul.mubr.f32.gmra.mrb[0].mxu0 %v1336
        %v2104 = vpop.f32.mrb[0].mxu0
        %v2105 = vadd.f32 0.0, %v2104
        %v2106 = vpop.f32.mrb[0].mxu0
        %2107 = vmatprep.mubr.f32.mxu0 0.0
        %2108 = vmatmul.mubr.f32.gmra.mrb[0].mxu0 %v1339
        %v2109 = vpop.f32.mrb[0].mxu0
        %v2110 = vadd.f32 0.0, %v2109
        %v2111 = vpop.f32.mrb[0].mxu0
        %2112 = vmatprep.mubr.f32.mxu0 0.0
        %2113 = vmatmul.mubr.f32.gmra.mrb[0].mxu0 %v1342
        %v2114 = vpop.f32.mrb[0].mxu0
        %v2115 = vadd.f32 0.0, %v2114
        %v2116 = vpop.f32.mrb[0].mxu0
        %2117 = vmatprep.mubr.f32.mxu0 0.0
        %2118 = vmatmul.mubr.f32.gmra.mrb[0].mxu0 %v1345
        %v2119 = vpop.f32.mrb[0].mxu0
        %v2120 = vadd.f32 0.0, %v2119
        %v2121 = vpop.f32.mrb[0].mxu0
        %2122 = vmatprep.mubr.f32.mxu0 0.0
        %2123 = vmatmul.mubr.f32.gmra.mrb[0].mxu0 %v1348
        %v2124 = vpop.f32.mrb[0].mxu0
        %v2125 = vadd.f32 0.0, %v2124
        %v2126 = vpop.f32.mrb[0].mxu0
        %2127 = vmatprep.mubr.f32.mxu0 0.0
        %2128 = vmatmul.mubr.f32.gmra.mrb[0].mxu0 %v1351
        %v2129 = vpop.f32.mrb[0].mxu0
        %v2130 = vadd.f32 0.0, %v2129
        %v2131 = vpop.f32.mrb[0].mxu0
        %2132 = vmatprep.mubr.f32.mxu0 0.0
        %2133 = vmatmul.mubr.f32.gmra.mrb[0].mxu0 %v1354
        %v2134 = vpop.f32.mrb[0].mxu0
        %v2135 = vadd.f32 0.0, %v2134
        %v2136 = vpop.f32.mrb[0].mxu0
        %2137 = vmatprep.mubr.f32.mxu0 0.0
        %2138 = vmatmul.mubr.f32.gmra.mrb[0].mxu0 %v1357
        %v2139 = vpop.f32.mrb[0].mxu0
        %v2140 = vadd.f32 0.0, %v2139
        %v2141 = vpop.f32.mrb[0].mxu0
        %2142 = vmatprep.mubr.f32.mxu0 0.0
        %2143 = vmatmul.mubr.f32.gmra.mrb[0].mxu0 %v1360
        %v2144 = vpop.f32.mrb[0].mxu0
        %v2145 = vadd.f32 0.0, %v2144
        %v2146 = vpop.f32.mrb[0].mxu0
        %2147 = vmatprep.mubr.f32.mxu0 0.0
        %2148 = vmatmul.mubr.f32.gmra.mrb[0].mxu0 %v1363
        %v2149 = vpop.f32.mrb[0].mxu0
        %v2150 = vadd.f32 0.0, %v2149
        %v2151 = vpop.f32.mrb[0].mxu0
        %2152 = vmatprep.mubr.f32.mxu0 0.0
        %2153 = vmatmul.mubr.f32.gmra.mrb[0].mxu0 %v1366
        %v2154 = vpop.f32.mrb[0].mxu0
        %v2155 = vadd.f32 0.0, %v2154
        %v2156 = vpop.f32.mrb[0].mxu0
        %2157 = vmatprep.mubr.f32.mxu0 0.0
        %2158 = vmatmul.mubr.f32.gmra.mrb[0].mxu0 %v1369
        %v2159 = vpop.f32.mrb[0].mxu0
        %v2160 = vadd.f32 0.0, %v2159
        %v2161 = vpop.f32.mrb[0].mxu0
        %2162 = vmatprep.mubr.f32.mxu0 0.0
        %2163 = vmatmul.mubr.f32.gmra.mrb[0].mxu0 %v1372
        %v2164 = vpop.f32.mrb[0].mxu0
        %v2165 = vadd.f32 0.0, %v2164
        %v2166 = vpop.f32.mrb[0].mxu0
        %2167 = vmatprep.mubr.f32.mxu0 0.0
        %2168 = vmatmul.mubr.f32.gmra.mrb[0].mxu0 %v1375
        %v2169 = vpop.f32.mrb[0].mxu0
        %v2170 = vadd.f32 0.0, %v2169
        %v2171 = vpop.f32.mrb[0].mxu0
        %2172 = vmatprep.mubr.f32.mxu0 0.0
        %2173 = vmatmul.mubr.f32.gmra.mrb[0].mxu0 %v1378
        %v2174 = vpop.f32.mrb[0].mxu0
        %v2175 = vadd.f32 0.0, %v2174
        %v2176 = vpop.f32.mrb[0].mxu0
        %2177 = vmatprep.mubr.f32.mxu0 0.0
        %2178 = vmatmul.mubr.f32.gmra.mrb[0].mxu0 %v1381
        %v2179 = vpop.f32.mrb[0].mxu0
        %v2180 = vadd.f32 0.0, %v2179
        %v2181 = vpop.f32.mrb[0].mxu0
        %2182 = vmatprep.mubr.f32.mxu0 0.0
        %2183 = vmatmul.mubr.f32.gmra.mrb[0].mxu0 %v1384
        %v2184 = vpop.f32.mrb[0].mxu0
        %v2185 = vadd.f32 0.0, %v2184
        %v2186 = vpop.f32.mrb[0].mxu0
        %2187 = vmatprep.mubr.f32.mxu0 0.0
        %2188 = vmatmul.mubr.f32.gmra.mrb[0].mxu0 %v1387
        %v2189 = vpop.f32.mrb[0].mxu0
        %v2190 = vadd.f32 0.0, %v2189
        %v2191 = vpop.f32.mrb[0].mxu0
        %2192 = vmatprep.mubr.f32.mxu0 0.0
        %2193 = vmatmul.mubr.f32.gmra.mrb[0].mxu0 %v1390
        %v2194 = vpop.f32.mrb[0].mxu0
        %v2195 = vadd.f32 0.0, %v2194
        %v2196 = vpop.f32.mrb[0].mxu0
        %2197 = vmatprep.mubr.f32.mxu0 0.0
        %2198 = vmatmul.mubr.f32.gmra.mrb[0].mxu0 %v1393
        %v2199 = vpop.f32.mrb[0].mxu0
        %v2200 = vadd.f32 0.0, %v2199
        %v2201 = vpop.f32.mrb[0].mxu0
        %2202 = vmatprep.mubr.f32.mxu0 0.0
        %2203 = vmatmul.mubr.f32.gmra.mrb[0].mxu0 %v1396
        %v2204 = vpop.f32.mrb[0].mxu0
        %v2205 = vadd.f32 0.0, %v2204
        %v2206 = vpop.f32.mrb[0].mxu0
        %2207 = vmatprep.mubr.f32.mxu0 0.0
        %2208 = vmatmul.mubr.f32.gmra.mrb[0].mxu0 %v1399
        %v2209 = vpop.f32.mrb[0].mxu0
        %v2210 = vadd.f32 0.0, %v2209
        %v2211 = vpop.f32.mrb[0].mxu0
        %2212 = vmatprep.mubr.f32.mxu0 0.0
        %2213 = vmatmul.mubr.f32.gmra.mrb[0].mxu0 %v1402
        %v2214 = vpop.f32.mrb[0].mxu0
        %v2215 = vadd.f32 0.0, %v2214
        %v2216 = vpop.f32.mrb[0].mxu0
        %2217 = vmatprep.mubr.f32.mxu0 0.0
        %2218 = vmatmul.mubr.f32.gmra.mrb[0].mxu0 %v1405
        %v2219 = vpop.f32.mrb[0].mxu0
        %v2220 = vadd.f32 0.0, %v2219
        %v2221 = vpop.f32.mrb[0].mxu0
        %2222 = vmatprep.mubr.f32.mxu0 0.0
        %2223 = vmatmul.mubr.f32.gmra.mrb[0].mxu0 %v1408
        %v2224 = vpop.f32.mrb[0].mxu0
        %v2225 = vadd.f32 0.0, %v2224
        %v2226 = vpop.f32.mrb[0].mxu0
        %2227 = vmatprep.mubr.f32.mxu0 0.0
        %2228 = vmatmul.mubr.f32.gmra.mrb[0].mxu0 %v1411
        %v2229 = vpop.f32.mrb[0].mxu0
        %v2230 = vadd.f32 0.0, %v2229
        %v2231 = vpop.f32.mrb[0].mxu0
        %2232 = vmatprep.mubr.f32.mxu0 0.0
        %2233 = vmatmul.mubr.f32.gmra.mrb[0].mxu0 %v1414
        %v2234 = vpop.f32.mrb[0].mxu0
        %v2235 = vadd.f32 0.0, %v2234
        %v2236 = vpop.f32.mrb[0].mxu0
        %2237 = vmatprep.mubr.f32.mxu0 0.0
        %2238 = vmatmul.mubr.f32.gmra.mrb[0].mxu0 %v1417
        %v2239 = vpop.f32.mrb[0].mxu0
        %v2240 = vadd.f32 0.0, %v2239
        %v2241 = vpop.f32.mrb[0].mxu0
        %2242 = vmatprep.mubr.f32.mxu0 0.0
        %2243 = vmatmul.mubr.f32.gmra.mrb[0].mxu0 %v1420
        %v2244 = vpop.f32.mrb[0].mxu0
        %v2245 = vadd.f32 0.0, %v2244
        %v2246 = vpop.f32.mrb[0].mxu0
        %2247 = vmatprep.mubr.f32.mxu0 0.0
        %2248 = vmatmul.mubr.f32.gmra.mrb[0].mxu0 %v1423
        %v2249 = vpop.f32.mrb[0].mxu0
        %v2250 = vadd.f32 0.0, %v2249
        %v2251 = vpop.f32.mrb[0].mxu0
        %2252 = vmatprep.mubr.f32.mxu0 0.0
        %2253 = vmatmul.mubr.f32.gmra.mrb[0].mxu0 %v1426
        %v2254 = vpop.f32.mrb[0].mxu0
        %v2255 = vadd.f32 0.0, %v2254
        %v2256 = vpop.f32.mrb[0].mxu0
        %2257 = vmatprep.mubr.f32.mxu0 0.0
        %2258 = vmatmul.mubr.f32.gmra.mrb[0].mxu0 %v1429
        %v2259 = vpop.f32.mrb[0].mxu0
        %v2260 = vadd.f32 0.0, %v2259
        %v2261 = vpop.f32.mrb[0].mxu0
        %2262 = vmatprep.mubr.f32.mxu0 0.0
        %2263 = vmatmul.mubr.f32.gmra.mrb[0].mxu0 %v1432
        %v2264 = vpop.f32.mrb[0].mxu0
        %v2265 = vadd.f32 0.0, %v2264
        %v2266 = vpop.f32.mrb[0].mxu0
        %2267 = vmatprep.mubr.f32.mxu0 0.0
        %2268 = vmatmul.mubr.f32.gmra.mrb[0].mxu0 %v1435
        %v2269 = vpop.f32.mrb[0].mxu0
        %v2270 = vadd.f32 0.0, %v2269
        %v2271 = vpop.f32.mrb[0].mxu0
        %2272 = vmatprep.mubr.f32.mxu0 0.0
        %2273 = vmatmul.mubr.f32.gmra.mrb[0].mxu0 %v1438
        %v2274 = vpop.f32.mrb[0].mxu0
        %v2275 = vadd.f32 0.0, %v2274
        %v2276 = vpop.f32.mrb[0].mxu0
        %2277 = vmatprep.mubr.f32.mxu0 0.0
        %2278 = vmatmul.mubr.f32.gmra.mrb[0].mxu0 %v1441
        %v2279 = vpop.f32.mrb[0].mxu0
        %v2280 = vadd.f32 0.0, %v2279
        %v2281 = vpop.f32.mrb[0].mxu0
        %2282 = vmatprep.mubr.f32.mxu0 0.0
        %2283 = vmatmul.mubr.f32.gmra.mrb[0].mxu0 %v1444
        %v2284 = vpop.f32.mrb[0].mxu0
        %v2285 = vadd.f32 0.0, %v2284
        %v2286 = vpop.f32.mrb[0].mxu0
        %2287 = vmatprep.mubr.f32.mxu0 0.0
        %2288 = vmatmul.mubr.f32.gmra.mrb[0].mxu0 %v1447
        %v2289 = vpop.f32.mrb[0].mxu0
        %v2290 = vadd.f32 0.0, %v2289
        %v2291 = vpop.f32.mrb[0].mxu0
        %2292 = vmatprep.mubr.f32.mxu0 0.0
        %2293 = vmatmul.mubr.f32.gmra.mrb[0].mxu0 %v1450
        %v2294 = vpop.f32.mrb[0].mxu0
        %v2295 = vadd.f32 0.0, %v2294
        %v2296 = vpop.f32.mrb[0].mxu0
        %2297 = vmatprep.mubr.f32.mxu0 0.0
        %2298 = vmatmul.mubr.f32.gmra.mrb[0].mxu0 %v1453
        %v2299 = vpop.f32.mrb[0].mxu0
        %v2300 = vadd.f32 0.0, %v2299
        %v2301 = vpop.f32.mrb[0].mxu0
        %2302 = vmatprep.mubr.f32.mxu0 0.0
        %2303 = vmatmul.mubr.f32.gmra.mrb[0].mxu0 %v1456
        %v2304 = vpop.f32.mrb[0].mxu0
        %v2305 = vadd.f32 0.0, %v2304
        %v2306 = vpop.f32.mrb[0].mxu0
        %2307 = vmatprep.mubr.f32.mxu0 0.0
        %2308 = vmatmul.mubr.f32.gmra.mrb[0].mxu0 %v1459
        %v2309 = vpop.f32.mrb[0].mxu0
        %v2310 = vadd.f32 0.0, %v2309
        %v2311 = vpop.f32.mrb[0].mxu0
        %2312 = vmatprep.mubr.f32.mxu0 0.0
        %2313 = vmatmul.mubr.f32.gmra.mrb[0].mxu0 %v1462
        %v2314 = vpop.f32.mrb[0].mxu0
        %v2315 = vadd.f32 0.0, %v2314
        %v2316 = vpop.f32.mrb[0].mxu0
        %2317 = vmatprep.mubr.f32.mxu0 0.0
        %2318 = vmatmul.mubr.f32.gmra.mrb[0].mxu0 %v1465
        %v2319 = vpop.f32.mrb[0].mxu0
        %v2320 = vadd.f32 0.0, %v2319
        %v2321 = vpop.f32.mrb[0].mxu0
        %2322 = vmatprep.mubr.f32.mxu0 0.0
        %2323 = vmatmul.mubr.f32.gmra.mrb[0].mxu0 %v1468
        %v2324 = vpop.f32.mrb[0].mxu0
        %v2325 = vadd.f32 0.0, %v2324
        %v2326 = vpop.f32.mrb[0].mxu0
        %2327 = vmatprep.mubr.f32.mxu0 0.0
        %2328 = vmatmul.mubr.f32.gmra.mrb[0].mxu0 %v1471
        %v2329 = vpop.f32.mrb[0].mxu0
        %v2330 = vadd.f32 0.0, %v2329
        %v2331 = vpop.f32.mrb[0].mxu0
        %2332 = vmatprep.mubr.f32.mxu0 0.0
        %2333 = vmatmul.mubr.f32.gmra.mrb[0].mxu0 %v1474
        %v2334 = vpop.f32.mrb[0].mxu0
        %v2335 = vadd.f32 0.0, %v2334
        %v2336 = vpop.f32.mrb[0].mxu0
        %2337 = vmatprep.mubr.f32.mxu0 0.0
        %2338 = vmatmul.mubr.f32.gmra.mrb[0].mxu0 %v1477
        %v2339 = vpop.f32.mrb[0].mxu0
        %v2340 = vadd.f32 0.0, %v2339
        %v2341 = vpop.f32.mrb[0].mxu0
        %2342 = vmatprep.mubr.f32.mxu0 0.0
        %2343 = vmatmul.mubr.f32.gmra.mrb[0].mxu0 %v1480
        %v2344 = vpop.f32.mrb[0].mxu0
        %v2345 = vadd.f32 0.0, %v2344
        %v2346 = vpop.f32.mrb[0].mxu0
        %2347 = vmatprep.mubr.f32.mxu0 0.0
        %2348 = vmatmul.mubr.f32.gmra.mrb[0].mxu0 %v1483
        %v2349 = vpop.f32.mrb[0].mxu0
        %v2350 = vadd.f32 0.0, %v2349
        %v2351 = vpop.f32.mrb[0].mxu0
        %2352 = vmatprep.mubr.f32.mxu0 0.0
        %2353 = vmatmul.mubr.f32.gmra.mrb[0].mxu0 %v1486
        %v2354 = vpop.f32.mrb[0].mxu0
        %v2355 = vadd.f32 0.0, %v2354
        %v2356 = vpop.f32.mrb[0].mxu0
        %2357 = vmatprep.mubr.f32.mxu0 0.0
        %2358 = vmatmul.mubr.f32.gmra.mrb[0].mxu0 %v1489
        %v2359 = vpop.f32.mrb[0].mxu0
        %v2360 = vadd.f32 0.0, %v2359
        %v2361 = vpop.f32.mrb[0].mxu0
        %2362 = vmatprep.mubr.f32.mxu0 0.0
        %2363 = vmatmul.mubr.f32.gmra.mrb[0].mxu0 %v1492
        %v2364 = vpop.f32.mrb[0].mxu0
        %v2365 = vadd.f32 0.0, %v2364
        %v2366 = vpop.f32.mrb[0].mxu0
        %2367 = vmatprep.mubr.f32.mxu0 0.0
        %2368 = vmatmul.mubr.f32.gmra.mrb[0].mxu0 %v1495
        %v2369 = vpop.f32.mrb[0].mxu0
        %v2370 = vadd.f32 0.0, %v2369
        %v2371 = vpop.f32.mrb[0].mxu0
        %2372 = vmatprep.mubr.f32.mxu0 0.0
        %2373 = vmatmul.mubr.f32.gmra.mrb[0].mxu0 %v1498
        %v2374 = vpop.f32.mrb[0].mxu0
        %v2375 = vadd.f32 0.0, %v2374
        %v2376 = vpop.f32.mrb[0].mxu0
        %2377 = vmatprep.mubr.f32.mxu0 0.0
        %2378 = vmatmul.mubr.f32.gmra.mrb[0].mxu0 %v1501
        %v2379 = vpop.f32.mrb[0].mxu0
        %v2380 = vadd.f32 0.0, %v2379
        %v2381 = vpop.f32.mrb[0].mxu0
        %2382 = vmatprep.mubr.f32.mxu0 0.0
        %2383 = vmatmul.mubr.f32.gmra.mrb[0].mxu0 %v1504
        %v2384 = vpop.f32.mrb[0].mxu0
        %v2385 = vadd.f32 0.0, %v2384
        %v2386 = vpop.f32.mrb[0].mxu0
        %2387 = vmatprep.mubr.f32.mxu0 0.0
        %2388 = vmatmul.mubr.f32.gmra.mrb[0].mxu0 %v1507
        %v2389 = vpop.f32.mrb[0].mxu0
        %v2390 = vadd.f32 0.0, %v2389
        %v2391 = vpop.f32.mrb[0].mxu0
        %2392 = vmatprep.mubr.f32.mxu0 0.0
        %2393 = vmatmul.mubr.f32.gmra.mrb[0].mxu0 %v1510
        %v2394 = vpop.f32.mrb[0].mxu0
        %v2395 = vadd.f32 0.0, %v2394
        %v2396 = vpop.f32.mrb[0].mxu0
        %2397 = vmatprep.mubr.f32.mxu0 0.0
        %2398 = vmatmul.mubr.f32.gmra.mrb[0].mxu0 %v1513
        %v2399 = vpop.f32.mrb[0].mxu0
        %v2400 = vadd.f32 0.0, %v2399
        %v2401 = vpop.f32.mrb[0].mxu0
        %2402 = vmatprep.mubr.f32.mxu0 0.0
        %2403 = vmatmul.mubr.f32.gmra.mrb[0].mxu0 %v1516
        %v2404 = vpop.f32.mrb[0].mxu0
        %v2405 = vadd.f32 0.0, %v2404
        %v2406 = vpop.f32.mrb[0].mxu0
        %2407 = vdwg.mxu0
        %v2408 = vadd.f32 %v888, %v2090
        %v2409 = vadd.f32 %v893, %v2095
        %v2410 = vadd.f32 %v898, %v2100
        %v2411 = vadd.f32 %v903, %v2105
        %v2412 = vadd.f32 %v908, %v2110
        %v2413 = vadd.f32 %v913, %v2115
        %v2414 = vadd.f32 %v918, %v2120
        %v2415 = vadd.f32 %v923, %v2125
        %v2416 = vadd.f32 %v928, %v2130
        %v2417 = vadd.f32 %v933, %v2135
        %v2418 = vadd.f32 %v938, %v2140
        %v2419 = vadd.f32 %v943, %v2145
        %v2420 = vadd.f32 %v948, %v2150
        %v2421 = vadd.f32 %v953, %v2155
        %v2422 = vadd.f32 %v958, %v2160
        %v2423 = vadd.f32 %v963, %v2165
        %v2424 = vadd.f32 %v968, %v2170
        %v2425 = vadd.f32 %v973, %v2175
        %v2426 = vadd.f32 %v978, %v2180
        %v2427 = vadd.f32 %v983, %v2185
        %v2428 = vadd.f32 %v988, %v2190
        %v2429 = vadd.f32 %v993, %v2195
        %v2430 = vadd.f32 %v998, %v2200
        %v2431 = vadd.f32 %v1003, %v2205
        %v2432 = vadd.f32 %v1008, %v2210
        %v2433 = vadd.f32 %v1013, %v2215
        %v2434 = vadd.f32 %v1018, %v2220
        %v2435 = vadd.f32 %v1023, %v2225
        %v2436 = vadd.f32 %v1028, %v2230
        %v2437 = vadd.f32 %v1033, %v2235
        %v2438 = vadd.f32 %v1038, %v2240
        %v2439 = vadd.f32 %v1043, %v2245
        %v2440 = vadd.f32 %v1048, %v2250
        %v2441 = vadd.f32 %v1053, %v2255
        %v2442 = vadd.f32 %v1058, %v2260
        %v2443 = vadd.f32 %v1063, %v2265
        %v2444 = vadd.f32 %v1068, %v2270
        %v2445 = vadd.f32 %v1073, %v2275
        %v2446 = vadd.f32 %v1078, %v2280
        %v2447 = vadd.f32 %v1083, %v2285
        %v2448 = vadd.f32 %v1088, %v2290
        %v2449 = vadd.f32 %v1093, %v2295
        %v2450 = vadd.f32 %v1098, %v2300
        %v2451 = vadd.f32 %v1103, %v2305
        %v2452 = vadd.f32 %v1108, %v2310
        %v2453 = vadd.f32 %v1113, %v2315
        %v2454 = vadd.f32 %v1118, %v2320
        %v2455 = vadd.f32 %v1123, %v2325
        %v2456 = vadd.f32 %v1128, %v2330
        %v2457 = vadd.f32 %v1133, %v2335
        %v2458 = vadd.f32 %v1138, %v2340
        %v2459 = vadd.f32 %v1143, %v2345
        %v2460 = vadd.f32 %v1148, %v2350
        %v2461 = vadd.f32 %v1153, %v2355
        %v2462 = vadd.f32 %v1158, %v2360
        %v2463 = vadd.f32 %v1163, %v2365
        %v2464 = vadd.f32 %v1168, %v2370
        %v2465 = vadd.f32 %v1173, %v2375
        %v2466 = vadd.f32 %v1178, %v2380
        %v2467 = vadd.f32 %v1183, %v2385
        %v2468 = vadd.f32 %v1188, %v2390
        %v2469 = vadd.f32 %v1193, %v2395
        %v2470 = vadd.f32 %v1198, %v2400
        %v2471 = vadd.f32 %v1203, %v2405
        %v2472 = vmax.f32 %v2408, %v2416
        %v2473 = vmax.f32 %v2409, %v2417
        %v2474 = vmax.f32 %v2410, %v2418
        %v2475 = vmax.f32 %v2411, %v2419
        %v2476 = vmax.f32 %v2412, %v2420
        %v2477 = vmax.f32 %v2413, %v2421
        %v2478 = vmax.f32 %v2414, %v2422
        %v2479 = vmax.f32 %v2415, %v2423
        %v2480 = vmax.f32 %v2472, %v2424
        %v2481 = vmax.f32 %v2473, %v2425
        %v2482 = vmax.f32 %v2474, %v2426
        %v2483 = vmax.f32 %v2475, %v2427
        %v2484 = vmax.f32 %v2476, %v2428
        %v2485 = vmax.f32 %v2477, %v2429
        %v2486 = vmax.f32 %v2478, %v2430
        %v2487 = vmax.f32 %v2479, %v2431
        %v2488 = vmax.f32 %v2480, %v2432
        %v2489 = vmax.f32 %v2481, %v2433
        %v2490 = vmax.f32 %v2482, %v2434
        %v2491 = vmax.f32 %v2483, %v2435
        %v2492 = vmax.f32 %v2484, %v2436
        %v2493 = vmax.f32 %v2485, %v2437
        %v2494 = vmax.f32 %v2486, %v2438
        %v2495 = vmax.f32 %v2487, %v2439
        %v2496 = vmax.f32 %v2488, %v2440
        %v2497 = vmax.f32 %v2489, %v2441
        %v2498 = vmax.f32 %v2490, %v2442
        %v2499 = vmax.f32 %v2491, %v2443
        %v2500 = vmax.f32 %v2492, %v2444
        %v2501 = vmax.f32 %v2493, %v2445
        %v2502 = vmax.f32 %v2494, %v2446
        %v2503 = vmax.f32 %v2495, %v2447
        %v2504 = vmax.f32 %v2496, %v2448
        %v2505 = vmax.f32 %v2497, %v2449
        %v2506 = vmax.f32 %v2498, %v2450
        %v2507 = vmax.f32 %v2499, %v2451
        %v2508 = vmax.f32 %v2500, %v2452
        %v2509 = vmax.f32 %v2501, %v2453
        %v2510 = vmax.f32 %v2502, %v2454
        %v2511 = vmax.f32 %v2503, %v2455
        %v2512 = vmax.f32 %v2504, %v2456
        %v2513 = vmax.f32 %v2505, %v2457
        %v2514 = vmax.f32 %v2506, %v2458
        %v2515 = vmax.f32 %v2507, %v2459
        %v2516 = vmax.f32 %v2508, %v2460
        %v2517 = vmax.f32 %v2509, %v2461
        %v2518 = vmax.f32 %v2510, %v2462
        %v2519 = vmax.f32 %v2511, %v2463
        %v2520 = vmax.f32 %v2512, %v2464
        %v2521 = vmax.f32 %v2513, %v2465
        %v2522 = vmax.f32 %v2514, %v2466
        %v2523 = vmax.f32 %v2515, %v2467
        %v2524 = vmax.f32 %v2516, %v2468
        %v2525 = vmax.f32 %v2517, %v2469
        %v2526 = vmax.f32 %v2518, %v2470
        %v2527 = vmax.f32 %v2519, %v2471
        %2528 = vmatprep.subr.mxu0 0.0
        %2529 = vmatpush1.msra.mxu0 %v2520
        %2530 = vmatprep.subr.mxu0 0.0
        %2531 = vmatpush1.msra.mxu0 %v2521
        %2532 = vmatprep.subr.mxu0 0.0
        %2533 = vmatpush1.msra.mxu0 %v2522
        %2534 = vmatprep.subr.mxu0 0.0
        %2535 = vmatpush1.msra.mxu0 %v2523
        %2536 = vmatprep.subr.mxu0 0.0
        %2537 = vmatpush1.msra.mxu0 %v2524
        %2538 = vmatprep.subr.mxu0 0.0
        %2539 = vmatpush1.msra.mxu0 %v2525
        %2540 = vmatprep.subr.mxu0 0.0
        %2541 = vmatpush1.msra.mxu0 %v2526
        %2542 = vmatprep.subr.mxu0 0.0
        %2543 = vmatpush1.msra.mxu0 %v2527
        %2544 = vmatprep.subr.mxu0 0.0
        %2545 = vmatpush1.msra.mxu0 0.0
        %2546 = vmatprep.subr.mxu0 0.0
        %2547 = vmatpush1.msra.mxu0 0.0
        %2548 = vmatprep.subr.mxu0 0.0
        %2549 = vmatpush1.msra.mxu0 0.0
        %2550 = vmatprep.subr.mxu0 0.0
        %2551 = vmatpush1.msra.mxu0 0.0
        %2552 = vmatprep.subr.mxu0 0.0
        %2553 = vmatpush1.msra.mxu0 0.0
        %2554 = vmatprep.subr.mxu0 0.0
        %2555 = vmatpush1.msra.mxu0 0.0
        %2556 = vmatprep.subr.mxu0 0.0
        %2557 = vmatpush1.msra.mxu0 0.0
        %2558 = vmatprep.subr.mxu0 0.0
        %2559 = vmatpush1.msra.mxu0 0.0
        %2560 = vmatprep.subr.mxu0 0.0
        %2561 = vmatpush1.msra.mxu0 0.0
        %2562 = vmatprep.subr.mxu0 0.0
        %2563 = vmatpush1.msra.mxu0 0.0
        %2564 = vmatprep.subr.mxu0 0.0
        %2565 = vmatpush1.msra.mxu0 0.0
        %2566 = vmatprep.subr.mxu0 0.0
        %2567 = vmatpush1.msra.mxu0 0.0
        %2568 = vmatprep.subr.mxu0 0.0
        %2569 = vmatpush1.msra.mxu0 0.0
        %2570 = vmatprep.subr.mxu0 0.0
        %2571 = vmatpush1.msra.mxu0 0.0
        %2572 = vmatprep.subr.mxu0 0.0
        %2573 = vmatpush1.msra.mxu0 0.0
        %2574 = vmatprep.subr.mxu0 0.0
        %2575 = vmatpush1.msra.mxu0 0.0
        %2576 = vmatprep.subr.mxu0 0.0
        %2577 = vmatpush1.msra.mxu0 0.0
        %2578 = vmatprep.subr.mxu0 0.0
        %2579 = vmatpush1.msra.mxu0 0.0
        %2580 = vmatprep.subr.mxu0 0.0
        %2581 = vmatpush1.msra.mxu0 0.0
        %2582 = vmatprep.subr.mxu0 0.0
        %2583 = vmatpush1.msra.mxu0 0.0
        %2584 = vmatprep.subr.mxu0 0.0
        %2585 = vmatpush1.msra.mxu0 0.0
        %2586 = vmatprep.subr.mxu0 0.0
        %2587 = vmatpush1.msra.mxu0 0.0
        %2588 = vmatprep.subr.mxu0 0.0
        %2589 = vmatpush1.msra.mxu0 0.0
        %2590 = vmatprep.subr.mxu0 0.0
        %2591 = vmatpush1.msra.mxu0 0.0
        %2592 = vmatprep.mubr.f32.mxu0 0.0
        %2593 = vmatmul.mubr.f32.gmra.mrb[0].mxu0 %v1327
        %v2594 = vpop.f32.mrb[0].mxu0
        %v2595 = vadd.f32 0.0, %v2594
        %v2596 = vpop.f32.mrb[0].mxu0
        %2597 = vmatprep.mubr.f32.mxu0 0.0
        %2598 = vmatmul.mubr.f32.gmra.mrb[0].mxu0 %v1330
        %v2599 = vpop.f32.mrb[0].mxu0
        %v2600 = vadd.f32 0.0, %v2599
        %v2601 = vpop.f32.mrb[0].mxu0
        %2602 = vmatprep.mubr.f32.mxu0 0.0
        %2603 = vmatmul.mubr.f32.gmra.mrb[0].mxu0 %v1333
        %v2604 = vpop.f32.mrb[0].mxu0
        %v2605 = vadd.f32 0.0, %v2604
        %v2606 = vpop.f32.mrb[0].mxu0
        %2607 = vmatprep.mubr.f32.mxu0 0.0
        %2608 = vmatmul.mubr.f32.gmra.mrb[0].mxu0 %v1336
        %v2609 = vpop.f32.mrb[0].mxu0
        %v2610 = vadd.f32 0.0, %v2609
        %v2611 = vpop.f32.mrb[0].mxu0
        %2612 = vmatprep.mubr.f32.mxu0 0.0
        %2613 = vmatmul.mubr.f32.gmra.mrb[0].mxu0 %v1339
        %v2614 = vpop.f32.mrb[0].mxu0
        %v2615 = vadd.f32 0.0, %v2614
        %v2616 = vpop.f32.mrb[0].mxu0
        %2617 = vmatprep.mubr.f32.mxu0 0.0
        %2618 = vmatmul.mubr.f32.gmra.mrb[0].mxu0 %v1342
        %v2619 = vpop.f32.mrb[0].mxu0
        %v2620 = vadd.f32 0.0, %v2619
        %v2621 = vpop.f32.mrb[0].mxu0
        %2622 = vmatprep.mubr.f32.mxu0 0.0
        %2623 = vmatmul.mubr.f32.gmra.mrb[0].mxu0 %v1345
        %v2624 = vpop.f32.mrb[0].mxu0
        %v2625 = vadd.f32 0.0, %v2624
        %v2626 = vpop.f32.mrb[0].mxu0
        %2627 = vmatprep.mubr.f32.mxu0 0.0
        %2628 = vmatmul.mubr.f32.gmra.mrb[0].mxu0 %v1348
        %v2629 = vpop.f32.mrb[0].mxu0
        %v2630 = vadd.f32 0.0, %v2629
        %v2631 = vpop.f32.mrb[0].mxu0
        %2632 = vmatprep.mubr.f32.mxu0 0.0
        %2633 = vmatmul.mubr.f32.gmra.mrb[0].mxu0 %v1351
        %v2634 = vpop.f32.mrb[0].mxu0
        %v2635 = vadd.f32 0.0, %v2634
        %v2636 = vpop.f32.mrb[0].mxu0
        %2637 = vmatprep.mubr.f32.mxu0 0.0
        %2638 = vmatmul.mubr.f32.gmra.mrb[0].mxu0 %v1354
        %v2639 = vpop.f32.mrb[0].mxu0
        %v2640 = vadd.f32 0.0, %v2639
        %v2641 = vpop.f32.mrb[0].mxu0
        %2642 = vmatprep.mubr.f32.mxu0 0.0
        %2643 = vmatmul.mubr.f32.gmra.mrb[0].mxu0 %v1357
        %v2644 = vpop.f32.mrb[0].mxu0
        %v2645 = vadd.f32 0.0, %v2644
        %v2646 = vpop.f32.mrb[0].mxu0
        %2647 = vmatprep.mubr.f32.mxu0 0.0
        %2648 = vmatmul.mubr.f32.gmra.mrb[0].mxu0 %v1360
        %v2649 = vpop.f32.mrb[0].mxu0
        %v2650 = vadd.f32 0.0, %v2649
        %v2651 = vpop.f32.mrb[0].mxu0
        %2652 = vmatprep.mubr.f32.mxu0 0.0
        %2653 = vmatmul.mubr.f32.gmra.mrb[0].mxu0 %v1363
        %v2654 = vpop.f32.mrb[0].mxu0
        %v2655 = vadd.f32 0.0, %v2654
        %v2656 = vpop.f32.mrb[0].mxu0
        %2657 = vmatprep.mubr.f32.mxu0 0.0
        %2658 = vmatmul.mubr.f32.gmra.mrb[0].mxu0 %v1366
        %v2659 = vpop.f32.mrb[0].mxu0
        %v2660 = vadd.f32 0.0, %v2659
        %v2661 = vpop.f32.mrb[0].mxu0
        %2662 = vmatprep.mubr.f32.mxu0 0.0
        %2663 = vmatmul.mubr.f32.gmra.mrb[0].mxu0 %v1369
        %v2664 = vpop.f32.mrb[0].mxu0
        %v2665 = vadd.f32 0.0, %v2664
        %v2666 = vpop.f32.mrb[0].mxu0
        %2667 = vmatprep.mubr.f32.mxu0 0.0
        %2668 = vmatmul.mubr.f32.gmra.mrb[0].mxu0 %v1372
        %v2669 = vpop.f32.mrb[0].mxu0
        %v2670 = vadd.f32 0.0, %v2669
        %v2671 = vpop.f32.mrb[0].mxu0
        %2672 = vmatprep.mubr.f32.mxu0 0.0
        %2673 = vmatmul.mubr.f32.gmra.mrb[0].mxu0 %v1375
        %v2674 = vpop.f32.mrb[0].mxu0
        %v2675 = vadd.f32 0.0, %v2674
        %v2676 = vpop.f32.mrb[0].mxu0
        %2677 = vmatprep.mubr.f32.mxu0 0.0
        %2678 = vmatmul.mubr.f32.gmra.mrb[0].mxu0 %v1378
        %v2679 = vpop.f32.mrb[0].mxu0
        %v2680 = vadd.f32 0.0, %v2679
        %v2681 = vpop.f32.mrb[0].mxu0
        %2682 = vmatprep.mubr.f32.mxu0 0.0
        %2683 = vmatmul.mubr.f32.gmra.mrb[0].mxu0 %v1381
        %v2684 = vpop.f32.mrb[0].mxu0
        %v2685 = vadd.f32 0.0, %v2684
        %v2686 = vpop.f32.mrb[0].mxu0
        %2687 = vmatprep.mubr.f32.mxu0 0.0
        %2688 = vmatmul.mubr.f32.gmra.mrb[0].mxu0 %v1384
        %v2689 = vpop.f32.mrb[0].mxu0
        %v2690 = vadd.f32 0.0, %v2689
        %v2691 = vpop.f32.mrb[0].mxu0
        %2692 = vmatprep.mubr.f32.mxu0 0.0
        %2693 = vmatmul.mubr.f32.gmra.mrb[0].mxu0 %v1387
        %v2694 = vpop.f32.mrb[0].mxu0
        %v2695 = vadd.f32 0.0, %v2694
        %v2696 = vpop.f32.mrb[0].mxu0
        %2697 = vmatprep.mubr.f32.mxu0 0.0
        %2698 = vmatmul.mubr.f32.gmra.mrb[0].mxu0 %v1390
        %v2699 = vpop.f32.mrb[0].mxu0
        %v2700 = vadd.f32 0.0, %v2699
        %v2701 = vpop.f32.mrb[0].mxu0
        %2702 = vmatprep.mubr.f32.mxu0 0.0
        %2703 = vmatmul.mubr.f32.gmra.mrb[0].mxu0 %v1393
        %v2704 = vpop.f32.mrb[0].mxu0
        %v2705 = vadd.f32 0.0, %v2704
        %v2706 = vpop.f32.mrb[0].mxu0
        %2707 = vmatprep.mubr.f32.mxu0 0.0
        %2708 = vmatmul.mubr.f32.gmra.mrb[0].mxu0 %v1396
        %v2709 = vpop.f32.mrb[0].mxu0
        %v2710 = vadd.f32 0.0, %v2709
        %v2711 = vpop.f32.mrb[0].mxu0
        %2712 = vmatprep.mubr.f32.mxu0 0.0
        %2713 = vmatmul.mubr.f32.gmra.mrb[0].mxu0 %v1399
        %v2714 = vpop.f32.mrb[0].mxu0
        %v2715 = vadd.f32 0.0, %v2714
        %v2716 = vpop.f32.mrb[0].mxu0
        %2717 = vmatprep.mubr.f32.mxu0 0.0
        %2718 = vmatmul.mubr.f32.gmra.mrb[0].mxu0 %v1402
        %v2719 = vpop.f32.mrb[0].mxu0
        %v2720 = vadd.f32 0.0, %v2719
        %v2721 = vpop.f32.mrb[0].mxu0
        %2722 = vmatprep.mubr.f32.mxu0 0.0
        %2723 = vmatmul.mubr.f32.gmra.mrb[0].mxu0 %v1405
        %v2724 = vpop.f32.mrb[0].mxu0
        %v2725 = vadd.f32 0.0, %v2724
        %v2726 = vpop.f32.mrb[0].mxu0
        %2727 = vmatprep.mubr.f32.mxu0 0.0
        %2728 = vmatmul.mubr.f32.gmra.mrb[0].mxu0 %v1408
        %v2729 = vpop.f32.mrb[0].mxu0
        %v2730 = vadd.f32 0.0, %v2729
        %v2731 = vpop.f32.mrb[0].mxu0
        %2732 = vmatprep.mubr.f32.mxu0 0.0
        %2733 = vmatmul.mubr.f32.gmra.mrb[0].mxu0 %v1411
        %v2734 = vpop.f32.mrb[0].mxu0
        %v2735 = vadd.f32 0.0, %v2734
        %v2736 = vpop.f32.mrb[0].mxu0
        %2737 = vmatprep.mubr.f32.mxu0 0.0
        %2738 = vmatmul.mubr.f32.gmra.mrb[0].mxu0 %v1414
        %v2739 = vpop.f32.mrb[0].mxu0
        %v2740 = vadd.f32 0.0, %v2739
        %v2741 = vpop.f32.mrb[0].mxu0
        %2742 = vmatprep.mubr.f32.mxu0 0.0
        %2743 = vmatmul.mubr.f32.gmra.mrb[0].mxu0 %v1417
        %v2744 = vpop.f32.mrb[0].mxu0
        %v2745 = vadd.f32 0.0, %v2744
        %v2746 = vpop.f32.mrb[0].mxu0
        %2747 = vmatprep.mubr.f32.mxu0 0.0
        %2748 = vmatmul.mubr.f32.gmra.mrb[0].mxu0 %v1420
        %v2749 = vpop.f32.mrb[0].mxu0
        %v2750 = vadd.f32 0.0, %v2749
        %v2751 = vpop.f32.mrb[0].mxu0
        %2752 = vmatprep.mubr.f32.mxu0 0.0
        %2753 = vmatmul.mubr.f32.gmra.mrb[0].mxu0 %v1423
        %v2754 = vpop.f32.mrb[0].mxu0
        %v2755 = vadd.f32 0.0, %v2754
        %v2756 = vpop.f32.mrb[0].mxu0
        %2757 = vmatprep.mubr.f32.mxu0 0.0
        %2758 = vmatmul.mubr.f32.gmra.mrb[0].mxu0 %v1426
        %v2759 = vpop.f32.mrb[0].mxu0
        %v2760 = vadd.f32 0.0, %v2759
        %v2761 = vpop.f32.mrb[0].mxu0
        %2762 = vmatprep.mubr.f32.mxu0 0.0
        %2763 = vmatmul.mubr.f32.gmra.mrb[0].mxu0 %v1429
        %v2764 = vpop.f32.mrb[0].mxu0
        %v2765 = vadd.f32 0.0, %v2764
        %v2766 = vpop.f32.mrb[0].mxu0
        %2767 = vmatprep.mubr.f32.mxu0 0.0
        %2768 = vmatmul.mubr.f32.gmra.mrb[0].mxu0 %v1432
        %v2769 = vpop.f32.mrb[0].mxu0
        %v2770 = vadd.f32 0.0, %v2769
        %v2771 = vpop.f32.mrb[0].mxu0
        %2772 = vmatprep.mubr.f32.mxu0 0.0
        %2773 = vmatmul.mubr.f32.gmra.mrb[0].mxu0 %v1435
        %v2774 = vpop.f32.mrb[0].mxu0
        %v2775 = vadd.f32 0.0, %v2774
        %v2776 = vpop.f32.mrb[0].mxu0
        %2777 = vmatprep.mubr.f32.mxu0 0.0
        %2778 = vmatmul.mubr.f32.gmra.mrb[0].mxu0 %v1438
        %v2779 = vpop.f32.mrb[0].mxu0
        %v2780 = vadd.f32 0.0, %v2779
        %v2781 = vpop.f32.mrb[0].mxu0
        %2782 = vmatprep.mubr.f32.mxu0 0.0
        %2783 = vmatmul.mubr.f32.gmra.mrb[0].mxu0 %v1441
        %v2784 = vpop.f32.mrb[0].mxu0
        %v2785 = vadd.f32 0.0, %v2784
        %v2786 = vpop.f32.mrb[0].mxu0
        %2787 = vmatprep.mubr.f32.mxu0 0.0
        %2788 = vmatmul.mubr.f32.gmra.mrb[0].mxu0 %v1444
        %v2789 = vpop.f32.mrb[0].mxu0
        %v2790 = vadd.f32 0.0, %v2789
        %v2791 = vpop.f32.mrb[0].mxu0
        %2792 = vmatprep.mubr.f32.mxu0 0.0
        %2793 = vmatmul.mubr.f32.gmra.mrb[0].mxu0 %v1447
        %v2794 = vpop.f32.mrb[0].mxu0
        %v2795 = vadd.f32 0.0, %v2794
        %v2796 = vpop.f32.mrb[0].mxu0
        %2797 = vmatprep.mubr.f32.mxu0 0.0
        %2798 = vmatmul.mubr.f32.gmra.mrb[0].mxu0 %v1450
        %v2799 = vpop.f32.mrb[0].mxu0
        %v2800 = vadd.f32 0.0, %v2799
        %v2801 = vpop.f32.mrb[0].mxu0
        %2802 = vmatprep.mubr.f32.mxu0 0.0
        %2803 = vmatmul.mubr.f32.gmra.mrb[0].mxu0 %v1453
        %v2804 = vpop.f32.mrb[0].mxu0
        %v2805 = vadd.f32 0.0, %v2804
        %v2806 = vpop.f32.mrb[0].mxu0
        %2807 = vmatprep.mubr.f32.mxu0 0.0
        %2808 = vmatmul.mubr.f32.gmra.mrb[0].mxu0 %v1456
        %v2809 = vpop.f32.mrb[0].mxu0
        %v2810 = vadd.f32 0.0, %v2809
        %v2811 = vpop.f32.mrb[0].mxu0
        %2812 = vmatprep.mubr.f32.mxu0 0.0
        %2813 = vmatmul.mubr.f32.gmra.mrb[0].mxu0 %v1459
        %v2814 = vpop.f32.mrb[0].mxu0
        %v2815 = vadd.f32 0.0, %v2814
        %v2816 = vpop.f32.mrb[0].mxu0
        %2817 = vmatprep.mubr.f32.mxu0 0.0
        %2818 = vmatmul.mubr.f32.gmra.mrb[0].mxu0 %v1462
        %v2819 = vpop.f32.mrb[0].mxu0
        %v2820 = vadd.f32 0.0, %v2819
        %v2821 = vpop.f32.mrb[0].mxu0
        %2822 = vmatprep.mubr.f32.mxu0 0.0
        %2823 = vmatmul.mubr.f32.gmra.mrb[0].mxu0 %v1465
        %v2824 = vpop.f32.mrb[0].mxu0
        %v2825 = vadd.f32 0.0, %v2824
        %v2826 = vpop.f32.mrb[0].mxu0
        %2827 = vmatprep.mubr.f32.mxu0 0.0
        %2828 = vmatmul.mubr.f32.gmra.mrb[0].mxu0 %v1468
        %v2829 = vpop.f32.mrb[0].mxu0
        %v2830 = vadd.f32 0.0, %v2829
        %v2831 = vpop.f32.mrb[0].mxu0
        %2832 = vmatprep.mubr.f32.mxu0 0.0
        %2833 = vmatmul.mubr.f32.gmra.mrb[0].mxu0 %v1471
        %v2834 = vpop.f32.mrb[0].mxu0
        %v2835 = vadd.f32 0.0, %v2834
        %v2836 = vpop.f32.mrb[0].mxu0
        %2837 = vmatprep.mubr.f32.mxu0 0.0
        %2838 = vmatmul.mubr.f32.gmra.mrb[0].mxu0 %v1474
        %v2839 = vpop.f32.mrb[0].mxu0
        %v2840 = vadd.f32 0.0, %v2839
        %v2841 = vpop.f32.mrb[0].mxu0
        %2842 = vmatprep.mubr.f32.mxu0 0.0
        %2843 = vmatmul.mubr.f32.gmra.mrb[0].mxu0 %v1477
        %v2844 = vpop.f32.mrb[0].mxu0
        %v2845 = vadd.f32 0.0, %v2844
        %v2846 = vpop.f32.mrb[0].mxu0
        %2847 = vmatprep.mubr.f32.mxu0 0.0
        %2848 = vmatmul.mubr.f32.gmra.mrb[0].mxu0 %v1480
        %v2849 = vpop.f32.mrb[0].mxu0
        %v2850 = vadd.f32 0.0, %v2849
        %v2851 = vpop.f32.mrb[0].mxu0
        %2852 = vmatprep.mubr.f32.mxu0 0.0
        %2853 = vmatmul.mubr.f32.gmra.mrb[0].mxu0 %v1483
        %v2854 = vpop.f32.mrb[0].mxu0
        %v2855 = vadd.f32 0.0, %v2854
        %v2856 = vpop.f32.mrb[0].mxu0
        %2857 = vmatprep.mubr.f32.mxu0 0.0
        %2858 = vmatmul.mubr.f32.gmra.mrb[0].mxu0 %v1486
        %v2859 = vpop.f32.mrb[0].mxu0
        %v2860 = vadd.f32 0.0, %v2859
        %v2861 = vpop.f32.mrb[0].mxu0
        %2862 = vmatprep.mubr.f32.mxu0 0.0
        %2863 = vmatmul.mubr.f32.gmra.mrb[0].mxu0 %v1489
        %v2864 = vpop.f32.mrb[0].mxu0
        %v2865 = vadd.f32 0.0, %v2864
        %v2866 = vpop.f32.mrb[0].mxu0
        %2867 = vmatprep.mubr.f32.mxu0 0.0
        %2868 = vmatmul.mubr.f32.gmra.mrb[0].mxu0 %v1492
        %v2869 = vpop.f32.mrb[0].mxu0
        %v2870 = vadd.f32 0.0, %v2869
        %v2871 = vpop.f32.mrb[0].mxu0
        %2872 = vmatprep.mubr.f32.mxu0 0.0
        %2873 = vmatmul.mubr.f32.gmra.mrb[0].mxu0 %v1495
        %v2874 = vpop.f32.mrb[0].mxu0
        %v2875 = vadd.f32 0.0, %v2874
        %v2876 = vpop.f32.mrb[0].mxu0
        %2877 = vmatprep.mubr.f32.mxu0 0.0
        %2878 = vmatmul.mubr.f32.gmra.mrb[0].mxu0 %v1498
        %v2879 = vpop.f32.mrb[0].mxu0
        %v2880 = vadd.f32 0.0, %v2879
        %v2881 = vpop.f32.mrb[0].mxu0
        %2882 = vmatprep.mubr.f32.mxu0 0.0
        %2883 = vmatmul.mubr.f32.gmra.mrb[0].mxu0 %v1501
        %v2884 = vpop.f32.mrb[0].mxu0
        %v2885 = vadd.f32 0.0, %v2884
        %v2886 = vpop.f32.mrb[0].mxu0
        %2887 = vmatprep.mubr.f32.mxu0 0.0
        %2888 = vmatmul.mubr.f32.gmra.mrb[0].mxu0 %v1504
        %v2889 = vpop.f32.mrb[0].mxu0
        %v2890 = vadd.f32 0.0, %v2889
        %v2891 = vpop.f32.mrb[0].mxu0
        %2892 = vmatprep.mubr.f32.mxu0 0.0
        %2893 = vmatmul.mubr.f32.gmra.mrb[0].mxu0 %v1507
        %v2894 = vpop.f32.mrb[0].mxu0
        %v2895 = vadd.f32 0.0, %v2894
        %v2896 = vpop.f32.mrb[0].mxu0
        %2897 = vmatprep.mubr.f32.mxu0 0.0
        %2898 = vmatmul.mubr.f32.gmra.mrb[0].mxu0 %v1510
        %v2899 = vpop.f32.mrb[0].mxu0
        %v2900 = vadd.f32 0.0, %v2899
        %v2901 = vpop.f32.mrb[0].mxu0
        %2902 = vmatprep.mubr.f32.mxu0 0.0
        %2903 = vmatmul.mubr.f32.gmra.mrb[0].mxu0 %v1513
        %v2904 = vpop.f32.mrb[0].mxu0
        %v2905 = vadd.f32 0.0, %v2904
        %v2906 = vpop.f32.mrb[0].mxu0
        %2907 = vmatprep.mubr.f32.mxu0 0.0
        %2908 = vmatmul.mubr.f32.gmra.mrb[0].mxu0 %v1516
        %v2909 = vpop.f32.mrb[0].mxu0
        %v2910 = vadd.f32 0.0, %v2909
        %v2911 = vpop.f32.mrb[0].mxu0
        %2912 = vdwg.mxu0
        %v2913 = vadd.f32 %v888, %v2595
        %v2914 = vadd.f32 %v893, %v2600
        %v2915 = vadd.f32 %v898, %v2605
        %v2916 = vadd.f32 %v903, %v2610
        %v2917 = vadd.f32 %v908, %v2615
        %v2918 = vadd.f32 %v913, %v2620
        %v2919 = vadd.f32 %v918, %v2625
        %v2920 = vadd.f32 %v923, %v2630
        %v2921 = vadd.f32 %v928, %v2635
        %v2922 = vadd.f32 %v933, %v2640
        %v2923 = vadd.f32 %v938, %v2645
        %v2924 = vadd.f32 %v943, %v2650
        %v2925 = vadd.f32 %v948, %v2655
        %v2926 = vadd.f32 %v953, %v2660
        %v2927 = vadd.f32 %v958, %v2665
        %v2928 = vadd.f32 %v963, %v2670
        %v2929 = vadd.f32 %v968, %v2675
        %v2930 = vadd.f32 %v973, %v2680
        %v2931 = vadd.f32 %v978, %v2685
        %v2932 = vadd.f32 %v983, %v2690
        %v2933 = vadd.f32 %v988, %v2695
        %v2934 = vadd.f32 %v993, %v2700
        %v2935 = vadd.f32 %v998, %v2705
        %v2936 = vadd.f32 %v1003, %v2710
        %v2937 = vadd.f32 %v1008, %v2715
        %v2938 = vadd.f32 %v1013, %v2720
        %v2939 = vadd.f32 %v1018, %v2725
        %v2940 = vadd.f32 %v1023, %v2730
        %v2941 = vadd.f32 %v1028, %v2735
        %v2942 = vadd.f32 %v1033, %v2740
        %v2943 = vadd.f32 %v1038, %v2745
        %v2944 = vadd.f32 %v1043, %v2750
        %v2945 = vadd.f32 %v1048, %v2755
        %v2946 = vadd.f32 %v1053, %v2760
        %v2947 = vadd.f32 %v1058, %v2765
        %v2948 = vadd.f32 %v1063, %v2770
        %v2949 = vadd.f32 %v1068, %v2775
        %v2950 = vadd.f32 %v1073, %v2780
        %v2951 = vadd.f32 %v1078, %v2785
        %v2952 = vadd.f32 %v1083, %v2790
        %v2953 = vadd.f32 %v1088, %v2795
        %v2954 = vadd.f32 %v1093, %v2800
        %v2955 = vadd.f32 %v1098, %v2805
        %v2956 = vadd.f32 %v1103, %v2810
        %v2957 = vadd.f32 %v1108, %v2815
        %v2958 = vadd.f32 %v1113, %v2820
        %v2959 = vadd.f32 %v1118, %v2825
        %v2960 = vadd.f32 %v1123, %v2830
        %v2961 = vadd.f32 %v1128, %v2835
        %v2962 = vadd.f32 %v1133, %v2840
        %v2963 = vadd.f32 %v1138, %v2845
        %v2964 = vadd.f32 %v1143, %v2850
        %v2965 = vadd.f32 %v1148, %v2855
        %v2966 = vadd.f32 %v1153, %v2860
        %v2967 = vadd.f32 %v1158, %v2865
        %v2968 = vadd.f32 %v1163, %v2870
        %v2969 = vadd.f32 %v1168, %v2875
        %v2970 = vadd.f32 %v1173, %v2880
        %v2971 = vadd.f32 %v1178, %v2885
        %v2972 = vadd.f32 %v1183, %v2890
        %v2973 = vadd.f32 %v1188, %v2895
        %v2974 = vadd.f32 %v1193, %v2900
        %v2975 = vadd.f32 %v1198, %v2905
        %v2976 = vadd.f32 %v1203, %v2910
        %v2977 = vmax.f32 %v2913, %v2921
        %v2978 = vmax.f32 %v2914, %v2922
        %v2979 = vmax.f32 %v2915, %v2923
        %v2980 = vmax.f32 %v2916, %v2924
        %v2981 = vmax.f32 %v2917, %v2925
        %v2982 = vmax.f32 %v2918, %v2926
        %v2983 = vmax.f32 %v2919, %v2927
        %v2984 = vmax.f32 %v2920, %v2928
        %v2985 = vmax.f32 %v2977, %v2929
        %v2986 = vmax.f32 %v2978, %v2930
        %v2987 = vmax.f32 %v2979, %v2931
        %v2988 = vmax.f32 %v2980, %v2932
        %v2989 = vmax.f32 %v2981, %v2933
        %v2990 = vmax.f32 %v2982, %v2934
        %v2991 = vmax.f32 %v2983, %v2935
        %v2992 = vmax.f32 %v2984, %v2936
        %v2993 = vmax.f32 %v2985, %v2937
        %v2994 = vmax.f32 %v2986, %v2938
        %v2995 = vmax.f32 %v2987, %v2939
        %v2996 = vmax.f32 %v2988, %v2940
        %v2997 = vmax.f32 %v2989, %v2941
        %v2998 = vmax.f32 %v2990, %v2942
        %v2999 = vmax.f32 %v2991, %v2943
        %v3000 = vmax.f32 %v2992, %v2944
        %v3001 = vmax.f32 %v2993, %v2945
        %v3002 = vmax.f32 %v2994, %v2946
        %v3003 = vmax.f32 %v2995, %v2947
        %v3004 = vmax.f32 %v2996, %v2948
        %v3005 = vmax.f32 %v2997, %v2949
        %v3006 = vmax.f32 %v2998, %v2950
        %v3007 = vmax.f32 %v2999, %v2951
        %v3008 = vmax.f32 %v3000, %v2952
        %v3009 = vmax.f32 %v3001, %v2953
        %v3010 = vmax.f32 %v3002, %v2954
        %v3011 = vmax.f32 %v3003, %v2955
        %v3012 = vmax.f32 %v3004, %v2956
        %v3013 = vmax.f32 %v3005, %v2957
        %v3014 = vmax.f32 %v3006, %v2958
        %v3015 = vmax.f32 %v3007, %v2959
        %v3016 = vmax.f32 %v3008, %v2960
        %v3017 = vmax.f32 %v3009, %v2961
        %v3018 = vmax.f32 %v3010, %v2962
        %v3019 = vmax.f32 %v3011, %v2963
        %v3020 = vmax.f32 %v3012, %v2964
        %v3021 = vmax.f32 %v3013, %v2965
        %v3022 = vmax.f32 %v3014, %v2966
        %v3023 = vmax.f32 %v3015, %v2967
        %v3024 = vmax.f32 %v3016, %v2968
        %v3025 = vmax.f32 %v3017, %v2969
        %v3026 = vmax.f32 %v3018, %v2970
        %v3027 = vmax.f32 %v3019, %v2971
        %v3028 = vmax.f32 %v3020, %v2972
        %v3029 = vmax.f32 %v3021, %v2973
        %v3030 = vmax.f32 %v3022, %v2974
        %v3031 = vmax.f32 %v3023, %v2975
        %v3032 = vmax.f32 %v3024, %v2976
        %3033 = vmatprep.subr.mxu0 0.0
        %3034 = vmatpush1.msra.mxu0 %v3025
        %3035 = vmatprep.subr.mxu0 0.0
        %3036 = vmatpush1.msra.mxu0 %v3026
        %3037 = vmatprep.subr.mxu0 0.0
        %3038 = vmatpush1.msra.mxu0 %v3027
        %3039 = vmatprep.subr.mxu0 0.0
        %3040 = vmatpush1.msra.mxu0 %v3028
        %3041 = vmatprep.subr.mxu0 0.0
        %3042 = vmatpush1.msra.mxu0 %v3029
        %3043 = vmatprep.subr.mxu0 0.0
        %3044 = vmatpush1.msra.mxu0 %v3030
        %3045 = vmatprep.subr.mxu0 0.0
        %3046 = vmatpush1.msra.mxu0 %v3031
        %3047 = vmatprep.subr.mxu0 0.0
        %3048 = vmatpush1.msra.mxu0 %v3032
        %3049 = vmatprep.subr.mxu0 0.0
        %3050 = vmatpush1.msra.mxu0 0.0
        %3051 = vmatprep.subr.mxu0 0.0
        %3052 = vmatpush1.msra.mxu0 0.0
        %3053 = vmatprep.subr.mxu0 0.0
        %3054 = vmatpush1.msra.mxu0 0.0
        %3055 = vmatprep.subr.mxu0 0.0
        %3056 = vmatpush1.msra.mxu0 0.0
        %3057 = vmatprep.subr.mxu0 0.0
        %3058 = vmatpush1.msra.mxu0 0.0
        %3059 = vmatprep.subr.mxu0 0.0
        %3060 = vmatpush1.msra.mxu0 0.0
        %3061 = vmatprep.subr.mxu0 0.0
        %3062 = vmatpush1.msra.mxu0 0.0
        %3063 = vmatprep.subr.mxu0 0.0
        %3064 = vmatpush1.msra.mxu0 0.0
        %3065 = vmatprep.subr.mxu0 0.0
        %3066 = vmatpush1.msra.mxu0 0.0
        %3067 = vmatprep.subr.mxu0 0.0
        %3068 = vmatpush1.msra.mxu0 0.0
        %3069 = vmatprep.subr.mxu0 0.0
        %3070 = vmatpush1.msra.mxu0 0.0
        %3071 = vmatprep.subr.mxu0 0.0
        %3072 = vmatpush1.msra.mxu0 0.0
        %3073 = vmatprep.subr.mxu0 0.0
        %3074 = vmatpush1.msra.mxu0 0.0
        %3075 = vmatprep.subr.mxu0 0.0
        %3076 = vmatpush1.msra.mxu0 0.0
        %3077 = vmatprep.subr.mxu0 0.0
        %3078 = vmatpush1.msra.mxu0 0.0
        %3079 = vmatprep.subr.mxu0 0.0
        %3080 = vmatpush1.msra.mxu0 0.0
        %3081 = vmatprep.subr.mxu0 0.0
        %3082 = vmatpush1.msra.mxu0 0.0
        %3083 = vmatprep.subr.mxu0 0.0
        %3084 = vmatpush1.msra.mxu0 0.0
        %3085 = vmatprep.subr.mxu0 0.0
        %3086 = vmatpush1.msra.mxu0 0.0
        %3087 = vmatprep.subr.mxu0 0.0
        %3088 = vmatpush1.msra.mxu0 0.0
        %3089 = vmatprep.subr.mxu0 0.0
        %3090 = vmatpush1.msra.mxu0 0.0
        %3091 = vmatprep.subr.mxu0 0.0
        %3092 = vmatpush1.msra.mxu0 0.0
        %3093 = vmatprep.subr.mxu0 0.0
        %3094 = vmatpush1.msra.mxu0 0.0
        %3095 = vmatprep.subr.mxu0 0.0
        %3096 = vmatpush1.msra.mxu0 0.0
        %3097 = vmatprep.mubr.f32.mxu0 0.0
        %3098 = vmatmul.mubr.f32.gmra.mrb[0].mxu0 %v1327
        %v3099 = vpop.f32.mrb[0].mxu0
        %v3100 = vadd.f32 0.0, %v3099
        %v3101 = vpop.f32.mrb[0].mxu0
        %3102 = vmatprep.mubr.f32.mxu0 0.0
        %3103 = vmatmul.mubr.f32.gmra.mrb[0].mxu0 %v1330
        %v3104 = vpop.f32.mrb[0].mxu0
        %v3105 = vadd.f32 0.0, %v3104
        %v3106 = vpop.f32.mrb[0].mxu0
        %3107 = vmatprep.mubr.f32.mxu0 0.0
        %3108 = vmatmul.mubr.f32.gmra.mrb[0].mxu0 %v1333
        %v3109 = vpop.f32.mrb[0].mxu0
        %v3110 = vadd.f32 0.0, %v3109
        %v3111 = vpop.f32.mrb[0].mxu0
        %3112 = vmatprep.mubr.f32.mxu0 0.0
        %3113 = vmatmul.mubr.f32.gmra.mrb[0].mxu0 %v1336
        %v3114 = vpop.f32.mrb[0].mxu0
        %v3115 = vadd.f32 0.0, %v3114
        %v3116 = vpop.f32.mrb[0].mxu0
        %3117 = vmatprep.mubr.f32.mxu0 0.0
        %3118 = vmatmul.mubr.f32.gmra.mrb[0].mxu0 %v1339
        %v3119 = vpop.f32.mrb[0].mxu0
        %v3120 = vadd.f32 0.0, %v3119
        %v3121 = vpop.f32.mrb[0].mxu0
        %3122 = vmatprep.mubr.f32.mxu0 0.0
        %3123 = vmatmul.mubr.f32.gmra.mrb[0].mxu0 %v1342
        %v3124 = vpop.f32.mrb[0].mxu0
        %v3125 = vadd.f32 0.0, %v3124
        %v3126 = vpop.f32.mrb[0].mxu0
        %3127 = vmatprep.mubr.f32.mxu0 0.0
        %3128 = vmatmul.mubr.f32.gmra.mrb[0].mxu0 %v1345
        %v3129 = vpop.f32.mrb[0].mxu0
        %v3130 = vadd.f32 0.0, %v3129
        %v3131 = vpop.f32.mrb[0].mxu0
        %3132 = vmatprep.mubr.f32.mxu0 0.0
        %3133 = vmatmul.mubr.f32.gmra.mrb[0].mxu0 %v1348
        %v3134 = vpop.f32.mrb[0].mxu0
        %v3135 = vadd.f32 0.0, %v3134
        %v3136 = vpop.f32.mrb[0].mxu0
        %3137 = vmatprep.mubr.f32.mxu0 0.0
        %3138 = vmatmul.mubr.f32.gmra.mrb[0].mxu0 %v1351
        %v3139 = vpop.f32.mrb[0].mxu0
        %v3140 = vadd.f32 0.0, %v3139
        %v3141 = vpop.f32.mrb[0].mxu0
        %3142 = vmatprep.mubr.f32.mxu0 0.0
        %3143 = vmatmul.mubr.f32.gmra.mrb[0].mxu0 %v1354
        %v3144 = vpop.f32.mrb[0].mxu0
        %v3145 = vadd.f32 0.0, %v3144
        %v3146 = vpop.f32.mrb[0].mxu0
        %3147 = vmatprep.mubr.f32.mxu0 0.0
        %3148 = vmatmul.mubr.f32.gmra.mrb[0].mxu0 %v1357
        %v3149 = vpop.f32.mrb[0].mxu0
        %v3150 = vadd.f32 0.0, %v3149
        %v3151 = vpop.f32.mrb[0].mxu0
        %3152 = vmatprep.mubr.f32.mxu0 0.0
        %3153 = vmatmul.mubr.f32.gmra.mrb[0].mxu0 %v1360
        %v3154 = vpop.f32.mrb[0].mxu0
        %v3155 = vadd.f32 0.0, %v3154
        %v3156 = vpop.f32.mrb[0].mxu0
        %3157 = vmatprep.mubr.f32.mxu0 0.0
        %3158 = vmatmul.mubr.f32.gmra.mrb[0].mxu0 %v1363
        %v3159 = vpop.f32.mrb[0].mxu0
        %v3160 = vadd.f32 0.0, %v3159
        %v3161 = vpop.f32.mrb[0].mxu0
        %3162 = vmatprep.mubr.f32.mxu0 0.0
        %3163 = vmatmul.mubr.f32.gmra.mrb[0].mxu0 %v1366
        %v3164 = vpop.f32.mrb[0].mxu0
        %v3165 = vadd.f32 0.0, %v3164
        %v3166 = vpop.f32.mrb[0].mxu0
        %3167 = vmatprep.mubr.f32.mxu0 0.0
        %3168 = vmatmul.mubr.f32.gmra.mrb[0].mxu0 %v1369
        %v3169 = vpop.f32.mrb[0].mxu0
        %v3170 = vadd.f32 0.0, %v3169
        %v3171 = vpop.f32.mrb[0].mxu0
        %3172 = vmatprep.mubr.f32.mxu0 0.0
        %3173 = vmatmul.mubr.f32.gmra.mrb[0].mxu0 %v1372
        %v3174 = vpop.f32.mrb[0].mxu0
        %v3175 = vadd.f32 0.0, %v3174
        %v3176 = vpop.f32.mrb[0].mxu0
        %3177 = vmatprep.mubr.f32.mxu0 0.0
        %3178 = vmatmul.mubr.f32.gmra.mrb[0].mxu0 %v1375
        %v3179 = vpop.f32.mrb[0].mxu0
        %v3180 = vadd.f32 0.0, %v3179
        %v3181 = vpop.f32.mrb[0].mxu0
        %3182 = vmatprep.mubr.f32.mxu0 0.0
        %3183 = vmatmul.mubr.f32.gmra.mrb[0].mxu0 %v1378
        %v3184 = vpop.f32.mrb[0].mxu0
        %v3185 = vadd.f32 0.0, %v3184
        %v3186 = vpop.f32.mrb[0].mxu0
        %3187 = vmatprep.mubr.f32.mxu0 0.0
        %3188 = vmatmul.mubr.f32.gmra.mrb[0].mxu0 %v1381
        %v3189 = vpop.f32.mrb[0].mxu0
        %v3190 = vadd.f32 0.0, %v3189
        %v3191 = vpop.f32.mrb[0].mxu0
        %3192 = vmatprep.mubr.f32.mxu0 0.0
        %3193 = vmatmul.mubr.f32.gmra.mrb[0].mxu0 %v1384
        %v3194 = vpop.f32.mrb[0].mxu0
        %v3195 = vadd.f32 0.0, %v3194
        %v3196 = vpop.f32.mrb[0].mxu0
        %3197 = vmatprep.mubr.f32.mxu0 0.0
        %3198 = vmatmul.mubr.f32.gmra.mrb[0].mxu0 %v1387
        %v3199 = vpop.f32.mrb[0].mxu0
        %v3200 = vadd.f32 0.0, %v3199
        %v3201 = vpop.f32.mrb[0].mxu0
        %3202 = vmatprep.mubr.f32.mxu0 0.0
        %3203 = vmatmul.mubr.f32.gmra.mrb[0].mxu0 %v1390
        %v3204 = vpop.f32.mrb[0].mxu0
        %v3205 = vadd.f32 0.0, %v3204
        %v3206 = vpop.f32.mrb[0].mxu0
        %3207 = vmatprep.mubr.f32.mxu0 0.0
        %3208 = vmatmul.mubr.f32.gmra.mrb[0].mxu0 %v1393
        %v3209 = vpop.f32.mrb[0].mxu0
        %v3210 = vadd.f32 0.0, %v3209
        %v3211 = vpop.f32.mrb[0].mxu0
        %3212 = vmatprep.mubr.f32.mxu0 0.0
        %3213 = vmatmul.mubr.f32.gmra.mrb[0].mxu0 %v1396
        %v3214 = vpop.f32.mrb[0].mxu0
        %v3215 = vadd.f32 0.0, %v3214
        %v3216 = vpop.f32.mrb[0].mxu0
        %3217 = vmatprep.mubr.f32.mxu0 0.0
        %3218 = vmatmul.mubr.f32.gmra.mrb[0].mxu0 %v1399
        %v3219 = vpop.f32.mrb[0].mxu0
        %v3220 = vadd.f32 0.0, %v3219
        %v3221 = vpop.f32.mrb[0].mxu0
        %3222 = vmatprep.mubr.f32.mxu0 0.0
        %3223 = vmatmul.mubr.f32.gmra.mrb[0].mxu0 %v1402
        %v3224 = vpop.f32.mrb[0].mxu0
        %v3225 = vadd.f32 0.0, %v3224
        %v3226 = vpop.f32.mrb[0].mxu0
        %3227 = vmatprep.mubr.f32.mxu0 0.0
        %3228 = vmatmul.mubr.f32.gmra.mrb[0].mxu0 %v1405
        %v3229 = vpop.f32.mrb[0].mxu0
        %v3230 = vadd.f32 0.0, %v3229
        %v3231 = vpop.f32.mrb[0].mxu0
        %3232 = vmatprep.mubr.f32.mxu0 0.0
        %3233 = vmatmul.mubr.f32.gmra.mrb[0].mxu0 %v1408
        %v3234 = vpop.f32.mrb[0].mxu0
        %v3235 = vadd.f32 0.0, %v3234
        %v3236 = vpop.f32.mrb[0].mxu0
        %3237 = vmatprep.mubr.f32.mxu0 0.0
        %3238 = vmatmul.mubr.f32.gmra.mrb[0].mxu0 %v1411
        %v3239 = vpop.f32.mrb[0].mxu0
        %v3240 = vadd.f32 0.0, %v3239
        %v3241 = vpop.f32.mrb[0].mxu0
        %3242 = vmatprep.mubr.f32.mxu0 0.0
        %3243 = vmatmul.mubr.f32.gmra.mrb[0].mxu0 %v1414
        %v3244 = vpop.f32.mrb[0].mxu0
        %v3245 = vadd.f32 0.0, %v3244
        %v3246 = vpop.f32.mrb[0].mxu0
        %3247 = vmatprep.mubr.f32.mxu0 0.0
        %3248 = vmatmul.mubr.f32.gmra.mrb[0].mxu0 %v1417
        %v3249 = vpop.f32.mrb[0].mxu0
        %v3250 = vadd.f32 0.0, %v3249
        %v3251 = vpop.f32.mrb[0].mxu0
        %3252 = vmatprep.mubr.f32.mxu0 0.0
        %3253 = vmatmul.mubr.f32.gmra.mrb[0].mxu0 %v1420
        %v3254 = vpop.f32.mrb[0].mxu0
        %v3255 = vadd.f32 0.0, %v3254
        %v3256 = vpop.f32.mrb[0].mxu0
        %3257 = vmatprep.mubr.f32.mxu0 0.0
        %3258 = vmatmul.mubr.f32.gmra.mrb[0].mxu0 %v1423
        %v3259 = vpop.f32.mrb[0].mxu0
        %v3260 = vadd.f32 0.0, %v3259
        %v3261 = vpop.f32.mrb[0].mxu0
        %3262 = vmatprep.mubr.f32.mxu0 0.0
        %3263 = vmatmul.mubr.f32.gmra.mrb[0].mxu0 %v1426
        %v3264 = vpop.f32.mrb[0].mxu0
        %v3265 = vadd.f32 0.0, %v3264
        %v3266 = vpop.f32.mrb[0].mxu0
        %3267 = vmatprep.mubr.f32.mxu0 0.0
        %3268 = vmatmul.mubr.f32.gmra.mrb[0].mxu0 %v1429
        %v3269 = vpop.f32.mrb[0].mxu0
        %v3270 = vadd.f32 0.0, %v3269
        %v3271 = vpop.f32.mrb[0].mxu0
        %3272 = vmatprep.mubr.f32.mxu0 0.0
        %3273 = vmatmul.mubr.f32.gmra.mrb[0].mxu0 %v1432
        %v3274 = vpop.f32.mrb[0].mxu0
        %v3275 = vadd.f32 0.0, %v3274
        %v3276 = vpop.f32.mrb[0].mxu0
        %3277 = vmatprep.mubr.f32.mxu0 0.0
        %3278 = vmatmul.mubr.f32.gmra.mrb[0].mxu0 %v1435
        %v3279 = vpop.f32.mrb[0].mxu0
        %v3280 = vadd.f32 0.0, %v3279
        %v3281 = vpop.f32.mrb[0].mxu0
        %3282 = vmatprep.mubr.f32.mxu0 0.0
        %3283 = vmatmul.mubr.f32.gmra.mrb[0].mxu0 %v1438
        %v3284 = vpop.f32.mrb[0].mxu0
        %v3285 = vadd.f32 0.0, %v3284
        %v3286 = vpop.f32.mrb[0].mxu0
        %3287 = vmatprep.mubr.f32.mxu0 0.0
        %3288 = vmatmul.mubr.f32.gmra.mrb[0].mxu0 %v1441
        %v3289 = vpop.f32.mrb[0].mxu0
        %v3290 = vadd.f32 0.0, %v3289
        %v3291 = vpop.f32.mrb[0].mxu0
        %3292 = vmatprep.mubr.f32.mxu0 0.0
        %3293 = vmatmul.mubr.f32.gmra.mrb[0].mxu0 %v1444
        %v3294 = vpop.f32.mrb[0].mxu0
        %v3295 = vadd.f32 0.0, %v3294
        %v3296 = vpop.f32.mrb[0].mxu0
        %3297 = vmatprep.mubr.f32.mxu0 0.0
        %3298 = vmatmul.mubr.f32.gmra.mrb[0].mxu0 %v1447
        %v3299 = vpop.f32.mrb[0].mxu0
        %v3300 = vadd.f32 0.0, %v3299
        %v3301 = vpop.f32.mrb[0].mxu0
        %3302 = vmatprep.mubr.f32.mxu0 0.0
        %3303 = vmatmul.mubr.f32.gmra.mrb[0].mxu0 %v1450
        %v3304 = vpop.f32.mrb[0].mxu0
        %v3305 = vadd.f32 0.0, %v3304
        %v3306 = vpop.f32.mrb[0].mxu0
        %3307 = vmatprep.mubr.f32.mxu0 0.0
        %3308 = vmatmul.mubr.f32.gmra.mrb[0].mxu0 %v1453
        %v3309 = vpop.f32.mrb[0].mxu0
        %v3310 = vadd.f32 0.0, %v3309
        %v3311 = vpop.f32.mrb[0].mxu0
        %3312 = vmatprep.mubr.f32.mxu0 0.0
        %3313 = vmatmul.mubr.f32.gmra.mrb[0].mxu0 %v1456
        %v3314 = vpop.f32.mrb[0].mxu0
        %v3315 = vadd.f32 0.0, %v3314
        %v3316 = vpop.f32.mrb[0].mxu0
        %3317 = vmatprep.mubr.f32.mxu0 0.0
        %3318 = vmatmul.mubr.f32.gmra.mrb[0].mxu0 %v1459
        %v3319 = vpop.f32.mrb[0].mxu0
        %v3320 = vadd.f32 0.0, %v3319
        %v3321 = vpop.f32.mrb[0].mxu0
        %3322 = vmatprep.mubr.f32.mxu0 0.0
        %3323 = vmatmul.mubr.f32.gmra.mrb[0].mxu0 %v1462
        %v3324 = vpop.f32.mrb[0].mxu0
        %v3325 = vadd.f32 0.0, %v3324
        %v3326 = vpop.f32.mrb[0].mxu0
        %3327 = vmatprep.mubr.f32.mxu0 0.0
        %3328 = vmatmul.mubr.f32.gmra.mrb[0].mxu0 %v1465
        %v3329 = vpop.f32.mrb[0].mxu0
        %v3330 = vadd.f32 0.0, %v3329
        %v3331 = vpop.f32.mrb[0].mxu0
        %3332 = vmatprep.mubr.f32.mxu0 0.0
        %3333 = vmatmul.mubr.f32.gmra.mrb[0].mxu0 %v1468
        %v3334 = vpop.f32.mrb[0].mxu0
        %v3335 = vadd.f32 0.0, %v3334
        %v3336 = vpop.f32.mrb[0].mxu0
        %3337 = vmatprep.mubr.f32.mxu0 0.0
        %3338 = vmatmul.mubr.f32.gmra.mrb[0].mxu0 %v1471
        %v3339 = vpop.f32.mrb[0].mxu0
        %v3340 = vadd.f32 0.0, %v3339
        %v3341 = vpop.f32.mrb[0].mxu0
        %3342 = vmatprep.mubr.f32.mxu0 0.0
        %3343 = vmatmul.mubr.f32.gmra.mrb[0].mxu0 %v1474
        %v3344 = vpop.f32.mrb[0].mxu0
        %v3345 = vadd.f32 0.0, %v3344
        %v3346 = vpop.f32.mrb[0].mxu0
        %3347 = vmatprep.mubr.f32.mxu0 0.0
        %3348 = vmatmul.mubr.f32.gmra.mrb[0].mxu0 %v1477
        %v3349 = vpop.f32.mrb[0].mxu0
        %v3350 = vadd.f32 0.0, %v3349
        %v3351 = vpop.f32.mrb[0].mxu0
        %3352 = vmatprep.mubr.f32.mxu0 0.0
        %3353 = vmatmul.mubr.f32.gmra.mrb[0].mxu0 %v1480
        %v3354 = vpop.f32.mrb[0].mxu0
        %v3355 = vadd.f32 0.0, %v3354
        %v3356 = vpop.f32.mrb[0].mxu0
        %3357 = vmatprep.mubr.f32.mxu0 0.0
        %3358 = vmatmul.mubr.f32.gmra.mrb[0].mxu0 %v1483
        %v3359 = vpop.f32.mrb[0].mxu0
        %v3360 = vadd.f32 0.0, %v3359
        %v3361 = vpop.f32.mrb[0].mxu0
        %3362 = vmatprep.mubr.f32.mxu0 0.0
        %3363 = vmatmul.mubr.f32.gmra.mrb[0].mxu0 %v1486
        %v3364 = vpop.f32.mrb[0].mxu0
        %v3365 = vadd.f32 0.0, %v3364
        %v3366 = vpop.f32.mrb[0].mxu0
        %3367 = vmatprep.mubr.f32.mxu0 0.0
        %3368 = vmatmul.mubr.f32.gmra.mrb[0].mxu0 %v1489
        %v3369 = vpop.f32.mrb[0].mxu0
        %v3370 = vadd.f32 0.0, %v3369
        %v3371 = vpop.f32.mrb[0].mxu0
        %3372 = vmatprep.mubr.f32.mxu0 0.0
        %3373 = vmatmul.mubr.f32.gmra.mrb[0].mxu0 %v1492
        %v3374 = vpop.f32.mrb[0].mxu0
        %v3375 = vadd.f32 0.0, %v3374
        %v3376 = vpop.f32.mrb[0].mxu0
        %3377 = vmatprep.mubr.f32.mxu0 0.0
        %3378 = vmatmul.mubr.f32.gmra.mrb[0].mxu0 %v1495
        %v3379 = vpop.f32.mrb[0].mxu0
        %v3380 = vadd.f32 0.0, %v3379
        %v3381 = vpop.f32.mrb[0].mxu0
        %3382 = vmatprep.mubr.f32.mxu0 0.0
        %3383 = vmatmul.mubr.f32.gmra.mrb[0].mxu0 %v1498
        %v3384 = vpop.f32.mrb[0].mxu0
        %v3385 = vadd.f32 0.0, %v3384
        %v3386 = vpop.f32.mrb[0].mxu0
        %3387 = vmatprep.mubr.f32.mxu0 0.0
        %3388 = vmatmul.mubr.f32.gmra.mrb[0].mxu0 %v1501
        %v3389 = vpop.f32.mrb[0].mxu0
        %v3390 = vadd.f32 0.0, %v3389
        %v3391 = vpop.f32.mrb[0].mxu0
        %3392 = vmatprep.mubr.f32.mxu0 0.0
        %3393 = vmatmul.mubr.f32.gmra.mrb[0].mxu0 %v1504
        %v3394 = vpop.f32.mrb[0].mxu0
        %v3395 = vadd.f32 0.0, %v3394
        %v3396 = vpop.f32.mrb[0].mxu0
        %3397 = vmatprep.mubr.f32.mxu0 0.0
        %3398 = vmatmul.mubr.f32.gmra.mrb[0].mxu0 %v1507
        %v3399 = vpop.f32.mrb[0].mxu0
        %v3400 = vadd.f32 0.0, %v3399
        %v3401 = vpop.f32.mrb[0].mxu0
        %3402 = vmatprep.mubr.f32.mxu0 0.0
        %3403 = vmatmul.mubr.f32.gmra.mrb[0].mxu0 %v1510
        %v3404 = vpop.f32.mrb[0].mxu0
        %v3405 = vadd.f32 0.0, %v3404
        %v3406 = vpop.f32.mrb[0].mxu0
        %3407 = vmatprep.mubr.f32.mxu0 0.0
        %3408 = vmatmul.mubr.f32.gmra.mrb[0].mxu0 %v1513
        %v3409 = vpop.f32.mrb[0].mxu0
        %v3410 = vadd.f32 0.0, %v3409
        %v3411 = vpop.f32.mrb[0].mxu0
        %3412 = vmatprep.mubr.f32.mxu0 0.0
        %3413 = vmatmul.mubr.f32.gmra.mrb[0].mxu0 %v1516
        %v3414 = vpop.f32.mrb[0].mxu0
        %v3415 = vadd.f32 0.0, %v3414
        %v3416 = vpop.f32.mrb[0].mxu0
        %3417 = vdwg.mxu0
        %v3418 = vadd.f32 %v888, %v3100
        %v3419 = vadd.f32 %v893, %v3105
        %v3420 = vadd.f32 %v898, %v3110
        %v3421 = vadd.f32 %v903, %v3115
        %v3422 = vadd.f32 %v908, %v3120
        %v3423 = vadd.f32 %v913, %v3125
        %v3424 = vadd.f32 %v918, %v3130
        %v3425 = vadd.f32 %v923, %v3135
        %v3426 = vadd.f32 %v928, %v3140
        %v3427 = vadd.f32 %v933, %v3145
        %v3428 = vadd.f32 %v938, %v3150
        %v3429 = vadd.f32 %v943, %v3155
        %v3430 = vadd.f32 %v948, %v3160
        %v3431 = vadd.f32 %v953, %v3165
        %v3432 = vadd.f32 %v958, %v3170
        %v3433 = vadd.f32 %v963, %v3175
        %v3434 = vadd.f32 %v968, %v3180
        %v3435 = vadd.f32 %v973, %v3185
        %v3436 = vadd.f32 %v978, %v3190
        %v3437 = vadd.f32 %v983, %v3195
        %v3438 = vadd.f32 %v988, %v3200
        %v3439 = vadd.f32 %v993, %v3205
        %v3440 = vadd.f32 %v998, %v3210
        %v3441 = vadd.f32 %v1003, %v3215
        %v3442 = vadd.f32 %v1008, %v3220
        %v3443 = vadd.f32 %v1013, %v3225
        %v3444 = vadd.f32 %v1018, %v3230
        %v3445 = vadd.f32 %v1023, %v3235
        %v3446 = vadd.f32 %v1028, %v3240
        %v3447 = vadd.f32 %v1033, %v3245
        %v3448 = vadd.f32 %v1038, %v3250
        %v3449 = vadd.f32 %v1043, %v3255
        %v3450 = vadd.f32 %v1048, %v3260
        %v3451 = vadd.f32 %v1053, %v3265
        %v3452 = vadd.f32 %v1058, %v3270
        %v3453 = vadd.f32 %v1063, %v3275
        %v3454 = vadd.f32 %v1068, %v3280
        %v3455 = vadd.f32 %v1073, %v3285
        %v3456 = vadd.f32 %v1078, %v3290
        %v3457 = vadd.f32 %v1083, %v3295
        %v3458 = vadd.f32 %v1088, %v3300
        %v3459 = vadd.f32 %v1093, %v3305
        %v3460 = vadd.f32 %v1098, %v3310
        %v3461 = vadd.f32 %v1103, %v3315
        %v3462 = vadd.f32 %v1108, %v3320
        %v3463 = vadd.f32 %v1113, %v3325
        %v3464 = vadd.f32 %v1118, %v3330
        %v3465 = vadd.f32 %v1123, %v3335
        %v3466 = vadd.f32 %v1128, %v3340
        %v3467 = vadd.f32 %v1133, %v3345
        %v3468 = vadd.f32 %v1138, %v3350
        %v3469 = vadd.f32 %v1143, %v3355
        %v3470 = vadd.f32 %v1148, %v3360
        %v3471 = vadd.f32 %v1153, %v3365
        %v3472 = vadd.f32 %v1158, %v3370
        %v3473 = vadd.f32 %v1163, %v3375
        %v3474 = vadd.f32 %v1168, %v3380
        %v3475 = vadd.f32 %v1173, %v3385
        %v3476 = vadd.f32 %v1178, %v3390
        %v3477 = vadd.f32 %v1183, %v3395
        %v3478 = vadd.f32 %v1188, %v3400
        %v3479 = vadd.f32 %v1193, %v3405
        %v3480 = vadd.f32 %v1198, %v3410
        %v3481 = vadd.f32 %v1203, %v3415
        %v3482 = vmax.f32 %v3418, %v3426
        %v3483 = vmax.f32 %v3419, %v3427
        %v3484 = vmax.f32 %v3420, %v3428
        %v3485 = vmax.f32 %v3421, %v3429
        %v3486 = vmax.f32 %v3422, %v3430
        %v3487 = vmax.f32 %v3423, %v3431
        %v3488 = vmax.f32 %v3424, %v3432
        %v3489 = vmax.f32 %v3425, %v3433
        %v3490 = vmax.f32 %v3482, %v3434
        %v3491 = vmax.f32 %v3483, %v3435
        %v3492 = vmax.f32 %v3484, %v3436
        %v3493 = vmax.f32 %v3485, %v3437
        %v3494 = vmax.f32 %v3486, %v3438
        %v3495 = vmax.f32 %v3487, %v3439
        %v3496 = vmax.f32 %v3488, %v3440
        %v3497 = vmax.f32 %v3489, %v3441
        %v3498 = vmax.f32 %v3490, %v3442
        %v3499 = vmax.f32 %v3491, %v3443
        %v3500 = vmax.f32 %v3492, %v3444
        %v3501 = vmax.f32 %v3493, %v3445
        %v3502 = vmax.f32 %v3494, %v3446
        %v3503 = vmax.f32 %v3495, %v3447
        %v3504 = vmax.f32 %v3496, %v3448
        %v3505 = vmax.f32 %v3497, %v3449
        %v3506 = vmax.f32 %v3498, %v3450
        %v3507 = vmax.f32 %v3499, %v3451
        %v3508 = vmax.f32 %v3500, %v3452
        %v3509 = vmax.f32 %v3501, %v3453
        %v3510 = vmax.f32 %v3502, %v3454
        %v3511 = vmax.f32 %v3503, %v3455
        %v3512 = vmax.f32 %v3504, %v3456
        %v3513 = vmax.f32 %v3505, %v3457
        %v3514 = vmax.f32 %v3506, %v3458
        %v3515 = vmax.f32 %v3507, %v3459
        %v3516 = vmax.f32 %v3508, %v3460
        %v3517 = vmax.f32 %v3509, %v3461
        %v3518 = vmax.f32 %v3510, %v3462
        %v3519 = vmax.f32 %v3511, %v3463
        %v3520 = vmax.f32 %v3512, %v3464
        %v3521 = vmax.f32 %v3513, %v3465
        %v3522 = vmax.f32 %v3514, %v3466
        %v3523 = vmax.f32 %v3515, %v3467
        %v3524 = vmax.f32 %v3516, %v3468
        %v3525 = vmax.f32 %v3517, %v3469
        %v3526 = vmax.f32 %v3518, %v3470
        %v3527 = vmax.f32 %v3519, %v3471
        %v3528 = vmax.f32 %v3520, %v3472
        %v3529 = vmax.f32 %v3521, %v3473
        %v3530 = vmax.f32 %v3522, %v3474
        %v3531 = vmax.f32 %v3523, %v3475
        %v3532 = vmax.f32 %v3524, %v3476
        %v3533 = vmax.f32 %v3525, %v3477
        %v3534 = vmax.f32 %v3526, %v3478
        %v3535 = vmax.f32 %v3527, %v3479
        %v3536 = vmax.f32 %v3528, %v3480
        %v3537 = vmax.f32 %v3529, %v3481
        %3538 = vmatprep.subr.mxu0 0.0
        %3539 = vmatpush1.msra.mxu0 %v3530
        %3540 = vmatprep.subr.mxu0 0.0
        %3541 = vmatpush1.msra.mxu0 %v3531
        %3542 = vmatprep.subr.mxu0 0.0
        %3543 = vmatpush1.msra.mxu0 %v3532
        %3544 = vmatprep.subr.mxu0 0.0
        %3545 = vmatpush1.msra.mxu0 %v3533
        %3546 = vmatprep.subr.mxu0 0.0
        %3547 = vmatpush1.msra.mxu0 %v3534
        %3548 = vmatprep.subr.mxu0 0.0
        %3549 = vmatpush1.msra.mxu0 %v3535
        %3550 = vmatprep.subr.mxu0 0.0
        %3551 = vmatpush1.msra.mxu0 %v3536
        %3552 = vmatprep.subr.mxu0 0.0
        %3553 = vmatpush1.msra.mxu0 %v3537
        %3554 = vmatprep.subr.mxu0 0.0
        %3555 = vmatpush1.msra.mxu0 0.0
        %3556 = vmatprep.subr.mxu0 0.0
        %3557 = vmatpush1.msra.mxu0 0.0
        %3558 = vmatprep.subr.mxu0 0.0
        %3559 = vmatpush1.msra.mxu0 0.0
        %3560 = vmatprep.subr.mxu0 0.0
        %3561 = vmatpush1.msra.mxu0 0.0
        %3562 = vmatprep.subr.mxu0 0.0
        %3563 = vmatpush1.msra.mxu0 0.0
        %3564 = vmatprep.subr.mxu0 0.0
        %3565 = vmatpush1.msra.mxu0 0.0
        %3566 = vmatprep.subr.mxu0 0.0
        %3567 = vmatpush1.msra.mxu0 0.0
        %3568 = vmatprep.subr.mxu0 0.0
        %3569 = vmatpush1.msra.mxu0 0.0
        %3570 = vmatprep.subr.mxu0 0.0
        %3571 = vmatpush1.msra.mxu0 0.0
        %3572 = vmatprep.subr.mxu0 0.0
        %3573 = vmatpush1.msra.mxu0 0.0
        %3574 = vmatprep.subr.mxu0 0.0
        %3575 = vmatpush1.msra.mxu0 0.0
        %3576 = vmatprep.subr.mxu0 0.0
        %3577 = vmatpush1.msra.mxu0 0.0
        %3578 = vmatprep.subr.mxu0 0.0
        %3579 = vmatpush1.msra.mxu0 0.0
        %3580 = vmatprep.subr.mxu0 0.0
        %3581 = vmatpush1.msra.mxu0 0.0
        %3582 = vmatprep.subr.mxu0 0.0
        %3583 = vmatpush1.msra.mxu0 0.0
        %3584 = vmatprep.subr.mxu0 0.0
        %3585 = vmatpush1.msra.mxu0 0.0
        %3586 = vmatprep.subr.mxu0 0.0
        %3587 = vmatpush1.msra.mxu0 0.0
        %3588 = vmatprep.subr.mxu0 0.0
        %3589 = vmatpush1.msra.mxu0 0.0
        %3590 = vmatprep.subr.mxu0 0.0
        %3591 = vmatpush1.msra.mxu0 0.0
        %3592 = vmatprep.subr.mxu0 0.0
        %3593 = vmatpush1.msra.mxu0 0.0
        %3594 = vmatprep.subr.mxu0 0.0
        %3595 = vmatpush1.msra.mxu0 0.0
        %3596 = vmatprep.subr.mxu0 0.0
        %3597 = vmatpush1.msra.mxu0 0.0
        %3598 = vmatprep.subr.mxu0 0.0
        %3599 = vmatpush1.msra.mxu0 0.0
        %3600 = vmatprep.subr.mxu0 0.0
        %3601 = vmatpush1.msra.mxu0 0.0
        %3602 = vmatprep.mubr.f32.mxu0 0.0
        %3603 = vmatmul.mubr.f32.gmra.mrb[0].mxu0 %v1327
        %v3604 = vpop.f32.mrb[0].mxu0
        %v3605 = vadd.f32 0.0, %v3604
        %v3606 = vpop.f32.mrb[0].mxu0
        %3607 = vmatprep.mubr.f32.mxu0 0.0
        %3608 = vmatmul.mubr.f32.gmra.mrb[0].mxu0 %v1330
        %v3609 = vpop.f32.mrb[0].mxu0
        %v3610 = vadd.f32 0.0, %v3609
        %v3611 = vpop.f32.mrb[0].mxu0
        %3612 = vmatprep.mubr.f32.mxu0 0.0
        %3613 = vmatmul.mubr.f32.gmra.mrb[0].mxu0 %v1333
        %v3614 = vpop.f32.mrb[0].mxu0
        %v3615 = vadd.f32 0.0, %v3614
        %v3616 = vpop.f32.mrb[0].mxu0
        %3617 = vmatprep.mubr.f32.mxu0 0.0
        %3618 = vmatmul.mubr.f32.gmra.mrb[0].mxu0 %v1336
        %v3619 = vpop.f32.mrb[0].mxu0
        %v3620 = vadd.f32 0.0, %v3619
        %v3621 = vpop.f32.mrb[0].mxu0
        %3622 = vmatprep.mubr.f32.mxu0 0.0
        %3623 = vmatmul.mubr.f32.gmra.mrb[0].mxu0 %v1339
        %v3624 = vpop.f32.mrb[0].mxu0
        %v3625 = vadd.f32 0.0, %v3624
        %v3626 = vpop.f32.mrb[0].mxu0
        %3627 = vmatprep.mubr.f32.mxu0 0.0
        %3628 = vmatmul.mubr.f32.gmra.mrb[0].mxu0 %v1342
        %v3629 = vpop.f32.mrb[0].mxu0
        %v3630 = vadd.f32 0.0, %v3629
        %v3631 = vpop.f32.mrb[0].mxu0
        %3632 = vmatprep.mubr.f32.mxu0 0.0
        %3633 = vmatmul.mubr.f32.gmra.mrb[0].mxu0 %v1345
        %v3634 = vpop.f32.mrb[0].mxu0
        %v3635 = vadd.f32 0.0, %v3634
        %v3636 = vpop.f32.mrb[0].mxu0
        %3637 = vmatprep.mubr.f32.mxu0 0.0
        %3638 = vmatmul.mubr.f32.gmra.mrb[0].mxu0 %v1348
        %v3639 = vpop.f32.mrb[0].mxu0
        %v3640 = vadd.f32 0.0, %v3639
        %v3641 = vpop.f32.mrb[0].mxu0
        %3642 = vmatprep.mubr.f32.mxu0 0.0
        %3643 = vmatmul.mubr.f32.gmra.mrb[0].mxu0 %v1351
        %v3644 = vpop.f32.mrb[0].mxu0
        %v3645 = vadd.f32 0.0, %v3644
        %v3646 = vpop.f32.mrb[0].mxu0
        %3647 = vmatprep.mubr.f32.mxu0 0.0
        %3648 = vmatmul.mubr.f32.gmra.mrb[0].mxu0 %v1354
        %v3649 = vpop.f32.mrb[0].mxu0
        %v3650 = vadd.f32 0.0, %v3649
        %v3651 = vpop.f32.mrb[0].mxu0
        %3652 = vmatprep.mubr.f32.mxu0 0.0
        %3653 = vmatmul.mubr.f32.gmra.mrb[0].mxu0 %v1357
        %v3654 = vpop.f32.mrb[0].mxu0
        %v3655 = vadd.f32 0.0, %v3654
        %v3656 = vpop.f32.mrb[0].mxu0
        %3657 = vmatprep.mubr.f32.mxu0 0.0
        %3658 = vmatmul.mubr.f32.gmra.mrb[0].mxu0 %v1360
        %v3659 = vpop.f32.mrb[0].mxu0
        %v3660 = vadd.f32 0.0, %v3659
        %v3661 = vpop.f32.mrb[0].mxu0
        %3662 = vmatprep.mubr.f32.mxu0 0.0
        %3663 = vmatmul.mubr.f32.gmra.mrb[0].mxu0 %v1363
        %v3664 = vpop.f32.mrb[0].mxu0
        %v3665 = vadd.f32 0.0, %v3664
        %v3666 = vpop.f32.mrb[0].mxu0
        %3667 = vmatprep.mubr.f32.mxu0 0.0
        %3668 = vmatmul.mubr.f32.gmra.mrb[0].mxu0 %v1366
        %v3669 = vpop.f32.mrb[0].mxu0
        %v3670 = vadd.f32 0.0, %v3669
        %v3671 = vpop.f32.mrb[0].mxu0
        %3672 = vmatprep.mubr.f32.mxu0 0.0
        %3673 = vmatmul.mubr.f32.gmra.mrb[0].mxu0 %v1369
        %v3674 = vpop.f32.mrb[0].mxu0
        %v3675 = vadd.f32 0.0, %v3674
        %v3676 = vpop.f32.mrb[0].mxu0
        %3677 = vmatprep.mubr.f32.mxu0 0.0
        %3678 = vmatmul.mubr.f32.gmra.mrb[0].mxu0 %v1372
        %v3679 = vpop.f32.mrb[0].mxu0
        %v3680 = vadd.f32 0.0, %v3679
        %v3681 = vpop.f32.mrb[0].mxu0
        %3682 = vmatprep.mubr.f32.mxu0 0.0
        %3683 = vmatmul.mubr.f32.gmra.mrb[0].mxu0 %v1375
        %v3684 = vpop.f32.mrb[0].mxu0
        %v3685 = vadd.f32 0.0, %v3684
        %v3686 = vpop.f32.mrb[0].mxu0
        %3687 = vmatprep.mubr.f32.mxu0 0.0
        %3688 = vmatmul.mubr.f32.gmra.mrb[0].mxu0 %v1378
        %v3689 = vpop.f32.mrb[0].mxu0
        %v3690 = vadd.f32 0.0, %v3689
        %v3691 = vpop.f32.mrb[0].mxu0
        %3692 = vmatprep.mubr.f32.mxu0 0.0
        %3693 = vmatmul.mubr.f32.gmra.mrb[0].mxu0 %v1381
        %v3694 = vpop.f32.mrb[0].mxu0
        %v3695 = vadd.f32 0.0, %v3694
        %v3696 = vpop.f32.mrb[0].mxu0
        %3697 = vmatprep.mubr.f32.mxu0 0.0
        %3698 = vmatmul.mubr.f32.gmra.mrb[0].mxu0 %v1384
        %v3699 = vpop.f32.mrb[0].mxu0
        %v3700 = vadd.f32 0.0, %v3699
        %v3701 = vpop.f32.mrb[0].mxu0
        %3702 = vmatprep.mubr.f32.mxu0 0.0
        %3703 = vmatmul.mubr.f32.gmra.mrb[0].mxu0 %v1387
        %v3704 = vpop.f32.mrb[0].mxu0
        %v3705 = vadd.f32 0.0, %v3704
        %v3706 = vpop.f32.mrb[0].mxu0
        %3707 = vmatprep.mubr.f32.mxu0 0.0
        %3708 = vmatmul.mubr.f32.gmra.mrb[0].mxu0 %v1390
        %v3709 = vpop.f32.mrb[0].mxu0
        %v3710 = vadd.f32 0.0, %v3709
        %v3711 = vpop.f32.mrb[0].mxu0
        %3712 = vmatprep.mubr.f32.mxu0 0.0
        %3713 = vmatmul.mubr.f32.gmra.mrb[0].mxu0 %v1393
        %v3714 = vpop.f32.mrb[0].mxu0
        %v3715 = vadd.f32 0.0, %v3714
        %v3716 = vpop.f32.mrb[0].mxu0
        %3717 = vmatprep.mubr.f32.mxu0 0.0
        %3718 = vmatmul.mubr.f32.gmra.mrb[0].mxu0 %v1396
        %v3719 = vpop.f32.mrb[0].mxu0
        %v3720 = vadd.f32 0.0, %v3719
        %v3721 = vpop.f32.mrb[0].mxu0
        %3722 = vmatprep.mubr.f32.mxu0 0.0
        %3723 = vmatmul.mubr.f32.gmra.mrb[0].mxu0 %v1399
        %v3724 = vpop.f32.mrb[0].mxu0
        %v3725 = vadd.f32 0.0, %v3724
        %v3726 = vpop.f32.mrb[0].mxu0
        %3727 = vmatprep.mubr.f32.mxu0 0.0
        %3728 = vmatmul.mubr.f32.gmra.mrb[0].mxu0 %v1402
        %v3729 = vpop.f32.mrb[0].mxu0
        %v3730 = vadd.f32 0.0, %v3729
        %v3731 = vpop.f32.mrb[0].mxu0
        %3732 = vmatprep.mubr.f32.mxu0 0.0
        %3733 = vmatmul.mubr.f32.gmra.mrb[0].mxu0 %v1405
        %v3734 = vpop.f32.mrb[0].mxu0
        %v3735 = vadd.f32 0.0, %v3734
        %v3736 = vpop.f32.mrb[0].mxu0
        %3737 = vmatprep.mubr.f32.mxu0 0.0
        %3738 = vmatmul.mubr.f32.gmra.mrb[0].mxu0 %v1408
        %v3739 = vpop.f32.mrb[0].mxu0
        %v3740 = vadd.f32 0.0, %v3739
        %v3741 = vpop.f32.mrb[0].mxu0
        %3742 = vmatprep.mubr.f32.mxu0 0.0
        %3743 = vmatmul.mubr.f32.gmra.mrb[0].mxu0 %v1411
        %v3744 = vpop.f32.mrb[0].mxu0
        %v3745 = vadd.f32 0.0, %v3744
        %v3746 = vpop.f32.mrb[0].mxu0
        %3747 = vmatprep.mubr.f32.mxu0 0.0
        %3748 = vmatmul.mubr.f32.gmra.mrb[0].mxu0 %v1414
        %v3749 = vpop.f32.mrb[0].mxu0
        %v3750 = vadd.f32 0.0, %v3749
        %v3751 = vpop.f32.mrb[0].mxu0
        %3752 = vmatprep.mubr.f32.mxu0 0.0
        %3753 = vmatmul.mubr.f32.gmra.mrb[0].mxu0 %v1417
        %v3754 = vpop.f32.mrb[0].mxu0
        %v3755 = vadd.f32 0.0, %v3754
        %v3756 = vpop.f32.mrb[0].mxu0
        %3757 = vmatprep.mubr.f32.mxu0 0.0
        %3758 = vmatmul.mubr.f32.gmra.mrb[0].mxu0 %v1420
        %v3759 = vpop.f32.mrb[0].mxu0
        %v3760 = vadd.f32 0.0, %v3759
        %v3761 = vpop.f32.mrb[0].mxu0
        %3762 = vmatprep.mubr.f32.mxu0 0.0
        %3763 = vmatmul.mubr.f32.gmra.mrb[0].mxu0 %v1423
        %v3764 = vpop.f32.mrb[0].mxu0
        %v3765 = vadd.f32 0.0, %v3764
        %v3766 = vpop.f32.mrb[0].mxu0
        %3767 = vmatprep.mubr.f32.mxu0 0.0
        %3768 = vmatmul.mubr.f32.gmra.mrb[0].mxu0 %v1426
        %v3769 = vpop.f32.mrb[0].mxu0
        %v3770 = vadd.f32 0.0, %v3769
        %v3771 = vpop.f32.mrb[0].mxu0
        %3772 = vmatprep.mubr.f32.mxu0 0.0
        %3773 = vmatmul.mubr.f32.gmra.mrb[0].mxu0 %v1429
        %v3774 = vpop.f32.mrb[0].mxu0
        %v3775 = vadd.f32 0.0, %v3774
        %v3776 = vpop.f32.mrb[0].mxu0
        %3777 = vmatprep.mubr.f32.mxu0 0.0
        %3778 = vmatmul.mubr.f32.gmra.mrb[0].mxu0 %v1432
        %v3779 = vpop.f32.mrb[0].mxu0
        %v3780 = vadd.f32 0.0, %v3779
        %v3781 = vpop.f32.mrb[0].mxu0
        %3782 = vmatprep.mubr.f32.mxu0 0.0
        %3783 = vmatmul.mubr.f32.gmra.mrb[0].mxu0 %v1435
        %v3784 = vpop.f32.mrb[0].mxu0
        %v3785 = vadd.f32 0.0, %v3784
        %v3786 = vpop.f32.mrb[0].mxu0
        %3787 = vmatprep.mubr.f32.mxu0 0.0
        %3788 = vmatmul.mubr.f32.gmra.mrb[0].mxu0 %v1438
        %v3789 = vpop.f32.mrb[0].mxu0
        %v3790 = vadd.f32 0.0, %v3789
        %v3791 = vpop.f32.mrb[0].mxu0
        %3792 = vmatprep.mubr.f32.mxu0 0.0
        %3793 = vmatmul.mubr.f32.gmra.mrb[0].mxu0 %v1441
        %v3794 = vpop.f32.mrb[0].mxu0
        %v3795 = vadd.f32 0.0, %v3794
        %v3796 = vpop.f32.mrb[0].mxu0
        %3797 = vmatprep.mubr.f32.mxu0 0.0
        %3798 = vmatmul.mubr.f32.gmra.mrb[0].mxu0 %v1444
        %v3799 = vpop.f32.mrb[0].mxu0
        %v3800 = vadd.f32 0.0, %v3799
        %v3801 = vpop.f32.mrb[0].mxu0
        %3802 = vmatprep.mubr.f32.mxu0 0.0
        %3803 = vmatmul.mubr.f32.gmra.mrb[0].mxu0 %v1447
        %v3804 = vpop.f32.mrb[0].mxu0
        %v3805 = vadd.f32 0.0, %v3804
        %v3806 = vpop.f32.mrb[0].mxu0
        %3807 = vmatprep.mubr.f32.mxu0 0.0
        %3808 = vmatmul.mubr.f32.gmra.mrb[0].mxu0 %v1450
        %v3809 = vpop.f32.mrb[0].mxu0
        %v3810 = vadd.f32 0.0, %v3809
        %v3811 = vpop.f32.mrb[0].mxu0
        %3812 = vmatprep.mubr.f32.mxu0 0.0
        %3813 = vmatmul.mubr.f32.gmra.mrb[0].mxu0 %v1453
        %v3814 = vpop.f32.mrb[0].mxu0
        %v3815 = vadd.f32 0.0, %v3814
        %v3816 = vpop.f32.mrb[0].mxu0
        %3817 = vmatprep.mubr.f32.mxu0 0.0
        %3818 = vmatmul.mubr.f32.gmra.mrb[0].mxu0 %v1456
        %v3819 = vpop.f32.mrb[0].mxu0
        %v3820 = vadd.f32 0.0, %v3819
        %v3821 = vpop.f32.mrb[0].mxu0
        %3822 = vmatprep.mubr.f32.mxu0 0.0
        %3823 = vmatmul.mubr.f32.gmra.mrb[0].mxu0 %v1459
        %v3824 = vpop.f32.mrb[0].mxu0
        %v3825 = vadd.f32 0.0, %v3824
        %v3826 = vpop.f32.mrb[0].mxu0
        %3827 = vmatprep.mubr.f32.mxu0 0.0
        %3828 = vmatmul.mubr.f32.gmra.mrb[0].mxu0 %v1462
        %v3829 = vpop.f32.mrb[0].mxu0
        %v3830 = vadd.f32 0.0, %v3829
        %v3831 = vpop.f32.mrb[0].mxu0
        %3832 = vmatprep.mubr.f32.mxu0 0.0
        %3833 = vmatmul.mubr.f32.gmra.mrb[0].mxu0 %v1465
        %v3834 = vpop.f32.mrb[0].mxu0
        %v3835 = vadd.f32 0.0, %v3834
        %v3836 = vpop.f32.mrb[0].mxu0
        %3837 = vmatprep.mubr.f32.mxu0 0.0
        %3838 = vmatmul.mubr.f32.gmra.mrb[0].mxu0 %v1468
        %v3839 = vpop.f32.mrb[0].mxu0
        %v3840 = vadd.f32 0.0, %v3839
        %v3841 = vpop.f32.mrb[0].mxu0
        %3842 = vmatprep.mubr.f32.mxu0 0.0
        %3843 = vmatmul.mubr.f32.gmra.mrb[0].mxu0 %v1471
        %v3844 = vpop.f32.mrb[0].mxu0
        %v3845 = vadd.f32 0.0, %v3844
        %v3846 = vpop.f32.mrb[0].mxu0
        %3847 = vmatprep.mubr.f32.mxu0 0.0
        %3848 = vmatmul.mubr.f32.gmra.mrb[0].mxu0 %v1474
        %v3849 = vpop.f32.mrb[0].mxu0
        %v3850 = vadd.f32 0.0, %v3849
        %v3851 = vpop.f32.mrb[0].mxu0
        %3852 = vmatprep.mubr.f32.mxu0 0.0
        %3853 = vmatmul.mubr.f32.gmra.mrb[0].mxu0 %v1477
        %v3854 = vpop.f32.mrb[0].mxu0
        %v3855 = vadd.f32 0.0, %v3854
        %v3856 = vpop.f32.mrb[0].mxu0
        %3857 = vmatprep.mubr.f32.mxu0 0.0
        %3858 = vmatmul.mubr.f32.gmra.mrb[0].mxu0 %v1480
        %v3859 = vpop.f32.mrb[0].mxu0
        %v3860 = vadd.f32 0.0, %v3859
        %v3861 = vpop.f32.mrb[0].mxu0
        %3862 = vmatprep.mubr.f32.mxu0 0.0
        %3863 = vmatmul.mubr.f32.gmra.mrb[0].mxu0 %v1483
        %v3864 = vpop.f32.mrb[0].mxu0
        %v3865 = vadd.f32 0.0, %v3864
        %v3866 = vpop.f32.mrb[0].mxu0
        %3867 = vmatprep.mubr.f32.mxu0 0.0
        %3868 = vmatmul.mubr.f32.gmra.mrb[0].mxu0 %v1486
        %v3869 = vpop.f32.mrb[0].mxu0
        %v3870 = vadd.f32 0.0, %v3869
        %v3871 = vpop.f32.mrb[0].mxu0
        %3872 = vmatprep.mubr.f32.mxu0 0.0
        %3873 = vmatmul.mubr.f32.gmra.mrb[0].mxu0 %v1489
        %v3874 = vpop.f32.mrb[0].mxu0
        %v3875 = vadd.f32 0.0, %v3874
        %v3876 = vpop.f32.mrb[0].mxu0
        %3877 = vmatprep.mubr.f32.mxu0 0.0
        %3878 = vmatmul.mubr.f32.gmra.mrb[0].mxu0 %v1492
        %v3879 = vpop.f32.mrb[0].mxu0
        %v3880 = vadd.f32 0.0, %v3879
        %v3881 = vpop.f32.mrb[0].mxu0
        %3882 = vmatprep.mubr.f32.mxu0 0.0
        %3883 = vmatmul.mubr.f32.gmra.mrb[0].mxu0 %v1495
        %v3884 = vpop.f32.mrb[0].mxu0
        %v3885 = vadd.f32 0.0, %v3884
        %v3886 = vpop.f32.mrb[0].mxu0
        %3887 = vmatprep.mubr.f32.mxu0 0.0
        %3888 = vmatmul.mubr.f32.gmra.mrb[0].mxu0 %v1498
        %v3889 = vpop.f32.mrb[0].mxu0
        %v3890 = vadd.f32 0.0, %v3889
        %v3891 = vpop.f32.mrb[0].mxu0
        %3892 = vmatprep.mubr.f32.mxu0 0.0
        %3893 = vmatmul.mubr.f32.gmra.mrb[0].mxu0 %v1501
        %v3894 = vpop.f32.mrb[0].mxu0
        %v3895 = vadd.f32 0.0, %v3894
        %v3896 = vpop.f32.mrb[0].mxu0
        %3897 = vmatprep.mubr.f32.mxu0 0.0
        %3898 = vmatmul.mubr.f32.gmra.mrb[0].mxu0 %v1504
        %v3899 = vpop.f32.mrb[0].mxu0
        %v3900 = vadd.f32 0.0, %v3899
        %v3901 = vpop.f32.mrb[0].mxu0
        %3902 = vmatprep.mubr.f32.mxu0 0.0
        %3903 = vmatmul.mubr.f32.gmra.mrb[0].mxu0 %v1507
        %v3904 = vpop.f32.mrb[0].mxu0
        %v3905 = vadd.f32 0.0, %v3904
        %v3906 = vpop.f32.mrb[0].mxu0
        %3907 = vmatprep.mubr.f32.mxu0 0.0
        %3908 = vmatmul.mubr.f32.gmra.mrb[0].mxu0 %v1510
        %v3909 = vpop.f32.mrb[0].mxu0
        %v3910 = vadd.f32 0.0, %v3909
        %v3911 = vpop.f32.mrb[0].mxu0
        %3912 = vmatprep.mubr.f32.mxu0 0.0
        %3913 = vmatmul.mubr.f32.gmra.mrb[0].mxu0 %v1513
        %v3914 = vpop.f32.mrb[0].mxu0
        %v3915 = vadd.f32 0.0, %v3914
        %v3916 = vpop.f32.mrb[0].mxu0
        %3917 = vmatprep.mubr.f32.mxu0 0.0
        %3918 = vmatmul.mubr.f32.gmra.mrb[0].mxu0 %v1516
        %v3919 = vpop.f32.mrb[0].mxu0
        %v3920 = vadd.f32 0.0, %v3919
        %v3921 = vpop.f32.mrb[0].mxu0
        %3922 = vdwg.mxu0
        %v3923 = vadd.f32 %v888, %v3605
        %v3924 = vadd.f32 %v893, %v3610
        %v3925 = vadd.f32 %v898, %v3615
        %v3926 = vadd.f32 %v903, %v3620
        %v3927 = vadd.f32 %v908, %v3625
        %v3928 = vadd.f32 %v913, %v3630
        %v3929 = vadd.f32 %v918, %v3635
        %v3930 = vadd.f32 %v923, %v3640
        %v3931 = vadd.f32 %v928, %v3645
        %v3932 = vadd.f32 %v933, %v3650
        %v3933 = vadd.f32 %v938, %v3655
        %v3934 = vadd.f32 %v943, %v3660
        %v3935 = vadd.f32 %v948, %v3665
        %v3936 = vadd.f32 %v953, %v3670
        %v3937 = vadd.f32 %v958, %v3675
        %v3938 = vadd.f32 %v963, %v3680
        %v3939 = vadd.f32 %v968, %v3685
        %v3940 = vadd.f32 %v973, %v3690
        %v3941 = vadd.f32 %v978, %v3695
        %v3942 = vadd.f32 %v983, %v3700
        %v3943 = vadd.f32 %v988, %v3705
        %v3944 = vadd.f32 %v993, %v3710
        %v3945 = vadd.f32 %v998, %v3715
        %v3946 = vadd.f32 %v1003, %v3720
        %v3947 = vadd.f32 %v1008, %v3725
        %v3948 = vadd.f32 %v1013, %v3730
        %v3949 = vadd.f32 %v1018, %v3735
        %v3950 = vadd.f32 %v1023, %v3740
        %v3951 = vadd.f32 %v1028, %v3745
        %v3952 = vadd.f32 %v1033, %v3750
        %v3953 = vadd.f32 %v1038, %v3755
        %v3954 = vadd.f32 %v1043, %v3760
        %v3955 = vadd.f32 %v1048, %v3765
        %v3956 = vadd.f32 %v1053, %v3770
        %v3957 = vadd.f32 %v1058, %v3775
        %v3958 = vadd.f32 %v1063, %v3780
        %v3959 = vadd.f32 %v1068, %v3785
        %v3960 = vadd.f32 %v1073, %v3790
        %v3961 = vadd.f32 %v1078, %v3795
        %v3962 = vadd.f32 %v1083, %v3800
        %v3963 = vadd.f32 %v1088, %v3805
        %v3964 = vadd.f32 %v1093, %v3810
        %v3965 = vadd.f32 %v1098, %v3815
        %v3966 = vadd.f32 %v1103, %v3820
        %v3967 = vadd.f32 %v1108, %v3825
        %v3968 = vadd.f32 %v1113, %v3830
        %v3969 = vadd.f32 %v1118, %v3835
        %v3970 = vadd.f32 %v1123, %v3840
        %v3971 = vadd.f32 %v1128, %v3845
        %v3972 = vadd.f32 %v1133, %v3850
        %v3973 = vadd.f32 %v1138, %v3855
        %v3974 = vadd.f32 %v1143, %v3860
        %v3975 = vadd.f32 %v1148, %v3865
        %v3976 = vadd.f32 %v1153, %v3870
        %v3977 = vadd.f32 %v1158, %v3875
        %v3978 = vadd.f32 %v1163, %v3880
        %v3979 = vadd.f32 %v1168, %v3885
        %v3980 = vadd.f32 %v1173, %v3890
        %v3981 = vadd.f32 %v1178, %v3895
        %v3982 = vadd.f32 %v1183, %v3900
        %v3983 = vadd.f32 %v1188, %v3905
        %v3984 = vadd.f32 %v1193, %v3910
        %v3985 = vadd.f32 %v1198, %v3915
        %v3986 = vadd.f32 %v1203, %v3920
        %v3987 = vlaneseq
        %v3988 = vshrl.u32 %v3987, 7
        %v3989 = vadd.s32 %v3988, 8
        %v3990 = vadd.s32 %v3988, 16
        %v3991 = vadd.s32 %v3988, 24
        %v3992 = vadd.s32 %v3988, 32
        %v3993 = vadd.s32 %v3988, 40
        %v3994 = vadd.s32 %v3988, 48
        %v3995 = vadd.s32 %v3988, 56
        %v3996 = vld [vmem:[%s424] sm:$0x1]
        %v3997 = vlaneseq
        %v3998 = vshrl.u32 %v3997, 7
        %v3999 = vsub.s32 0, %v3998
        %v4000 = vrot.slane %v3996, %v3999
        %vm4001 = vcmp.eq.s32.totalorder %v3988, %v4000
        %vm4002 = vcmp.eq.s32.totalorder %v3989, %v4000
        %vm4003 = vcmp.eq.s32.totalorder %v3990, %v4000
        %vm4004 = vcmp.eq.s32.totalorder %v3991, %v4000
        %vm4005 = vcmp.eq.s32.totalorder %v3992, %v4000
        %vm4006 = vcmp.eq.s32.totalorder %v3993, %v4000
        %vm4007 = vcmp.eq.s32.totalorder %v3994, %v4000
        %vm4008 = vcmp.eq.s32.totalorder %v3995, %v4000
        %v4009 = vsel %vm4001, 1, 0
        %v4010 = vsel %vm4002, 1, 0
        %v4011 = vsel %vm4003, 1, 0
        %v4012 = vsel %vm4004, 1, 0
        %v4013 = vsel %vm4005, 1, 0
        %v4014 = vsel %vm4006, 1, 0
        %v4015 = vsel %vm4007, 1, 0
        %v4016 = vsel %vm4008, 1, 0
        %v4017 = vcvt.s32.f32 %v4009
        %v4018 = vcvt.s32.f32 %v4010
        %v4019 = vcvt.s32.f32 %v4011
        %v4020 = vcvt.s32.f32 %v4012
        %v4021 = vcvt.s32.f32 %v4013
        %v4022 = vcvt.s32.f32 %v4014
        %v4023 = vcvt.s32.f32 %v4015
        %v4024 = vcvt.s32.f32 %v4016
        %v4025 = vmul.f32 %v3923, %v4017
        %v4026 = vmul.f32 %v3924, %v4018
        %v4027 = vmul.f32 %v3925, %v4019
        %v4028 = vmul.f32 %v3926, %v4020
        %v4029 = vmul.f32 %v3927, %v4021
        %v4030 = vmul.f32 %v3928, %v4022
        %v4031 = vmul.f32 %v3929, %v4023
        %v4032 = vmul.f32 %v3930, %v4024
        %v4033 = vadd.f32 %v4025, %v4026
        %v4034 = vadd.f32 %v4033, %v4027
        %v4035 = vadd.f32 %v4034, %v4028
        %v4036 = vadd.f32 %v4035, %v4029
        %v4037 = vadd.f32 %v4036, %v4030
        %v4038 = vadd.f32 %v4037, %v4031
        %v4039 = vadd.f32 %v4038, %v4032
        %v4040 = vrot.slane %v4039, 4
        %v4041 = vadd.f32 %v4039, %v4040
        %v4042 = vrot.slane %v4041, 2
        %v4043 = vadd.f32 %v4041, %v4042
        %v4044 = vrot.slane %v4043, 1
        %v4045 = vadd.f32 %v4043, %v4044
        %v4046 = vmul.f32 %v3931, %v4017
        %v4047 = vmul.f32 %v3932, %v4018
        %v4048 = vmul.f32 %v3933, %v4019
        %v4049 = vmul.f32 %v3934, %v4020
        %v4050 = vmul.f32 %v3935, %v4021
        %v4051 = vmul.f32 %v3936, %v4022
        %v4052 = vmul.f32 %v3937, %v4023
        %v4053 = vmul.f32 %v3938, %v4024
        %v4054 = vadd.f32 %v4046, %v4047
        %v4055 = vadd.f32 %v4054, %v4048
        %v4056 = vadd.f32 %v4055, %v4049
        %v4057 = vadd.f32 %v4056, %v4050
        %v4058 = vadd.f32 %v4057, %v4051
        %v4059 = vadd.f32 %v4058, %v4052
        %v4060 = vadd.f32 %v4059, %v4053
        %v4061 = vrot.slane %v4060, 4
        %v4062 = vadd.f32 %v4060, %v4061
        %v4063 = vrot.slane %v4062, 2
        %v4064 = vadd.f32 %v4062, %v4063
        %v4065 = vrot.slane %v4064, 1
        %v4066 = vadd.f32 %v4064, %v4065
        %v4067 = vmul.f32 %v3939, %v4017
        %v4068 = vmul.f32 %v3940, %v4018
        %v4069 = vmul.f32 %v3941, %v4019
        %v4070 = vmul.f32 %v3942, %v4020
        %v4071 = vmul.f32 %v3943, %v4021
        %v4072 = vmul.f32 %v3944, %v4022
        %v4073 = vmul.f32 %v3945, %v4023
        %v4074 = vmul.f32 %v3946, %v4024
        %v4075 = vadd.f32 %v4067, %v4068
        %v4076 = vadd.f32 %v4075, %v4069
        %v4077 = vadd.f32 %v4076, %v4070
        %v4078 = vadd.f32 %v4077, %v4071
        %v4079 = vadd.f32 %v4078, %v4072
        %v4080 = vadd.f32 %v4079, %v4073
        %v4081 = vadd.f32 %v4080, %v4074
        %v4082 = vrot.slane %v4081, 4
        %v4083 = vadd.f32 %v4081, %v4082
        %v4084 = vrot.slane %v4083, 2
        %v4085 = vadd.f32 %v4083, %v4084
        %v4086 = vrot.slane %v4085, 1
        %v4087 = vadd.f32 %v4085, %v4086
        %v4088 = vmul.f32 %v3947, %v4017
        %v4089 = vmul.f32 %v3948, %v4018
        %v4090 = vmul.f32 %v3949, %v4019
        %v4091 = vmul.f32 %v3950, %v4020
        %v4092 = vmul.f32 %v3951, %v4021
        %v4093 = vmul.f32 %v3952, %v4022
        %v4094 = vmul.f32 %v3953, %v4023
        %v4095 = vmul.f32 %v3954, %v4024
        %v4096 = vadd.f32 %v4088, %v4089
        %v4097 = vadd.f32 %v4096, %v4090
        %v4098 = vadd.f32 %v4097, %v4091
        %v4099 = vadd.f32 %v4098, %v4092
        %v4100 = vadd.f32 %v4099, %v4093
        %v4101 = vadd.f32 %v4100, %v4094
        %v4102 = vadd.f32 %v4101, %v4095
        %v4103 = vrot.slane %v4102, 4
        %v4104 = vadd.f32 %v4102, %v4103
        %v4105 = vrot.slane %v4104, 2
        %v4106 = vadd.f32 %v4104, %v4105
        %v4107 = vrot.slane %v4106, 1
        %v4108 = vadd.f32 %v4106, %v4107
        %v4109 = vmul.f32 %v3955, %v4017
        %v4110 = vmul.f32 %v3956, %v4018
        %v4111 = vmul.f32 %v3957, %v4019
        %v4112 = vmul.f32 %v3958, %v4020
        %v4113 = vmul.f32 %v3959, %v4021
        %v4114 = vmul.f32 %v3960, %v4022
        %v4115 = vmul.f32 %v3961, %v4023
        %v4116 = vmul.f32 %v3962, %v4024
        %v4117 = vadd.f32 %v4109, %v4110
        %v4118 = vadd.f32 %v4117, %v4111
        %v4119 = vadd.f32 %v4118, %v4112
        %v4120 = vadd.f32 %v4119, %v4113
        %v4121 = vadd.f32 %v4120, %v4114
        %v4122 = vadd.f32 %v4121, %v4115
        %v4123 = vadd.f32 %v4122, %v4116
        %v4124 = vrot.slane %v4123, 4
        %v4125 = vadd.f32 %v4123, %v4124
        %v4126 = vrot.slane %v4125, 2
        %v4127 = vadd.f32 %v4125, %v4126
        %v4128 = vrot.slane %v4127, 1
        %v4129 = vadd.f32 %v4127, %v4128
        %v4130 = vmul.f32 %v3963, %v4017
        %v4131 = vmul.f32 %v3964, %v4018
        %v4132 = vmul.f32 %v3965, %v4019
        %v4133 = vmul.f32 %v3966, %v4020
        %v4134 = vmul.f32 %v3967, %v4021
        %v4135 = vmul.f32 %v3968, %v4022
        %v4136 = vmul.f32 %v3969, %v4023
        %v4137 = vmul.f32 %v3970, %v4024
        %v4138 = vadd.f32 %v4130, %v4131
        %v4139 = vadd.f32 %v4138, %v4132
        %v4140 = vadd.f32 %v4139, %v4133
        %v4141 = vadd.f32 %v4140, %v4134
        %v4142 = vadd.f32 %v4141, %v4135
        %v4143 = vadd.f32 %v4142, %v4136
        %v4144 = vadd.f32 %v4143, %v4137
        %v4145 = vrot.slane %v4144, 4
        %v4146 = vadd.f32 %v4144, %v4145
        %v4147 = vrot.slane %v4146, 2
        %v4148 = vadd.f32 %v4146, %v4147
        %v4149 = vrot.slane %v4148, 1
        %v4150 = vadd.f32 %v4148, %v4149
        %v4151 = vmul.f32 %v3971, %v4017
        %v4152 = vmul.f32 %v3972, %v4018
        %v4153 = vmul.f32 %v3973, %v4019
        %v4154 = vmul.f32 %v3974, %v4020
        %v4155 = vmul.f32 %v3975, %v4021
        %v4156 = vmul.f32 %v3976, %v4022
        %v4157 = vmul.f32 %v3977, %v4023
        %v4158 = vmul.f32 %v3978, %v4024
        %v4159 = vadd.f32 %v4151, %v4152
        %v4160 = vadd.f32 %v4159, %v4153
        %v4161 = vadd.f32 %v4160, %v4154
        %v4162 = vadd.f32 %v4161, %v4155
        %v4163 = vadd.f32 %v4162, %v4156
        %v4164 = vadd.f32 %v4163, %v4157
        %v4165 = vadd.f32 %v4164, %v4158
        %v4166 = vrot.slane %v4165, 4
        %v4167 = vadd.f32 %v4165, %v4166
        %v4168 = vrot.slane %v4167, 2
        %v4169 = vadd.f32 %v4167, %v4168
        %v4170 = vrot.slane %v4169, 1
        %v4171 = vadd.f32 %v4169, %v4170
        %v4172 = vmul.f32 %v3979, %v4017
        %v4173 = vmul.f32 %v3980, %v4018
        %v4174 = vmul.f32 %v3981, %v4019
        %v4175 = vmul.f32 %v3982, %v4020
        %v4176 = vmul.f32 %v3983, %v4021
        %v4177 = vmul.f32 %v3984, %v4022
        %v4178 = vmul.f32 %v3985, %v4023
        %v4179 = vmul.f32 %v3986, %v4024
        %v4180 = vadd.f32 %v4172, %v4173
        %v4181 = vadd.f32 %v4180, %v4174
        %v4182 = vadd.f32 %v4181, %v4175
        %v4183 = vadd.f32 %v4182, %v4176
        %v4184 = vadd.f32 %v4183, %v4177
        %v4185 = vadd.f32 %v4184, %v4178
        %v4186 = vadd.f32 %v4185, %v4179
        %v4187 = vrot.slane %v4186, 4
        %v4188 = vadd.f32 %v4186, %v4187
        %v4189 = vrot.slane %v4188, 2
        %v4190 = vadd.f32 %v4188, %v4189
        %v4191 = vrot.slane %v4190, 1
        %v4192 = vadd.f32 %v4190, %v4191
        %vm4193 = vcmask 1040384
        %v4194 = vsel %vm4193, %v4045, %v4066
        %vm4195 = vcmask 1041408
        %v4196 = vsel %vm4195, %v4194, %v4087
        %vm4197 = vcmask 1042432
        %v4198 = vsel %vm4197, %v4196, %v4108
        %vm4199 = vcmask 1043456
        %v4200 = vsel %vm4199, %v4198, %v4129
        %vm4201 = vcmask 1044480
        %v4202 = vsel %vm4201, %v4200, %v4150
        %vm4203 = vcmask 1045504
        %v4204 = vsel %vm4203, %v4202, %v4171
        %vm4205 = vcmask 1046528
        %v4206 = vsel %vm4205, %v4204, %v4192
        %v4207 = vld [vmem:[%s6] sm:$0xff]
        %vm4208 = vcmask 64512
        %v4210 = vsel %vm4208, %v4207, 0
        %4212 = vmatprep.subr.mxu0 0.0
        %4213 = vmatpush1.msra.mxu0 %v4206
        %4214 = vmatprep.subr.mxu0 0.0
        %4215 = vmatpush1.msra.mxu0 0.0
        %4216 = vmatprep.subr.mxu0 0.0
        %4217 = vmatpush1.msra.mxu0 0.0
        %4218 = vmatprep.subr.mxu0 0.0
        %4219 = vmatpush1.msra.mxu0 0.0
        %4220 = vmatprep.subr.mxu0 0.0
        %4221 = vmatpush1.msra.mxu0 0.0
        %4222 = vmatprep.subr.mxu0 0.0
        %4223 = vmatpush1.msra.mxu0 0.0
        %4224 = vmatprep.subr.mxu0 0.0
        %4225 = vmatpush1.msra.mxu0 0.0
        %4226 = vmatprep.subr.mxu0 0.0
        %4227 = vmatpush1.msra.mxu0 0.0
        %4228 = vmatprep.subr.mxu0 0.0
        %4229 = vmatpush1.msra.mxu0 0.0
        %4230 = vmatprep.subr.mxu0 0.0
        %4231 = vmatpush1.msra.mxu0 0.0
        %4232 = vmatprep.subr.mxu0 0.0
        %4233 = vmatpush1.msra.mxu0 0.0
        %4234 = vmatprep.subr.mxu0 0.0
        %4235 = vmatpush1.msra.mxu0 0.0
        %4236 = vmatprep.subr.mxu0 0.0
        %4237 = vmatpush1.msra.mxu0 0.0
        %4238 = vmatprep.subr.mxu0 0.0
        %4239 = vmatpush1.msra.mxu0 0.0
        %4240 = vmatprep.subr.mxu0 0.0
        %4241 = vmatpush1.msra.mxu0 0.0
        %4242 = vmatprep.subr.mxu0 0.0
        %4243 = vmatpush1.msra.mxu0 0.0
        %4244 = vmatprep.subr.mxu0 0.0
        %4245 = vmatpush1.msra.mxu0 0.0
        %4246 = vmatprep.subr.mxu0 0.0
        %4247 = vmatpush1.msra.mxu0 0.0
        %4248 = vmatprep.subr.mxu0 0.0
        %4249 = vmatpush1.msra.mxu0 0.0
        %4250 = vmatprep.subr.mxu0 0.0
        %4251 = vmatpush1.msra.mxu0 0.0
        %4252 = vmatprep.subr.mxu0 0.0
        %4253 = vmatpush1.msra.mxu0 0.0
        %4254 = vmatprep.subr.mxu0 0.0
        %4255 = vmatpush1.msra.mxu0 0.0
        %4256 = vmatprep.subr.mxu0 0.0
        %4257 = vmatpush1.msra.mxu0 0.0
        %4258 = vmatprep.subr.mxu0 0.0
        %4259 = vmatpush1.msra.mxu0 0.0
        %4260 = vmatprep.subr.mxu0 0.0
        %4261 = vmatpush1.msra.mxu0 0.0
        %4262 = vmatprep.subr.mxu0 0.0
        %4263 = vmatpush1.msra.mxu0 0.0
        %4264 = vmatprep.subr.mxu0 0.0
        %4265 = vmatpush1.msra.mxu0 0.0
        %4266 = vmatprep.subr.mxu0 0.0
        %4267 = vmatpush1.msra.mxu0 0.0
        %4268 = vmatprep.subr.mxu0 0.0
        %4269 = vmatpush1.msra.mxu0 0.0
        %4270 = vmatprep.subr.mxu0 0.0
        %4271 = vmatpush1.msra.mxu0 0.0
        %4272 = vmatprep.subr.mxu0 0.0
        %4273 = vmatpush1.msra.mxu0 0.0
        %4274 = vmatprep.subr.mxu0 0.0
        %4275 = vmatpush1.msra.mxu0 0.0
        %4276 = vmatprep.mubr.f32.mxu0 0.0
        %4277 = vmatmul.mubr.f32.gmra.mrb[0].mxu0 %v4210
        %v4278 = vpop.f32.mrb[0].mxu0
        %v4279 = vadd.f32 0.0, %v4278
        %v4280 = vpop.f32.mrb[0].mxu0
        %4281 = vdwg.mxu0
        %v4282 = vrot.slane %v4279, 4
        %v4283 = vmax.f32 %v4279, %v4282
        %v4284 = vrot.slane %v4283, 2
        %v4285 = vmax.f32 %v4283, %v4284
        %v4286 = vrot.slane %v4285, 1
        %v4287 = vmax.f32 %v4285, %v4286
        %v4288 = vsub.f32 %v4279, %v4287
        %v4289 = vmul.f32 %v4288, 1.442695
        %v4290 = vpow.pop %v4289
        %v4291 = vrot.slane %v4290, 4
        %v4292 = vadd.f32 %v4290, %v4291
        %v4293 = vrot.slane %v4292, 2
        %v4294 = vadd.f32 %v4292, %v4293
        %v4295 = vrot.slane %v4294, 1
        %v4296 = vadd.f32 %v4294, %v4295
        %v4297 = vrcp.pop %v4296
        %v4298 = vmul.f32 %v4290, %v4297
        %4299 = vst [vmem:[%s414] sm:$0xff] %v4279
        %4300 = vst [vmem:[%s421] sm:$0xff] %v4298
        %s4301 = sand.u32 %s193, 1
        %s4302 = scalar_lea.sflag [#allocation5], %s4301
        %s4303 = sand.u32 %s193, 1
        %s4304 = smul.addr %s4303, 8
        %s4305 = scalar_lea.vmem [#allocation4], %s4304
        %s4306 = sand.u32 %s219, 1
        %s4307 = scalar_lea.sflag [#allocation7], %s4306
        %s4308 = sand.u32 %s219, 1
        %s4309 = smul.addr %s4308, 8
        %s4310 = scalar_lea.vmem [#allocation6], %s4309
        // Predicated region
        $region87: #{tpu_custom_call.1} parent=81 // pred_check
          %p4311 = pneg %p203
        $region88: #{tpu_custom_call.1} parent=81 // pred_check_branch
          %4313 = sbr.rel (%p4311) target = $region90
        $region89: #{tpu_custom_call.1} parent=81 // pred_region
          %s4315 = ssub.s32 128, 128
          %4316 = vsyncadd %s4302, %s4315
          %s4317 = smul.addr %s28, 128
          %s4318 = scalar_lea.hbm %s7, %s4317
          %s4320 = sshll.u32 %s4305, 4
          %s4321 = int_to_ptr.vmem [resolvable:$true] %s4320
          %4323 = dma.vmem_to_hbm [thread:$0]  %s4321, 128, %s4318, %s4302
        $region90: #{tpu_custom_call.1} parent=81 // pred_fallthru
          _
        // Predicated region
        $region91: #{tpu_custom_call.1} parent=81 // pred_check
          %p4324 = pneg %p229
        $region92: #{tpu_custom_call.1} parent=81 // pred_check_branch
          %4326 = sbr.rel (%p4324) target = $region94
        $region93: #{tpu_custom_call.1} parent=81 // pred_region
          %s4328 = ssub.s32 128, 128
          %4329 = vsyncadd %s4307, %s4328
          %s4330 = smul.addr %s28, 128
          %s4331 = scalar_lea.hbm %s8, %s4330
          %s4333 = sshll.u32 %s4310, 4
          %s4334 = int_to_ptr.vmem [resolvable:$true] %s4333
          %4336 = dma.vmem_to_hbm [thread:$0]  %s4334, 128, %s4331, %s4307
        $region94: #{tpu_custom_call.1} parent=81 // pred_fallthru
          _
      $region82: #{tpu_custom_call.1} parent=5 // pred_fallthru
        _
      %p4337 = scmp.le.s32.totalorder 2, %s23
      // Predicated region
      $region95: #{tpu_custom_call.1} parent=5 // pred_check
        %p4338 = pneg %p4337
      $region96: #{tpu_custom_call.1} parent=5 // pred_check_branch
        %4340 = sbr.rel (%p4338) target = $region98
      $region97: #{tpu_custom_call.1} parent=5 // pred_region
        %s4341 = ssub.s32 %s23, 2
        // Predicated region
        $region99: #{tpu_custom_call.1} parent=97 // pred_check
          %p4342 = pneg %p209
        $region100: #{tpu_custom_call.1} parent=97 // pred_check_branch
          %4344 = sbr.rel (%p4342) target = $region102
        $region101: #{tpu_custom_call.1} parent=97 // pred_region
          %s4345 = sand.u32 %s194, 1
          %s4346 = scalar_lea.sflag [#allocation5], %s4345
          %s4347 = sand.u32 %s194, 1
          %s4348 = smul.addr %s4347, 8
          %s4349 = scalar_lea.vmem [#allocation4], %s4348
          %4350 = dma.done %s4346, 128
        $region102: #{tpu_custom_call.1} parent=97 // pred_fallthru
          _
        // Predicated region
        $region103: #{tpu_custom_call.1} parent=97 // pred_check
          %p4351 = pneg %p235
        $region104: #{tpu_custom_call.1} parent=97 // pred_check_branch
          %4353 = sbr.rel (%p4351) target = $region106
        $region105: #{tpu_custom_call.1} parent=97 // pred_region
          %s4354 = sand.u32 %s220, 1
          %s4355 = scalar_lea.sflag [#allocation7], %s4354
          %s4356 = sand.u32 %s220, 1
          %s4357 = smul.addr %s4356, 8
          %s4358 = scalar_lea.vmem [#allocation6], %s4357
          %4359 = dma.done %s4355, 128
        $region106: #{tpu_custom_call.1} parent=97 // pred_fallthru
          _
      $region98: #{tpu_custom_call.1} parent=5 // pred_fallthru
        _
    $region6: #{tpu_custom_call.1} parent=1 // loop_footer
      %s27 = sadd.s32 1, %s23
    $region7: #{tpu_custom_call.1} parent=1 // loop_footer_branch
      %22 = sbr.rel target = $region3
    $region8: #{tpu_custom_call.1} parent=1 // loop_exit
      _
    %4360 = vsyncpa [#allocation5], 1
    %s4361 = scalar_lea.sflag [#allocation5], 1
    %4362 = vsyncpa %s4361, 1
    %4363 = vsyncpa [#allocation7], 1
    %s4364 = scalar_lea.sflag [#allocation7], 1
    %4365 = vsyncpa %s4364, 1

</llo_original>
